<compile_context>
chip_gen: v6e
topology: v6e:2x2x1
jax: 0.10.0
libtpu: 0.0.40
codegen_flags: <defaults>
</compile_context>

<pallas_src>
import functools

import jax
import jax.numpy as jnp
from jax import lax
from jax.experimental import pallas as pl
from jax.experimental.pallas import tpu as pltpu


def _resblock_kernel(colmask_ref, x_ref, w1_ref, b1_ref, w2_ref, b2_ref,
                     o_ref, xf_s, hf_s, *, H, W, C, K, TH, Wp):
    """Fused ResBlock for one (batch, row-tile) grid step.

    colmask_ref : (M1*Wp, 1) f32   1.0 on real image columns, 0.0 on W-padding
    x_ref       : (H, W, C)  f32   full image for this batch element (resident)
    w1_ref/w2_ref : (K*K, C, C) bf16   per-tap weight matrices (HWIO flattened)
    b1_ref/b2_ref : (1, C) f32
    o_ref       : (TH, W, C)       output rows [r*TH, r*TH+TH)
    xf_s        : ((M1+2p)*Wp + 2p, C) bf16  flat zero-padded conv1 input
    hf_s        : (M1*Wp + 2p, C)      bf16  flat zero-padded conv2 input (= h)
    """
    p = K // 2
    M1 = TH + 2 * p                      # h rows needed by this tile (conv2 halo)

    r = pl.program_id(1)
    num_r = pl.num_programs(1)
    r0 = r * TH                          # first output image row of this tile

    # ---- Stage 1: build the flat zero-padded conv1 input in bf16 ----------
    # xf_s[p + a*Wp + b, :] == x[r0 - 2p + a, b - p, :]  (zero outside image).
    # Zeroing the whole tile-sized scratch is ~tens of KB per step (cheap) and
    # provides both the W-padding columns and the top/bottom image border.
    xf_s[...] = jnp.zeros_like(xf_s)
    for a in range(M1 + 2 * p):
        g = r0 + (a - 2 * p)             # global image row feeding this group
        dst = p + a * Wp + p             # static row offset inside xf_s

        @pl.when(jnp.logical_and(g >= 0, g < H))
        def _copy(g=g, dst=dst):
            xf_s[dst:dst + W, :] = x_ref[g].astype(jnp.bfloat16)

    # ---- conv1 as K*K shifted GEMMs (bf16 x bf16 -> f32 accumulate) -------
    acc1 = jnp.zeros((M1 * Wp, C), jnp.float32)
    for kh in range(K):
        for kw in range(K):
            off = kh * Wp + kw           # static flat shift for tap (kh, kw)
            acc1 = acc1 + jnp.dot(xf_s[off:off + M1 * Wp, :],
                                  w1_ref[kh * K + kw],
                                  preferred_element_type=jnp.float32)

    # Bias + ReLU, then zero the W-padding columns and the out-of-image halo
    # rows in one fused select pass: this IS conv2's zero padding.
    riota = lax.broadcasted_iota(jnp.int32, (M1 * Wp, 1), 0)
    lo = jnp.where(r == 0, p * Wp, 0)                      # top image border
    hi = jnp.where(r == num_r - 1, (TH + p) * Wp, M1 * Wp)  # bottom border
    keep = jnp.logical_and(colmask_ref[...] > 0.5,
                           jnp.logical_and(riota >= lo, riota < hi))
    h = jnp.where(keep, jnp.maximum(acc1 + b1_ref[...], 0.0), 0.0)
    hf_s[0:M1 * Wp, :] = h.astype(jnp.bfloat16)

    # ---- conv2 as K*K shifted GEMMs ----------------------------------------
    acc2 = jnp.zeros((TH * Wp, C), jnp.float32)
    for kh in range(K):
        for kw in range(K):
            off = kh * Wp + kw
            acc2 = acc2 + jnp.dot(hf_s[off:off + TH * Wp, :],
                                  w2_ref[kh * K + kw],
                                  preferred_element_type=jnp.float32)
    y = acc2 + b2_ref[...]

    # ---- residual add + output write (only the real image columns) --------
    for h2 in range(TH):
        o_ref[h2] = (y[h2 * Wp:h2 * Wp + W, :]
                     + x_ref[r0 + h2]).astype(o_ref.dtype)


def _pick_row_tile(H, target):
    """Largest divisor of H that is <= target (keeps tiles exact)."""
    t = min(target, H)
    while H % t != 0:
        t -= 1
    return t


def resblock_forward(x_nhwc, params, *, row_tile=8):
    """ResBlock.forward: res = conv2(relu(conv1(x))); return res + x."""
    N, H, W, C = x_nhwc.shape
    K = params["w1"].shape[0]
    p = K // 2
    Wp = W + 2 * p
    TH = _pick_row_tile(H, row_tile)
    R = H // TH
    M1 = TH + 2 * p

    # bf16 MXU operands; one (C, C) matrix per spatial tap (HWIO flattened).
    w1 = params["w1"].astype(jnp.bfloat16).reshape(K * K, C, C)
    w2 = params["w2"].astype(jnp.bfloat16).reshape(K * K, C, C)
    b1 = params["b1"].astype(jnp.float32).reshape(1, C)
    b2 = params["b2"].astype(jnp.float32).reshape(1, C)

    # Column-validity mask for the flat (a*Wp + b) layout: 1.0 on real image
    # columns, 0.0 on the left/right padding columns.  Tiny and VMEM-resident.
    b_idx = jnp.arange(M1 * Wp, dtype=jnp.int32) % Wp
    colmask = ((b_idx >= p) & (b_idx < p + W)).astype(jnp.float32)[:, None]

    kernel = functools.partial(_resblock_kernel,
                               H=H, W=W, C=C, K=K, TH=TH, Wp=Wp)

    return pl.pallas_call(
        kernel,
        out_shape=jax.ShapeDtypeStruct((N, H, W, C), x_nhwc.dtype),
        grid=(N, R),
        in_specs=[
            pl.BlockSpec((M1 * Wp, 1), lambda n, r: (0, 0)),          # colmask
            pl.BlockSpec((None, H, W, C), lambda n, r: (n, 0, 0, 0)),  # x (resident per n)
            pl.BlockSpec((K * K, C, C), lambda n, r: (0, 0, 0)),      # w1
            pl.BlockSpec((1, C), lambda n, r: (0, 0)),                # b1
            pl.BlockSpec((K * K, C, C), lambda n, r: (0, 0, 0)),      # w2
            pl.BlockSpec((1, C), lambda n, r: (0, 0)),                # b2
        ],
        out_specs=pl.BlockSpec((None, TH, W, C), lambda n, r: (n, r, 0, 0)),
        scratch_shapes=[
            pltpu.VMEM(((M1 + 2 * p) * Wp + 2 * p, C), jnp.bfloat16),  # flat padded x tile
            pltpu.VMEM((M1 * Wp + 2 * p, C), jnp.bfloat16),            # flat padded h tile
        ],
        compiler_params=pltpu.CompilerParams(
            dimension_semantics=("parallel", "parallel"),
            vmem_limit_bytes=48 * 1024 * 1024,
        ),
    )(colmask, x_nhwc, w1, b1, w2, b2)


def resblock_reference(x, params):
    """Pure-JAX reference mirroring the kernel's numerics (bf16 MXU operands,
    f32 accumulation / bias / ReLU / residual)."""
    dn = ("NHWC", "HWIO", "NHWC")
    f32 = jnp.float32
    xq = x.astype(jnp.bfloat16).astype(f32)
    w1 = params["w1"].astype(jnp.bfloat16).astype(f32)
    w2 = params["w2"].astype(jnp.bfloat16).astype(f32)
    h = lax.conv_general_dilated(
        xq, w1, (1, 1), "SAME", dimension_numbers=dn,
        precision=lax.Precision.HIGHEST) + params["b1"].astype(f32)
    h = jnp.maximum(h, 0.0)
    hq = h.astype(jnp.bfloat16).astype(f32)
    y = lax.conv_general_dilated(
        hq, w2, (1, 1), "SAME", dimension_numbers=dn,
        precision=lax.Precision.HIGHEST) + params["b2"].astype(f32)
    return y + x


if __name__ == "__main__":
    # Small shapes consistent with the module: n_feats channels, kernel_size=3.
    N, H, W, C, K = 2, 16, 16, 64, 3

    key = jax.random.PRNGKey(0)
    kx, kw1, kb1, kw2, kb2 = jax.random.split(key, 5)

    x = jax.random.normal(kx, (N, H, W, C), dtype=jnp.float32)
    params = {
        "w1": 0.1 * jax.random.normal(kw1, (K, K, C, C), dtype=jnp.float32),
        "b1": 0.1 * jax.random.normal(kb1, (C,), dtype=jnp.float32),
        "w2": 0.1 * jax.random.normal(kw2, (K, K, C, C), dtype=jnp.float32),
        "b2": 0.1 * jax.random.normal(kb2, (C,), dtype=jnp.float32),
    }

    fwd = jax.jit(resblock_forward)
    out = jax.block_until_ready(fwd(x, params))
    ref = jax.block_until_ready(resblock_reference(x, params))

    assert out.shape == (N, H, W, C)
    max_err = jnp.max(jnp.abs(out - ref))
    assert jnp.allclose(out, ref, rtol=2e-2, atol=2e-2), (
        f"Pallas ResBlock mismatch (max abs err {max_err})")
    print("KERNEL_OK")
</pallas_src>

<mosaic_0001>
module attributes {stable_mosaic.version = 11 : i64} {
  func.func @_resblock_kernel(%arg0: i32, %arg1: i32, %arg2: memref<180x1xf32, #tpu.memory_space<vmem>>, %arg3: memref<1x16x16x64xf32, #tpu.memory_space<vmem>>, %arg4: memref<9x64x64xbf16, #tpu.memory_space<vmem>>, %arg5: memref<1x64xf32, #tpu.memory_space<vmem>>, %arg6: memref<9x64x64xbf16, #tpu.memory_space<vmem>>, %arg7: memref<1x64xf32, #tpu.memory_space<vmem>>, %arg8: memref<1x8x16x64xf32, #tpu.memory_space<vmem>>, %arg9: memref<218x64xbf16, #tpu.memory_space<vmem>>, %arg10: memref<182x64xbf16, #tpu.memory_space<vmem>>) attributes {dimension_semantics = [#tpu.dimension_semantics<parallel>, #tpu.dimension_semantics<parallel>], iteration_bounds = array<i64: 2, 2>, scalar_prefetch = 0 : i64, scratch_operands = 2 : i64, tpu.core_type = #tpu.core_type<tc>, window_params = [{pipeline_mode = #tpu.pipeline_mode<synchronous>, transform_indices = @transform_0, window_bounds = array<i64: 180, 1>}, {transform_indices = @transform_1, window_bounds = array<i64: 1, 16, 16, 64>}, {pipeline_mode = #tpu.pipeline_mode<synchronous>, transform_indices = @transform_2, window_bounds = array<i64: 9, 64, 64>}, {pipeline_mode = #tpu.pipeline_mode<synchronous>, transform_indices = @transform_3, window_bounds = array<i64: 1, 64>}, {pipeline_mode = #tpu.pipeline_mode<synchronous>, transform_indices = @transform_4, window_bounds = array<i64: 9, 64, 64>}, {pipeline_mode = #tpu.pipeline_mode<synchronous>, transform_indices = @transform_5, window_bounds = array<i64: 1, 64>}, {transform_indices = @transform_6, window_bounds = array<i64: 1, 8, 16, 64>}]} {
    %c8_i32 = arith.constant 8 : i32
    %0 = arith.muli %arg1, %c8_i32 : i32
    %cst = arith.constant 0.000000e+00 : bf16
    %1 = vector.broadcast %cst : bf16 to vector<218x64xbf16>
    %c0 = arith.constant 0 : index
    %c0_0 = arith.constant 0 : index
    %2 = vector.load %arg9[%c0, %c0_0] : memref<218x64xbf16, #tpu.memory_space<vmem>>, vector<218x64xbf16>
    tpu.vector_store %arg9[%c0, %c0_0], %1 {strides = array<i32>} : memref<218x64xbf16, #tpu.memory_space<vmem>>, vector<218x64xbf16>,
    %c-2_i32 = arith.constant -2 : i32
    %3 = arith.addi %0, %c-2_i32 : i32
    %c0_i32 = arith.constant 0 : i32
    %4 = arith.cmpi sge, %3, %c0_i32 : i32
    %c16_i32 = arith.constant 16 : i32
    %5 = arith.cmpi slt, %3, %c16_i32 : i32
    %6 = arith.andi %4, %5 : i1
    %7 = arith.extui %6 : i1 to i32
    %c0_i32_1 = arith.constant 0 : i32
    %8 = arith.cmpi ne, %7, %c0_i32_1 : i32
    scf.if %8 {
      %c0_211 = arith.constant 0 : index
      %267 = arith.index_cast %3 : i32 to index
      %c0_212 = arith.constant 0 : index
      %c0_213 = arith.constant 0 : index
      %268 = vector.load %arg3[%c0_211, %267, %c0_212, %c0_213] : memref<1x16x16x64xf32, #tpu.memory_space<vmem>>, vector<1x1x16x64xf32>
      %269 = vector.shape_cast %268 : vector<1x1x16x64xf32> to vector<16x64xf32>
      %270 = arith.truncf %269 : vector<16x64xf32> to vector<16x64xbf16>
      %c2_214 = arith.constant 2 : index
      %c0_215 = arith.constant 0 : index
      %271 = vector.load %arg9[%c2_214, %c0_215] : memref<218x64xbf16, #tpu.memory_space<vmem>>, vector<16x64xbf16>
      tpu.vector_store %arg9[%c2_214, %c0_215], %270 {strides = array<i32>} : memref<218x64xbf16, #tpu.memory_space<vmem>>, vector<16x64xbf16>,
    } else {
    }
    %c-1_i32 = arith.constant -1 : i32
    %9 = arith.addi %0, %c-1_i32 : i32
    %c0_i32_2 = arith.constant 0 : i32
    %10 = arith.cmpi sge, %9, %c0_i32_2 : i32
    %c16_i32_3 = arith.constant 16 : i32
    %11 = arith.cmpi slt, %9, %c16_i32_3 : i32
    %12 = arith.andi %10, %11 : i1
    %13 = arith.extui %12 : i1 to i32
    %c0_i32_4 = arith.constant 0 : i32
    %14 = arith.cmpi ne, %13, %c0_i32_4 : i32
    scf.if %14 {
      %c0_211 = arith.constant 0 : index
      %267 = arith.index_cast %9 : i32 to index
      %c0_212 = arith.constant 0 : index
      %c0_213 = arith.constant 0 : index
      %268 = vector.load %arg3[%c0_211, %267, %c0_212, %c0_213] : memref<1x16x16x64xf32, #tpu.memory_space<vmem>>, vector<1x1x16x64xf32>
      %269 = vector.shape_cast %268 : vector<1x1x16x64xf32> to vector<16x64xf32>
      %270 = arith.truncf %269 : vector<16x64xf32> to vector<16x64xbf16>
      %c20_214 = arith.constant 20 : index
      %c0_215 = arith.constant 0 : index
      %271 = vector.load %arg9[%c20_214, %c0_215] : memref<218x64xbf16, #tpu.memory_space<vmem>>, vector<16x64xbf16>
      tpu.vector_store %arg9[%c20_214, %c0_215], %270 {strides = array<i32>} : memref<218x64xbf16, #tpu.memory_space<vmem>>, vector<16x64xbf16>,
    } else {
    }
    %c0_i32_5 = arith.constant 0 : i32
    %15 = arith.addi %0, %c0_i32_5 : i32
    %c0_i32_6 = arith.constant 0 : i32
    %16 = arith.cmpi sge, %15, %c0_i32_6 : i32
    %c16_i32_7 = arith.constant 16 : i32
    %17 = arith.cmpi slt, %15, %c16_i32_7 : i32
    %18 = arith.andi %16, %17 : i1
    %19 = arith.extui %18 : i1 to i32
    %c0_i32_8 = arith.constant 0 : i32
    %20 = arith.cmpi ne, %19, %c0_i32_8 : i32
    scf.if %20 {
      %c0_211 = arith.constant 0 : index
      %267 = arith.index_cast %15 : i32 to index
      %c0_212 = arith.constant 0 : index
      %c0_213 = arith.constant 0 : index
      %268 = vector.load %arg3[%c0_211, %267, %c0_212, %c0_213] : memref<1x16x16x64xf32, #tpu.memory_space<vmem>>, vector<1x1x16x64xf32>
      %269 = vector.shape_cast %268 : vector<1x1x16x64xf32> to vector<16x64xf32>
      %270 = arith.truncf %269 : vector<16x64xf32> to vector<16x64xbf16>
      %c38_214 = arith.constant 38 : index
      %c0_215 = arith.constant 0 : index
      %271 = vector.load %arg9[%c38_214, %c0_215] : memref<218x64xbf16, #tpu.memory_space<vmem>>, vector<16x64xbf16>
      tpu.vector_store %arg9[%c38_214, %c0_215], %270 {strides = array<i32>} : memref<218x64xbf16, #tpu.memory_space<vmem>>, vector<16x64xbf16>,
    } else {
    }
    %c1_i32 = arith.constant 1 : i32
    %21 = arith.addi %0, %c1_i32 : i32
    %c0_i32_9 = arith.constant 0 : i32
    %22 = arith.cmpi sge, %21, %c0_i32_9 : i32
    %c16_i32_10 = arith.constant 16 : i32
    %23 = arith.cmpi slt, %21, %c16_i32_10 : i32
    %24 = arith.andi %22, %23 : i1
    %25 = arith.extui %24 : i1 to i32
    %c0_i32_11 = arith.constant 0 : i32
    %26 = arith.cmpi ne, %25, %c0_i32_11 : i32
    scf.if %26 {
      %c0_211 = arith.constant 0 : index
      %267 = arith.index_cast %21 : i32 to index
      %c0_212 = arith.constant 0 : index
      %c0_213 = arith.constant 0 : index
      %268 = vector.load %arg3[%c0_211, %267, %c0_212, %c0_213] : memref<1x16x16x64xf32, #tpu.memory_space<vmem>>, vector<1x1x16x64xf32>
      %269 = vector.shape_cast %268 : vector<1x1x16x64xf32> to vector<16x64xf32>
      %270 = arith.truncf %269 : vector<16x64xf32> to vector<16x64xbf16>
      %c56 = arith.constant 56 : index
      %c0_214 = arith.constant 0 : index
      %271 = vector.load %arg9[%c56, %c0_214] : memref<218x64xbf16, #tpu.memory_space<vmem>>, vector<16x64xbf16>
      tpu.vector_store %arg9[%c56, %c0_214], %270 {strides = array<i32>} : memref<218x64xbf16, #tpu.memory_space<vmem>>, vector<16x64xbf16>,
    } else {
    }
    %c2_i32 = arith.constant 2 : i32
    %27 = arith.addi %0, %c2_i32 : i32
    %c0_i32_12 = arith.constant 0 : i32
    %28 = arith.cmpi sge, %27, %c0_i32_12 : i32
    %c16_i32_13 = arith.constant 16 : i32
    %29 = arith.cmpi slt, %27, %c16_i32_13 : i32
    %30 = arith.andi %28, %29 : i1
    %31 = arith.extui %30 : i1 to i32
    %c0_i32_14 = arith.constant 0 : i32
    %32 = arith.cmpi ne, %31, %c0_i32_14 : i32
    scf.if %32 {
      %c0_211 = arith.constant 0 : index
      %267 = arith.index_cast %27 : i32 to index
      %c0_212 = arith.constant 0 : index
      %c0_213 = arith.constant 0 : index
      %268 = vector.load %arg3[%c0_211, %267, %c0_212, %c0_213] : memref<1x16x16x64xf32, #tpu.memory_space<vmem>>, vector<1x1x16x64xf32>
      %269 = vector.shape_cast %268 : vector<1x1x16x64xf32> to vector<16x64xf32>
      %270 = arith.truncf %269 : vector<16x64xf32> to vector<16x64xbf16>
      %c74 = arith.constant 74 : index
      %c0_214 = arith.constant 0 : index
      %271 = vector.load %arg9[%c74, %c0_214] : memref<218x64xbf16, #tpu.memory_space<vmem>>, vector<16x64xbf16>
      tpu.vector_store %arg9[%c74, %c0_214], %270 {strides = array<i32>} : memref<218x64xbf16, #tpu.memory_space<vmem>>, vector<16x64xbf16>,
    } else {
    }
    %c3_i32 = arith.constant 3 : i32
    %33 = arith.addi %0, %c3_i32 : i32
    %c0_i32_15 = arith.constant 0 : i32
    %34 = arith.cmpi sge, %33, %c0_i32_15 : i32
    %c16_i32_16 = arith.constant 16 : i32
    %35 = arith.cmpi slt, %33, %c16_i32_16 : i32
    %36 = arith.andi %34, %35 : i1
    %37 = arith.extui %36 : i1 to i32
    %c0_i32_17 = arith.constant 0 : i32
    %38 = arith.cmpi ne, %37, %c0_i32_17 : i32
    scf.if %38 {
      %c0_211 = arith.constant 0 : index
      %267 = arith.index_cast %33 : i32 to index
      %c0_212 = arith.constant 0 : index
      %c0_213 = arith.constant 0 : index
      %268 = vector.load %arg3[%c0_211, %267, %c0_212, %c0_213] : memref<1x16x16x64xf32, #tpu.memory_space<vmem>>, vector<1x1x16x64xf32>
      %269 = vector.shape_cast %268 : vector<1x1x16x64xf32> to vector<16x64xf32>
      %270 = arith.truncf %269 : vector<16x64xf32> to vector<16x64xbf16>
      %c92 = arith.constant 92 : index
      %c0_214 = arith.constant 0 : index
      %271 = vector.load %arg9[%c92, %c0_214] : memref<218x64xbf16, #tpu.memory_space<vmem>>, vector<16x64xbf16>
      tpu.vector_store %arg9[%c92, %c0_214], %270 {strides = array<i32>} : memref<218x64xbf16, #tpu.memory_space<vmem>>, vector<16x64xbf16>,
    } else {
    }
    %c4_i32 = arith.constant 4 : i32
    %39 = arith.addi %0, %c4_i32 : i32
    %c0_i32_18 = arith.constant 0 : i32
    %40 = arith.cmpi sge, %39, %c0_i32_18 : i32
    %c16_i32_19 = arith.constant 16 : i32
    %41 = arith.cmpi slt, %39, %c16_i32_19 : i32
    %42 = arith.andi %40, %41 : i1
    %43 = arith.extui %42 : i1 to i32
    %c0_i32_20 = arith.constant 0 : i32
    %44 = arith.cmpi ne, %43, %c0_i32_20 : i32
    scf.if %44 {
      %c0_211 = arith.constant 0 : index
      %267 = arith.index_cast %39 : i32 to index
      %c0_212 = arith.constant 0 : index
      %c0_213 = arith.constant 0 : index
      %268 = vector.load %arg3[%c0_211, %267, %c0_212, %c0_213] : memref<1x16x16x64xf32, #tpu.memory_space<vmem>>, vector<1x1x16x64xf32>
      %269 = vector.shape_cast %268 : vector<1x1x16x64xf32> to vector<16x64xf32>
      %270 = arith.truncf %269 : vector<16x64xf32> to vector<16x64xbf16>
      %c110 = arith.constant 110 : index
      %c0_214 = arith.constant 0 : index
      %271 = vector.load %arg9[%c110, %c0_214] : memref<218x64xbf16, #tpu.memory_space<vmem>>, vector<16x64xbf16>
      tpu.vector_store %arg9[%c110, %c0_214], %270 {strides = array<i32>} : memref<218x64xbf16, #tpu.memory_space<vmem>>, vector<16x64xbf16>,
    } else {
    }
    %c5_i32 = arith.constant 5 : i32
    %45 = arith.addi %0, %c5_i32 : i32
    %c0_i32_21 = arith.constant 0 : i32
    %46 = arith.cmpi sge, %45, %c0_i32_21 : i32
    %c16_i32_22 = arith.constant 16 : i32
    %47 = arith.cmpi slt, %45, %c16_i32_22 : i32
    %48 = arith.andi %46, %47 : i1
    %49 = arith.extui %48 : i1 to i32
    %c0_i32_23 = arith.constant 0 : i32
    %50 = arith.cmpi ne, %49, %c0_i32_23 : i32
    scf.if %50 {
      %c0_211 = arith.constant 0 : index
      %267 = arith.index_cast %45 : i32 to index
      %c0_212 = arith.constant 0 : index
      %c0_213 = arith.constant 0 : index
      %268 = vector.load %arg3[%c0_211, %267, %c0_212, %c0_213] : memref<1x16x16x64xf32, #tpu.memory_space<vmem>>, vector<1x1x16x64xf32>
      %269 = vector.shape_cast %268 : vector<1x1x16x64xf32> to vector<16x64xf32>
      %270 = arith.truncf %269 : vector<16x64xf32> to vector<16x64xbf16>
      %c128 = arith.constant 128 : index
      %c0_214 = arith.constant 0 : index
      %271 = vector.load %arg9[%c128, %c0_214] : memref<218x64xbf16, #tpu.memory_space<vmem>>, vector<16x64xbf16>
      tpu.vector_store %arg9[%c128, %c0_214], %270 {strides = array<i32>} : memref<218x64xbf16, #tpu.memory_space<vmem>>, vector<16x64xbf16>,
    } else {
    }
    %c6_i32 = arith.constant 6 : i32
    %51 = arith.addi %0, %c6_i32 : i32
    %c0_i32_24 = arith.constant 0 : i32
    %52 = arith.cmpi sge, %51, %c0_i32_24 : i32
    %c16_i32_25 = arith.constant 16 : i32
    %53 = arith.cmpi slt, %51, %c16_i32_25 : i32
    %54 = arith.andi %52, %53 : i1
    %55 = arith.extui %54 : i1 to i32
    %c0_i32_26 = arith.constant 0 : i32
    %56 = arith.cmpi ne, %55, %c0_i32_26 : i32
    scf.if %56 {
      %c0_211 = arith.constant 0 : index
      %267 = arith.index_cast %51 : i32 to index
      %c0_212 = arith.constant 0 : index
      %c0_213 = arith.constant 0 : index
      %268 = vector.load %arg3[%c0_211, %267, %c0_212, %c0_213] : memref<1x16x16x64xf32, #tpu.memory_space<vmem>>, vector<1x1x16x64xf32>
      %269 = vector.shape_cast %268 : vector<1x1x16x64xf32> to vector<16x64xf32>
      %270 = arith.truncf %269 : vector<16x64xf32> to vector<16x64xbf16>
      %c146 = arith.constant 146 : index
      %c0_214 = arith.constant 0 : index
      %271 = vector.load %arg9[%c146, %c0_214] : memref<218x64xbf16, #tpu.memory_space<vmem>>, vector<16x64xbf16>
      tpu.vector_store %arg9[%c146, %c0_214], %270 {strides = array<i32>} : memref<218x64xbf16, #tpu.memory_space<vmem>>, vector<16x64xbf16>,
    } else {
    }
    %c7_i32 = arith.constant 7 : i32
    %57 = arith.addi %0, %c7_i32 : i32
    %c0_i32_27 = arith.constant 0 : i32
    %58 = arith.cmpi sge, %57, %c0_i32_27 : i32
    %c16_i32_28 = arith.constant 16 : i32
    %59 = arith.cmpi slt, %57, %c16_i32_28 : i32
    %60 = arith.andi %58, %59 : i1
    %61 = arith.extui %60 : i1 to i32
    %c0_i32_29 = arith.constant 0 : i32
    %62 = arith.cmpi ne, %61, %c0_i32_29 : i32
    scf.if %62 {
      %c0_211 = arith.constant 0 : index
      %267 = arith.index_cast %57 : i32 to index
      %c0_212 = arith.constant 0 : index
      %c0_213 = arith.constant 0 : index
      %268 = vector.load %arg3[%c0_211, %267, %c0_212, %c0_213] : memref<1x16x16x64xf32, #tpu.memory_space<vmem>>, vector<1x1x16x64xf32>
      %269 = vector.shape_cast %268 : vector<1x1x16x64xf32> to vector<16x64xf32>
      %270 = arith.truncf %269 : vector<16x64xf32> to vector<16x64xbf16>
      %c164 = arith.constant 164 : index
      %c0_214 = arith.constant 0 : index
      %271 = vector.load %arg9[%c164, %c0_214] : memref<218x64xbf16, #tpu.memory_space<vmem>>, vector<16x64xbf16>
      tpu.vector_store %arg9[%c164, %c0_214], %270 {strides = array<i32>} : memref<218x64xbf16, #tpu.memory_space<vmem>>, vector<16x64xbf16>,
    } else {
    }
    %c8_i32_30 = arith.constant 8 : i32
    %63 = arith.addi %0, %c8_i32_30 : i32
    %c0_i32_31 = arith.constant 0 : i32
    %64 = arith.cmpi sge, %63, %c0_i32_31 : i32
    %c16_i32_32 = arith.constant 16 : i32
    %65 = arith.cmpi slt, %63, %c16_i32_32 : i32
    %66 = arith.andi %64, %65 : i1
    %67 = arith.extui %66 : i1 to i32
    %c0_i32_33 = arith.constant 0 : i32
    %68 = arith.cmpi ne, %67, %c0_i32_33 : i32
    scf.if %68 {
      %c0_211 = arith.constant 0 : index
      %267 = arith.index_cast %63 : i32 to index
      %c0_212 = arith.constant 0 : index
      %c0_213 = arith.constant 0 : index
      %268 = vector.load %arg3[%c0_211, %267, %c0_212, %c0_213] : memref<1x16x16x64xf32, #tpu.memory_space<vmem>>, vector<1x1x16x64xf32>
      %269 = vector.shape_cast %268 : vector<1x1x16x64xf32> to vector<16x64xf32>
      %270 = arith.truncf %269 : vector<16x64xf32> to vector<16x64xbf16>
      %c182 = arith.constant 182 : index
      %c0_214 = arith.constant 0 : index
      %271 = vector.load %arg9[%c182, %c0_214] : memref<218x64xbf16, #tpu.memory_space<vmem>>, vector<16x64xbf16>
      tpu.vector_store %arg9[%c182, %c0_214], %270 {strides = array<i32>} : memref<218x64xbf16, #tpu.memory_space<vmem>>, vector<16x64xbf16>,
    } else {
    }
    %c9_i32 = arith.constant 9 : i32
    %69 = arith.addi %0, %c9_i32 : i32
    %c0_i32_34 = arith.constant 0 : i32
    %70 = arith.cmpi sge, %69, %c0_i32_34 : i32
    %c16_i32_35 = arith.constant 16 : i32
    %71 = arith.cmpi slt, %69, %c16_i32_35 : i32
    %72 = arith.andi %70, %71 : i1
    %73 = arith.extui %72 : i1 to i32
    %c0_i32_36 = arith.constant 0 : i32
    %74 = arith.cmpi ne, %73, %c0_i32_36 : i32
    scf.if %74 {
      %c0_211 = arith.constant 0 : index
      %267 = arith.index_cast %69 : i32 to index
      %c0_212 = arith.constant 0 : index
      %c0_213 = arith.constant 0 : index
      %268 = vector.load %arg3[%c0_211, %267, %c0_212, %c0_213] : memref<1x16x16x64xf32, #tpu.memory_space<vmem>>, vector<1x1x16x64xf32>
      %269 = vector.shape_cast %268 : vector<1x1x16x64xf32> to vector<16x64xf32>
      %270 = arith.truncf %269 : vector<16x64xf32> to vector<16x64xbf16>
      %c200 = arith.constant 200 : index
      %c0_214 = arith.constant 0 : index
      %271 = vector.load %arg9[%c200, %c0_214] : memref<218x64xbf16, #tpu.memory_space<vmem>>, vector<16x64xbf16>
      tpu.vector_store %arg9[%c200, %c0_214], %270 {strides = array<i32>} : memref<218x64xbf16, #tpu.memory_space<vmem>>, vector<16x64xbf16>,
    } else {
    }
    %cst_37 = arith.constant 0.000000e+00 : f32
    %75 = vector.broadcast %cst_37 : f32 to vector<180x64xf32>
    %c0_38 = arith.constant 0 : index
    %c0_39 = arith.constant 0 : index
    %76 = vector.load %arg9[%c0_38, %c0_39] : memref<218x64xbf16, #tpu.memory_space<vmem>>, vector<180x64xbf16>
    %c0_40 = arith.constant 0 : index
    %c0_41 = arith.constant 0 : index
    %c0_42 = arith.constant 0 : index
    %77 = vector.load %arg4[%c0_40, %c0_41, %c0_42] : memref<9x64x64xbf16, #tpu.memory_space<vmem>>, vector<1x64x64xbf16>
    %78 = vector.shape_cast %77 : vector<1x64x64xbf16> to vector<64x64xbf16>
    %cst_43 = arith.constant dense<0.000000e+00> : vector<180x64xf32>
    %79 = tpu.matmul %76, %78, %cst_43 {dimension_numbers = #tpu.dot_dimension_numbers<[1], [0], [0], [1], [0, 0, 1, 1], [], []>} : vector<180x64xbf16>, vector<64x64xbf16>, vector<180x64xf32> -> vector<180x64xf32>
    %80 = arith.addf %75, %79 : vector<180x64xf32>
    %c1 = arith.constant 1 : index
    %c0_44 = arith.constant 0 : index
    %81 = vector.load %arg9[%c1, %c0_44] : memref<218x64xbf16, #tpu.memory_space<vmem>>, vector<180x64xbf16>
    %c1_45 = arith.constant 1 : index
    %c0_46 = arith.constant 0 : index
    %c0_47 = arith.constant 0 : index
    %82 = vector.load %arg4[%c1_45, %c0_46, %c0_47] : memref<9x64x64xbf16, #tpu.memory_space<vmem>>, vector<1x64x64xbf16>
    %83 = vector.shape_cast %82 : vector<1x64x64xbf16> to vector<64x64xbf16>
    %cst_48 = arith.constant dense<0.000000e+00> : vector<180x64xf32>
    %84 = tpu.matmul %81, %83, %cst_48 {dimension_numbers = #tpu.dot_dimension_numbers<[1], [0], [0], [1], [0, 0, 1, 1], [], []>} : vector<180x64xbf16>, vector<64x64xbf16>, vector<180x64xf32> -> vector<180x64xf32>
    %85 = arith.addf %80, %84 : vector<180x64xf32>
    %c2 = arith.constant 2 : index
    %c0_49 = arith.constant 0 : index
    %86 = vector.load %arg9[%c2, %c0_49] : memref<218x64xbf16, #tpu.memory_space<vmem>>, vector<180x64xbf16>
    %c2_50 = arith.constant 2 : index
    %c0_51 = arith.constant 0 : index
    %c0_52 = arith.constant 0 : index
    %87 = vector.load %arg4[%c2_50, %c0_51, %c0_52] : memref<9x64x64xbf16, #tpu.memory_space<vmem>>, vector<1x64x64xbf16>
    %88 = vector.shape_cast %87 : vector<1x64x64xbf16> to vector<64x64xbf16>
    %cst_53 = arith.constant dense<0.000000e+00> : vector<180x64xf32>
    %89 = tpu.matmul %86, %88, %cst_53 {dimension_numbers = #tpu.dot_dimension_numbers<[1], [0], [0], [1], [0, 0, 1, 1], [], []>} : vector<180x64xbf16>, vector<64x64xbf16>, vector<180x64xf32> -> vector<180x64xf32>
    %90 = arith.addf %85, %89 : vector<180x64xf32>
    %c18 = arith.constant 18 : index
    %c0_54 = arith.constant 0 : index
    %91 = vector.load %arg9[%c18, %c0_54] : memref<218x64xbf16, #tpu.memory_space<vmem>>, vector<180x64xbf16>
    %c3 = arith.constant 3 : index
    %c0_55 = arith.constant 0 : index
    %c0_56 = arith.constant 0 : index
    %92 = vector.load %arg4[%c3, %c0_55, %c0_56] : memref<9x64x64xbf16, #tpu.memory_space<vmem>>, vector<1x64x64xbf16>
    %93 = vector.shape_cast %92 : vector<1x64x64xbf16> to vector<64x64xbf16>
    %cst_57 = arith.constant dense<0.000000e+00> : vector<180x64xf32>
    %94 = tpu.matmul %91, %93, %cst_57 {dimension_numbers = #tpu.dot_dimension_numbers<[1], [0], [0], [1], [0, 0, 1, 1], [], []>} : vector<180x64xbf16>, vector<64x64xbf16>, vector<180x64xf32> -> vector<180x64xf32>
    %95 = arith.addf %90, %94 : vector<180x64xf32>
    %c19 = arith.constant 19 : index
    %c0_58 = arith.constant 0 : index
    %96 = vector.load %arg9[%c19, %c0_58] : memref<218x64xbf16, #tpu.memory_space<vmem>>, vector<180x64xbf16>
    %c4 = arith.constant 4 : index
    %c0_59 = arith.constant 0 : index
    %c0_60 = arith.constant 0 : index
    %97 = vector.load %arg4[%c4, %c0_59, %c0_60] : memref<9x64x64xbf16, #tpu.memory_space<vmem>>, vector<1x64x64xbf16>
    %98 = vector.shape_cast %97 : vector<1x64x64xbf16> to vector<64x64xbf16>
    %cst_61 = arith.constant dense<0.000000e+00> : vector<180x64xf32>
    %99 = tpu.matmul %96, %98, %cst_61 {dimension_numbers = #tpu.dot_dimension_numbers<[1], [0], [0], [1], [0, 0, 1, 1], [], []>} : vector<180x64xbf16>, vector<64x64xbf16>, vector<180x64xf32> -> vector<180x64xf32>
    %100 = arith.addf %95, %99 : vector<180x64xf32>
    %c20 = arith.constant 20 : index
    %c0_62 = arith.constant 0 : index
    %101 = vector.load %arg9[%c20, %c0_62] : memref<218x64xbf16, #tpu.memory_space<vmem>>, vector<180x64xbf16>
    %c5 = arith.constant 5 : index
    %c0_63 = arith.constant 0 : index
    %c0_64 = arith.constant 0 : index
    %102 = vector.load %arg4[%c5, %c0_63, %c0_64] : memref<9x64x64xbf16, #tpu.memory_space<vmem>>, vector<1x64x64xbf16>
    %103 = vector.shape_cast %102 : vector<1x64x64xbf16> to vector<64x64xbf16>
    %cst_65 = arith.constant dense<0.000000e+00> : vector<180x64xf32>
    %104 = tpu.matmul %101, %103, %cst_65 {dimension_numbers = #tpu.dot_dimension_numbers<[1], [0], [0], [1], [0, 0, 1, 1], [], []>} : vector<180x64xbf16>, vector<64x64xbf16>, vector<180x64xf32> -> vector<180x64xf32>
    %105 = arith.addf %100, %104 : vector<180x64xf32>
    %c36 = arith.constant 36 : index
    %c0_66 = arith.constant 0 : index
    %106 = vector.load %arg9[%c36, %c0_66] : memref<218x64xbf16, #tpu.memory_space<vmem>>, vector<180x64xbf16>
    %c6 = arith.constant 6 : index
    %c0_67 = arith.constant 0 : index
    %c0_68 = arith.constant 0 : index
    %107 = vector.load %arg4[%c6, %c0_67, %c0_68] : memref<9x64x64xbf16, #tpu.memory_space<vmem>>, vector<1x64x64xbf16>
    %108 = vector.shape_cast %107 : vector<1x64x64xbf16> to vector<64x64xbf16>
    %cst_69 = arith.constant dense<0.000000e+00> : vector<180x64xf32>
    %109 = tpu.matmul %106, %108, %cst_69 {dimension_numbers = #tpu.dot_dimension_numbers<[1], [0], [0], [1], [0, 0, 1, 1], [], []>} : vector<180x64xbf16>, vector<64x64xbf16>, vector<180x64xf32> -> vector<180x64xf32>
    %110 = arith.addf %105, %109 : vector<180x64xf32>
    %c37 = arith.constant 37 : index
    %c0_70 = arith.constant 0 : index
    %111 = vector.load %arg9[%c37, %c0_70] : memref<218x64xbf16, #tpu.memory_space<vmem>>, vector<180x64xbf16>
    %c7 = arith.constant 7 : index
    %c0_71 = arith.constant 0 : index
    %c0_72 = arith.constant 0 : index
    %112 = vector.load %arg4[%c7, %c0_71, %c0_72] : memref<9x64x64xbf16, #tpu.memory_space<vmem>>, vector<1x64x64xbf16>
    %113 = vector.shape_cast %112 : vector<1x64x64xbf16> to vector<64x64xbf16>
    %cst_73 = arith.constant dense<0.000000e+00> : vector<180x64xf32>
    %114 = tpu.matmul %111, %113, %cst_73 {dimension_numbers = #tpu.dot_dimension_numbers<[1], [0], [0], [1], [0, 0, 1, 1], [], []>} : vector<180x64xbf16>, vector<64x64xbf16>, vector<180x64xf32> -> vector<180x64xf32>
    %115 = arith.addf %110, %114 : vector<180x64xf32>
    %c38 = arith.constant 38 : index
    %c0_74 = arith.constant 0 : index
    %116 = vector.load %arg9[%c38, %c0_74] : memref<218x64xbf16, #tpu.memory_space<vmem>>, vector<180x64xbf16>
    %c8 = arith.constant 8 : index
    %c0_75 = arith.constant 0 : index
    %c0_76 = arith.constant 0 : index
    %117 = vector.load %arg4[%c8, %c0_75, %c0_76] : memref<9x64x64xbf16, #tpu.memory_space<vmem>>, vector<1x64x64xbf16>
    %118 = vector.shape_cast %117 : vector<1x64x64xbf16> to vector<64x64xbf16>
    %cst_77 = arith.constant dense<0.000000e+00> : vector<180x64xf32>
    %119 = tpu.matmul %116, %118, %cst_77 {dimension_numbers = #tpu.dot_dimension_numbers<[1], [0], [0], [1], [0, 0, 1, 1], [], []>} : vector<180x64xbf16>, vector<64x64xbf16>, vector<180x64xf32> -> vector<180x64xf32>
    %120 = arith.addf %115, %119 : vector<180x64xf32>
    %121 = tpu.iota {dimensions = array<i32: 0>} : vector<180x1xi32>
    %c0_i32_78 = arith.constant 0 : i32
    %122 = arith.cmpi eq, %arg1, %c0_i32_78 : i32
    %c18_i32 = arith.constant 18 : i32
    %c0_i32_79 = arith.constant 0 : i32
    %123 = arith.select %122, %c18_i32, %c0_i32_79 : i32
    %c1_i32_80 = arith.constant 1 : i32
    %124 = arith.cmpi eq, %arg1, %c1_i32_80 : i32
    %c162_i32 = arith.constant 162 : i32
    %c180_i32 = arith.constant 180 : i32
    %125 = arith.select %124, %c162_i32, %c180_i32 : i32
    %c0_81 = arith.constant 0 : index
    %c0_82 = arith.constant 0 : index
    %126 = vector.load %arg2[%c0_81, %c0_82] : memref<180x1xf32, #tpu.memory_space<vmem>>, vector<180x1xf32>
    %cst_83 = arith.constant 5.000000e-01 : f32
    %127 = vector.broadcast %cst_83 : f32 to vector<180x1xf32>
    %128 = arith.cmpf ogt, %126, %127 : vector<180x1xf32>
    %129 = vector.broadcast %123 : i32 to vector<180x1xi32>
    %130 = arith.cmpi sge, %121, %129 : vector<180x1xi32>
    %131 = vector.broadcast %125 : i32 to vector<180x1xi32>
    %132 = arith.cmpi slt, %121, %131 : vector<180x1xi32>
    %133 = arith.andi %130, %132 : vector<180x1xi1>
    %134 = arith.andi %128, %133 : vector<180x1xi1>
    %c0_84 = arith.constant 0 : index
    %c0_85 = arith.constant 0 : index
    %135 = vector.load %arg5[%c0_84, %c0_85] : memref<1x64xf32, #tpu.memory_space<vmem>>, vector<1x64xf32>
    %136 = vector.broadcast %135 : vector<1x64xf32> to vector<180x64xf32>
    %137 = arith.addf %120, %136 : vector<180x64xf32>
    %cst_86 = arith.constant 0.000000e+00 : f32
    %138 = vector.broadcast %cst_86 : f32 to vector<180x64xf32>
    %139 = arith.maximumf %137, %138 : vector<180x64xf32>
    %cst_87 = arith.constant 0.000000e+00 : f32
    %140 = vector.shape_cast %134 : vector<180x1xi1> to vector<180x1xi1>
    %141 = vector.broadcast %140 : vector<180x1xi1> to vector<180x64xi1>
    %142 = vector.broadcast %cst_87 : f32 to vector<180x64xf32>
    %143 = arith.select %141, %139, %142 : vector<180x64xi1>, vector<180x64xf32>
    %144 = arith.truncf %143 : vector<180x64xf32> to vector<180x64xbf16>
    %c0_88 = arith.constant 0 : index
    %c0_89 = arith.constant 0 : index
    %145 = vector.load %arg10[%c0_88, %c0_89] : memref<182x64xbf16, #tpu.memory_space<vmem>>, vector<180x64xbf16>
    tpu.vector_store %arg10[%c0_88, %c0_89], %144 {strides = array<i32>} : memref<182x64xbf16, #tpu.memory_space<vmem>>, vector<180x64xbf16>,
    %cst_90 = arith.constant 0.000000e+00 : f32
    %146 = vector.broadcast %cst_90 : f32 to vector<144x64xf32>
    %c0_91 = arith.constant 0 : index
    %c0_92 = arith.constant 0 : index
    %147 = vector.load %arg10[%c0_91, %c0_92] : memref<182x64xbf16, #tpu.memory_space<vmem>>, vector<144x64xbf16>
    %c0_93 = arith.constant 0 : index
    %c0_94 = arith.constant 0 : index
    %c0_95 = arith.constant 0 : index
    %148 = vector.load %arg6[%c0_93, %c0_94, %c0_95] : memref<9x64x64xbf16, #tpu.memory_space<vmem>>, vector<1x64x64xbf16>
    %149 = vector.shape_cast %148 : vector<1x64x64xbf16> to vector<64x64xbf16>
    %cst_96 = arith.constant dense<0.000000e+00> : vector<144x64xf32>
    %150 = tpu.matmul %147, %149, %cst_96 {dimension_numbers = #tpu.dot_dimension_numbers<[1], [0], [0], [1], [0, 0, 1, 1], [], []>} : vector<144x64xbf16>, vector<64x64xbf16>, vector<144x64xf32> -> vector<144x64xf32>
    %151 = arith.addf %146, %150 : vector<144x64xf32>
    %c1_97 = arith.constant 1 : index
    %c0_98 = arith.constant 0 : index
    %152 = vector.load %arg10[%c1_97, %c0_98] : memref<182x64xbf16, #tpu.memory_space<vmem>>, vector<144x64xbf16>
    %c1_99 = arith.constant 1 : index
    %c0_100 = arith.constant 0 : index
    %c0_101 = arith.constant 0 : index
    %153 = vector.load %arg6[%c1_99, %c0_100, %c0_101] : memref<9x64x64xbf16, #tpu.memory_space<vmem>>, vector<1x64x64xbf16>
    %154 = vector.shape_cast %153 : vector<1x64x64xbf16> to vector<64x64xbf16>
    %cst_102 = arith.constant dense<0.000000e+00> : vector<144x64xf32>
    %155 = tpu.matmul %152, %154, %cst_102 {dimension_numbers = #tpu.dot_dimension_numbers<[1], [0], [0], [1], [0, 0, 1, 1], [], []>} : vector<144x64xbf16>, vector<64x64xbf16>, vector<144x64xf32> -> vector<144x64xf32>
    %156 = arith.addf %151, %155 : vector<144x64xf32>
    %c2_103 = arith.constant 2 : index
    %c0_104 = arith.constant 0 : index
    %157 = vector.load %arg10[%c2_103, %c0_104] : memref<182x64xbf16, #tpu.memory_space<vmem>>, vector<144x64xbf16>
    %c2_105 = arith.constant 2 : index
    %c0_106 = arith.constant 0 : index
    %c0_107 = arith.constant 0 : index
    %158 = vector.load %arg6[%c2_105, %c0_106, %c0_107] : memref<9x64x64xbf16, #tpu.memory_space<vmem>>, vector<1x64x64xbf16>
    %159 = vector.shape_cast %158 : vector<1x64x64xbf16> to vector<64x64xbf16>
    %cst_108 = arith.constant dense<0.000000e+00> : vector<144x64xf32>
    %160 = tpu.matmul %157, %159, %cst_108 {dimension_numbers = #tpu.dot_dimension_numbers<[1], [0], [0], [1], [0, 0, 1, 1], [], []>} : vector<144x64xbf16>, vector<64x64xbf16>, vector<144x64xf32> -> vector<144x64xf32>
    %161 = arith.addf %156, %160 : vector<144x64xf32>
    %c18_109 = arith.constant 18 : index
    %c0_110 = arith.constant 0 : index
    %162 = vector.load %arg10[%c18_109, %c0_110] : memref<182x64xbf16, #tpu.memory_space<vmem>>, vector<144x64xbf16>
    %c3_111 = arith.constant 3 : index
    %c0_112 = arith.constant 0 : index
    %c0_113 = arith.constant 0 : index
    %163 = vector.load %arg6[%c3_111, %c0_112, %c0_113] : memref<9x64x64xbf16, #tpu.memory_space<vmem>>, vector<1x64x64xbf16>
    %164 = vector.shape_cast %163 : vector<1x64x64xbf16> to vector<64x64xbf16>
    %cst_114 = arith.constant dense<0.000000e+00> : vector<144x64xf32>
    %165 = tpu.matmul %162, %164, %cst_114 {dimension_numbers = #tpu.dot_dimension_numbers<[1], [0], [0], [1], [0, 0, 1, 1], [], []>} : vector<144x64xbf16>, vector<64x64xbf16>, vector<144x64xf32> -> vector<144x64xf32>
    %166 = arith.addf %161, %165 : vector<144x64xf32>
    %c19_115 = arith.constant 19 : index
    %c0_116 = arith.constant 0 : index
    %167 = vector.load %arg10[%c19_115, %c0_116] : memref<182x64xbf16, #tpu.memory_space<vmem>>, vector<144x64xbf16>
    %c4_117 = arith.constant 4 : index
    %c0_118 = arith.constant 0 : index
    %c0_119 = arith.constant 0 : index
    %168 = vector.load %arg6[%c4_117, %c0_118, %c0_119] : memref<9x64x64xbf16, #tpu.memory_space<vmem>>, vector<1x64x64xbf16>
    %169 = vector.shape_cast %168 : vector<1x64x64xbf16> to vector<64x64xbf16>
    %cst_120 = arith.constant dense<0.000000e+00> : vector<144x64xf32>
    %170 = tpu.matmul %167, %169, %cst_120 {dimension_numbers = #tpu.dot_dimension_numbers<[1], [0], [0], [1], [0, 0, 1, 1], [], []>} : vector<144x64xbf16>, vector<64x64xbf16>, vector<144x64xf32> -> vector<144x64xf32>
    %171 = arith.addf %166, %170 : vector<144x64xf32>
    %c20_121 = arith.constant 20 : index
    %c0_122 = arith.constant 0 : index
    %172 = vector.load %arg10[%c20_121, %c0_122] : memref<182x64xbf16, #tpu.memory_space<vmem>>, vector<144x64xbf16>
    %c5_123 = arith.constant 5 : index
    %c0_124 = arith.constant 0 : index
    %c0_125 = arith.constant 0 : index
    %173 = vector.load %arg6[%c5_123, %c0_124, %c0_125] : memref<9x64x64xbf16, #tpu.memory_space<vmem>>, vector<1x64x64xbf16>
    %174 = vector.shape_cast %173 : vector<1x64x64xbf16> to vector<64x64xbf16>
    %cst_126 = arith.constant dense<0.000000e+00> : vector<144x64xf32>
    %175 = tpu.matmul %172, %174, %cst_126 {dimension_numbers = #tpu.dot_dimension_numbers<[1], [0], [0], [1], [0, 0, 1, 1], [], []>} : vector<144x64xbf16>, vector<64x64xbf16>, vector<144x64xf32> -> vector<144x64xf32>
    %176 = arith.addf %171, %175 : vector<144x64xf32>
    %c36_127 = arith.constant 36 : index
    %c0_128 = arith.constant 0 : index
    %177 = vector.load %arg10[%c36_127, %c0_128] : memref<182x64xbf16, #tpu.memory_space<vmem>>, vector<144x64xbf16>
    %c6_129 = arith.constant 6 : index
    %c0_130 = arith.constant 0 : index
    %c0_131 = arith.constant 0 : index
    %178 = vector.load %arg6[%c6_129, %c0_130, %c0_131] : memref<9x64x64xbf16, #tpu.memory_space<vmem>>, vector<1x64x64xbf16>
    %179 = vector.shape_cast %178 : vector<1x64x64xbf16> to vector<64x64xbf16>
    %cst_132 = arith.constant dense<0.000000e+00> : vector<144x64xf32>
    %180 = tpu.matmul %177, %179, %cst_132 {dimension_numbers = #tpu.dot_dimension_numbers<[1], [0], [0], [1], [0, 0, 1, 1], [], []>} : vector<144x64xbf16>, vector<64x64xbf16>, vector<144x64xf32> -> vector<144x64xf32>
    %181 = arith.addf %176, %180 : vector<144x64xf32>
    %c37_133 = arith.constant 37 : index
    %c0_134 = arith.constant 0 : index
    %182 = vector.load %arg10[%c37_133, %c0_134] : memref<182x64xbf16, #tpu.memory_space<vmem>>, vector<144x64xbf16>
    %c7_135 = arith.constant 7 : index
    %c0_136 = arith.constant 0 : index
    %c0_137 = arith.constant 0 : index
    %183 = vector.load %arg6[%c7_135, %c0_136, %c0_137] : memref<9x64x64xbf16, #tpu.memory_space<vmem>>, vector<1x64x64xbf16>
    %184 = vector.shape_cast %183 : vector<1x64x64xbf16> to vector<64x64xbf16>
    %cst_138 = arith.constant dense<0.000000e+00> : vector<144x64xf32>
    %185 = tpu.matmul %182, %184, %cst_138 {dimension_numbers = #tpu.dot_dimension_numbers<[1], [0], [0], [1], [0, 0, 1, 1], [], []>} : vector<144x64xbf16>, vector<64x64xbf16>, vector<144x64xf32> -> vector<144x64xf32>
    %186 = arith.addf %181, %185 : vector<144x64xf32>
    %c38_139 = arith.constant 38 : index
    %c0_140 = arith.constant 0 : index
    %187 = vector.load %arg10[%c38_139, %c0_140] : memref<182x64xbf16, #tpu.memory_space<vmem>>, vector<144x64xbf16>
    %c8_141 = arith.constant 8 : index
    %c0_142 = arith.constant 0 : index
    %c0_143 = arith.constant 0 : index
    %188 = vector.load %arg6[%c8_141, %c0_142, %c0_143] : memref<9x64x64xbf16, #tpu.memory_space<vmem>>, vector<1x64x64xbf16>
    %189 = vector.shape_cast %188 : vector<1x64x64xbf16> to vector<64x64xbf16>
    %cst_144 = arith.constant dense<0.000000e+00> : vector<144x64xf32>
    %190 = tpu.matmul %187, %189, %cst_144 {dimension_numbers = #tpu.dot_dimension_numbers<[1], [0], [0], [1], [0, 0, 1, 1], [], []>} : vector<144x64xbf16>, vector<64x64xbf16>, vector<144x64xf32> -> vector<144x64xf32>
    %191 = arith.addf %186, %190 : vector<144x64xf32>
    %c0_145 = arith.constant 0 : index
    %c0_146 = arith.constant 0 : index
    %192 = vector.load %arg7[%c0_145, %c0_146] : memref<1x64xf32, #tpu.memory_space<vmem>>, vector<1x64xf32>
    %193 = vector.broadcast %192 : vector<1x64xf32> to vector<144x64xf32>
    %194 = arith.addf %191, %193 : vector<144x64xf32>
    %195 = vector.extract_strided_slice %194 {offsets = [0, 0], sizes = [16, 64], strides = [1, 1]} : vector<144x64xf32> to vector<16x64xf32>
    %c0_i32_147 = arith.constant 0 : i32
    %196 = arith.addi %0, %c0_i32_147 : i32
    %c0_148 = arith.constant 0 : index
    %197 = arith.index_cast %196 : i32 to index
    %c0_149 = arith.constant 0 : index
    %c0_150 = arith.constant 0 : index
    %198 = vector.load %arg3[%c0_148, %197, %c0_149, %c0_150] : memref<1x16x16x64xf32, #tpu.memory_space<vmem>>, vector<1x1x16x64xf32>
    %199 = vector.shape_cast %198 : vector<1x1x16x64xf32> to vector<16x64xf32>
    %200 = arith.addf %195, %199 : vector<16x64xf32>
    %c0_151 = arith.constant 0 : index
    %c0_152 = arith.constant 0 : index
    %c0_153 = arith.constant 0 : index
    %c0_154 = arith.constant 0 : index
    %201 = vector.load %arg8[%c0_151, %c0_152, %c0_153, %c0_154] : memref<1x8x16x64xf32, #tpu.memory_space<vmem>>, vector<1x1x16x64xf32>
    %202 = vector.shape_cast %201 : vector<1x1x16x64xf32> to vector<16x64xf32>
    %203 = vector.shape_cast %200 : vector<16x64xf32> to vector<1x1x16x64xf32>
    tpu.vector_store %arg8[%c0_151, %c0_152, %c0_153, %c0_154], %203 {strides = array<i32>} : memref<1x8x16x64xf32, #tpu.memory_space<vmem>>, vector<1x1x16x64xf32>,
    %204 = vector.extract_strided_slice %194 {offsets = [18, 0], sizes = [16, 64], strides = [1, 1]} : vector<144x64xf32> to vector<16x64xf32>
    %c1_i32_155 = arith.constant 1 : i32
    %205 = arith.addi %0, %c1_i32_155 : i32
    %c0_156 = arith.constant 0 : index
    %206 = arith.index_cast %205 : i32 to index
    %c0_157 = arith.constant 0 : index
    %c0_158 = arith.constant 0 : index
    %207 = vector.load %arg3[%c0_156, %206, %c0_157, %c0_158] : memref<1x16x16x64xf32, #tpu.memory_space<vmem>>, vector<1x1x16x64xf32>
    %208 = vector.shape_cast %207 : vector<1x1x16x64xf32> to vector<16x64xf32>
    %209 = arith.addf %204, %208 : vector<16x64xf32>
    %c0_159 = arith.constant 0 : index
    %c1_160 = arith.constant 1 : index
    %c0_161 = arith.constant 0 : index
    %c0_162 = arith.constant 0 : index
    %210 = vector.load %arg8[%c0_159, %c1_160, %c0_161, %c0_162] : memref<1x8x16x64xf32, #tpu.memory_space<vmem>>, vector<1x1x16x64xf32>
    %211 = vector.shape_cast %210 : vector<1x1x16x64xf32> to vector<16x64xf32>
    %212 = vector.shape_cast %209 : vector<16x64xf32> to vector<1x1x16x64xf32>
    tpu.vector_store %arg8[%c0_159, %c1_160, %c0_161, %c0_162], %212 {strides = array<i32>} : memref<1x8x16x64xf32, #tpu.memory_space<vmem>>, vector<1x1x16x64xf32>,
    %213 = vector.extract_strided_slice %194 {offsets = [36, 0], sizes = [16, 64], strides = [1, 1]} : vector<144x64xf32> to vector<16x64xf32>
    %c2_i32_163 = arith.constant 2 : i32
    %214 = arith.addi %0, %c2_i32_163 : i32
    %c0_164 = arith.constant 0 : index
    %215 = arith.index_cast %214 : i32 to index
    %c0_165 = arith.constant 0 : index
    %c0_166 = arith.constant 0 : index
    %216 = vector.load %arg3[%c0_164, %215, %c0_165, %c0_166] : memref<1x16x16x64xf32, #tpu.memory_space<vmem>>, vector<1x1x16x64xf32>
    %217 = vector.shape_cast %216 : vector<1x1x16x64xf32> to vector<16x64xf32>
    %218 = arith.addf %213, %217 : vector<16x64xf32>
    %c0_167 = arith.constant 0 : index
    %c2_168 = arith.constant 2 : index
    %c0_169 = arith.constant 0 : index
    %c0_170 = arith.constant 0 : index
    %219 = vector.load %arg8[%c0_167, %c2_168, %c0_169, %c0_170] : memref<1x8x16x64xf32, #tpu.memory_space<vmem>>, vector<1x1x16x64xf32>
    %220 = vector.shape_cast %219 : vector<1x1x16x64xf32> to vector<16x64xf32>
    %221 = vector.shape_cast %218 : vector<16x64xf32> to vector<1x1x16x64xf32>
    tpu.vector_store %arg8[%c0_167, %c2_168, %c0_169, %c0_170], %221 {strides = array<i32>} : memref<1x8x16x64xf32, #tpu.memory_space<vmem>>, vector<1x1x16x64xf32>,
    %222 = vector.extract_strided_slice %194 {offsets = [54, 0], sizes = [16, 64], strides = [1, 1]} : vector<144x64xf32> to vector<16x64xf32>
    %c3_i32_171 = arith.constant 3 : i32
    %223 = arith.addi %0, %c3_i32_171 : i32
    %c0_172 = arith.constant 0 : index
    %224 = arith.index_cast %223 : i32 to index
    %c0_173 = arith.constant 0 : index
    %c0_174 = arith.constant 0 : index
    %225 = vector.load %arg3[%c0_172, %224, %c0_173, %c0_174] : memref<1x16x16x64xf32, #tpu.memory_space<vmem>>, vector<1x1x16x64xf32>
    %226 = vector.shape_cast %225 : vector<1x1x16x64xf32> to vector<16x64xf32>
    %227 = arith.addf %222, %226 : vector<16x64xf32>
    %c0_175 = arith.constant 0 : index
    %c3_176 = arith.constant 3 : index
    %c0_177 = arith.constant 0 : index
    %c0_178 = arith.constant 0 : index
    %228 = vector.load %arg8[%c0_175, %c3_176, %c0_177, %c0_178] : memref<1x8x16x64xf32, #tpu.memory_space<vmem>>, vector<1x1x16x64xf32>
    %229 = vector.shape_cast %228 : vector<1x1x16x64xf32> to vector<16x64xf32>
    %230 = vector.shape_cast %227 : vector<16x64xf32> to vector<1x1x16x64xf32>
    tpu.vector_store %arg8[%c0_175, %c3_176, %c0_177, %c0_178], %230 {strides = array<i32>} : memref<1x8x16x64xf32, #tpu.memory_space<vmem>>, vector<1x1x16x64xf32>,
    %231 = vector.extract_strided_slice %194 {offsets = [72, 0], sizes = [16, 64], strides = [1, 1]} : vector<144x64xf32> to vector<16x64xf32>
    %c4_i32_179 = arith.constant 4 : i32
    %232 = arith.addi %0, %c4_i32_179 : i32
    %c0_180 = arith.constant 0 : index
    %233 = arith.index_cast %232 : i32 to index
    %c0_181 = arith.constant 0 : index
    %c0_182 = arith.constant 0 : index
    %234 = vector.load %arg3[%c0_180, %233, %c0_181, %c0_182] : memref<1x16x16x64xf32, #tpu.memory_space<vmem>>, vector<1x1x16x64xf32>
    %235 = vector.shape_cast %234 : vector<1x1x16x64xf32> to vector<16x64xf32>
    %236 = arith.addf %231, %235 : vector<16x64xf32>
    %c0_183 = arith.constant 0 : index
    %c4_184 = arith.constant 4 : index
    %c0_185 = arith.constant 0 : index
    %c0_186 = arith.constant 0 : index
    %237 = vector.load %arg8[%c0_183, %c4_184, %c0_185, %c0_186] : memref<1x8x16x64xf32, #tpu.memory_space<vmem>>, vector<1x1x16x64xf32>
    %238 = vector.shape_cast %237 : vector<1x1x16x64xf32> to vector<16x64xf32>
    %239 = vector.shape_cast %236 : vector<16x64xf32> to vector<1x1x16x64xf32>
    tpu.vector_store %arg8[%c0_183, %c4_184, %c0_185, %c0_186], %239 {strides = array<i32>} : memref<1x8x16x64xf32, #tpu.memory_space<vmem>>, vector<1x1x16x64xf32>,
    %240 = vector.extract_strided_slice %194 {offsets = [90, 0], sizes = [16, 64], strides = [1, 1]} : vector<144x64xf32> to vector<16x64xf32>
    %c5_i32_187 = arith.constant 5 : i32
    %241 = arith.addi %0, %c5_i32_187 : i32
    %c0_188 = arith.constant 0 : index
    %242 = arith.index_cast %241 : i32 to index
    %c0_189 = arith.constant 0 : index
    %c0_190 = arith.constant 0 : index
    %243 = vector.load %arg3[%c0_188, %242, %c0_189, %c0_190] : memref<1x16x16x64xf32, #tpu.memory_space<vmem>>, vector<1x1x16x64xf32>
    %244 = vector.shape_cast %243 : vector<1x1x16x64xf32> to vector<16x64xf32>
    %245 = arith.addf %240, %244 : vector<16x64xf32>
    %c0_191 = arith.constant 0 : index
    %c5_192 = arith.constant 5 : index
    %c0_193 = arith.constant 0 : index
    %c0_194 = arith.constant 0 : index
    %246 = vector.load %arg8[%c0_191, %c5_192, %c0_193, %c0_194] : memref<1x8x16x64xf32, #tpu.memory_space<vmem>>, vector<1x1x16x64xf32>
    %247 = vector.shape_cast %246 : vector<1x1x16x64xf32> to vector<16x64xf32>
    %248 = vector.shape_cast %245 : vector<16x64xf32> to vector<1x1x16x64xf32>
    tpu.vector_store %arg8[%c0_191, %c5_192, %c0_193, %c0_194], %248 {strides = array<i32>} : memref<1x8x16x64xf32, #tpu.memory_space<vmem>>, vector<1x1x16x64xf32>,
    %249 = vector.extract_strided_slice %194 {offsets = [108, 0], sizes = [16, 64], strides = [1, 1]} : vector<144x64xf32> to vector<16x64xf32>
    %c6_i32_195 = arith.constant 6 : i32
    %250 = arith.addi %0, %c6_i32_195 : i32
    %c0_196 = arith.constant 0 : index
    %251 = arith.index_cast %250 : i32 to index
    %c0_197 = arith.constant 0 : index
    %c0_198 = arith.constant 0 : index
    %252 = vector.load %arg3[%c0_196, %251, %c0_197, %c0_198] : memref<1x16x16x64xf32, #tpu.memory_space<vmem>>, vector<1x1x16x64xf32>
    %253 = vector.shape_cast %252 : vector<1x1x16x64xf32> to vector<16x64xf32>
    %254 = arith.addf %249, %253 : vector<16x64xf32>
    %c0_199 = arith.constant 0 : index
    %c6_200 = arith.constant 6 : index
    %c0_201 = arith.constant 0 : index
    %c0_202 = arith.constant 0 : index
    %255 = vector.load %arg8[%c0_199, %c6_200, %c0_201, %c0_202] : memref<1x8x16x64xf32, #tpu.memory_space<vmem>>, vector<1x1x16x64xf32>
    %256 = vector.shape_cast %255 : vector<1x1x16x64xf32> to vector<16x64xf32>
    %257 = vector.shape_cast %254 : vector<16x64xf32> to vector<1x1x16x64xf32>
    tpu.vector_store %arg8[%c0_199, %c6_200, %c0_201, %c0_202], %257 {strides = array<i32>} : memref<1x8x16x64xf32, #tpu.memory_space<vmem>>, vector<1x1x16x64xf32>,
    %258 = vector.extract_strided_slice %194 {offsets = [126, 0], sizes = [16, 64], strides = [1, 1]} : vector<144x64xf32> to vector<16x64xf32>
    %c7_i32_203 = arith.constant 7 : i32
    %259 = arith.addi %0, %c7_i32_203 : i32
    %c0_204 = arith.constant 0 : index
    %260 = arith.index_cast %259 : i32 to index
    %c0_205 = arith.constant 0 : index
    %c0_206 = arith.constant 0 : index
    %261 = vector.load %arg3[%c0_204, %260, %c0_205, %c0_206] : memref<1x16x16x64xf32, #tpu.memory_space<vmem>>, vector<1x1x16x64xf32>
    %262 = vector.shape_cast %261 : vector<1x1x16x64xf32> to vector<16x64xf32>
    %263 = arith.addf %258, %262 : vector<16x64xf32>
    %c0_207 = arith.constant 0 : index
    %c7_208 = arith.constant 7 : index
    %c0_209 = arith.constant 0 : index
    %c0_210 = arith.constant 0 : index
    %264 = vector.load %arg8[%c0_207, %c7_208, %c0_209, %c0_210] : memref<1x8x16x64xf32, #tpu.memory_space<vmem>>, vector<1x1x16x64xf32>
    %265 = vector.shape_cast %264 : vector<1x1x16x64xf32> to vector<16x64xf32>
    %266 = vector.shape_cast %263 : vector<16x64xf32> to vector<1x1x16x64xf32>
    tpu.vector_store %arg8[%c0_207, %c7_208, %c0_209, %c0_210], %266 {strides = array<i32>} : memref<1x8x16x64xf32, #tpu.memory_space<vmem>>, vector<1x1x16x64xf32>,
    return
  }
  func.func @transform_0(%arg0: i32, %arg1: i32) -> (i32, i32) {
    %c0_i32 = arith.constant 0 : i32
    %c0_i32_0 = arith.constant 0 : i32
    %c0_i32_1 = arith.constant 0 : i32
    return %c0_i32, %c0_i32_0 : i32, i32
  }
  func.func @transform_1(%arg0: i32, %arg1: i32) -> (i32, i32, i32, i32) {
    %c0_i32 = arith.constant 0 : i32
    %c0_i32_0 = arith.constant 0 : i32
    %c0_i32_1 = arith.constant 0 : i32
    %c0_i32_2 = arith.constant 0 : i32
    return %arg0, %c0_i32, %c0_i32_0, %c0_i32_1 : i32, i32, i32, i32
  }
  func.func @transform_2(%arg0: i32, %arg1: i32) -> (i32, i32, i32) {
    %c0_i32 = arith.constant 0 : i32
    %c0_i32_0 = arith.constant 0 : i32
    %c0_i32_1 = arith.constant 0 : i32
    %c0_i32_2 = arith.constant 0 : i32
    return %c0_i32, %c0_i32_0, %c0_i32_1 : i32, i32, i32
  }
  func.func @transform_3(%arg0: i32, %arg1: i32) -> (i32, i32) {
    %c0_i32 = arith.constant 0 : i32
    %c0_i32_0 = arith.constant 0 : i32
    %c0_i32_1 = arith.constant 0 : i32
    return %c0_i32, %c0_i32_0 : i32, i32
  }
  func.func @transform_4(%arg0: i32, %arg1: i32) -> (i32, i32, i32) {
    %c0_i32 = arith.constant 0 : i32
    %c0_i32_0 = arith.constant 0 : i32
    %c0_i32_1 = arith.constant 0 : i32
    %c0_i32_2 = arith.constant 0 : i32
    return %c0_i32, %c0_i32_0, %c0_i32_1 : i32, i32, i32
  }
  func.func @transform_5(%arg0: i32, %arg1: i32) -> (i32, i32) {
    %c0_i32 = arith.constant 0 : i32
    %c0_i32_0 = arith.constant 0 : i32
    %c0_i32_1 = arith.constant 0 : i32
    return %c0_i32, %c0_i32_0 : i32, i32
  }
  func.func @transform_6(%arg0: i32, %arg1: i32) -> (i32, i32, i32, i32) {
    %c0_i32 = arith.constant 0 : i32
    %c0_i32_0 = arith.constant 0 : i32
    %c0_i32_1 = arith.constant 0 : i32
    return %arg0, %arg1, %c0_i32, %c0_i32_0 : i32, i32, i32, i32
  }
}

</mosaic_0001>

<llo_original>
// kernel: resblock_forward.1
$region0: #{resblock_forward.1}
  #allocation0 [shape = 'u32[]', space=smem, size = 0x4, offset = 0x4, fixed_abs, tag = 'smem constant byte address 0x4 - core index']
  #allocation1 [shape = 'u32[144,128]{1,0:T(1,128)}', space=vmem, size = 0x12000, scoped, tag = 'internal scratch']
  #allocation2 [shape = 'bf16[218,64]{1,0:T(8,128)(2,1)}', space=vmem, size = 0xe000, scoped, tag = 'scratch operand']
  #allocation3 [shape = 'bf16[182,64]{1,0:T(8,128)(2,1)}', space=vmem, size = 0xb800, scoped, tag = 'scratch operand']
  %s0 = inlined_call_operand.vmem [shape: f32[180,1], index: 0, kind: input, shape index: {}]
  %s1 = inlined_call_operand.vmem [shape: f32[2,16,16,64], index: 1, kind: input, shape index: {}]
  %s2 = inlined_call_operand.vmem [shape: bf16[9,64,64], index: 2, kind: input, shape index: {}]
  %s3 = inlined_call_operand.vmem [shape: f32[1,64], index: 3, kind: input, shape index: {}]
  %s4 = inlined_call_operand.vmem [shape: bf16[9,64,64], index: 4, kind: input, shape index: {}]
  %s5 = inlined_call_operand.vmem [shape: f32[1,64], index: 5, kind: input, shape index: {}]
  %s6 = inlined_call_operand.hbm [shape: f32[2,16,16,64], index: 6, kind: output, shape index: {}]
  %s7 = sld [smem:[#allocation0]]
  $region105: #{resblock_forward.1} parent=0
    _
  %s9 = ssub.s32 1, %s7
  %s10 = scalar_select 0, %s9, %s7
  $region1: #{resblock_forward.1} parent=0
    #allocation4 [shape = 'u8[131072]{0}', space=vmem, size = 0x20000, scoped, tag = 'output window, operand 0']
    #allocation5 [shape = 's32[2]{0}', space=sflag, size = 0x8, scoped, tag = 'scoped memory for resblock_forward.1']
    %11 = vsyncpa [#allocation5], 0
    %s12 = scalar_lea.sflag [#allocation5], 1
    %13 = vsyncpa %s12, 0
    loop: start=0, step=1, limit=6
    $region2: #{resblock_forward.1} parent=1 // loop_pre_header
      _
    $region3: #{resblock_forward.1} parent=1 // loop_header
      %s15 = sphi 0, %s19
      %p16 = scmp.ge.s32.totalorder %s15, 6
      %s22 = sphi 0, %s34
      %s23 = sphi 0, %s30
      %s24 = sphi 0, %s22
      %s25 = sphi 0, %s23
      %s26 = sphi 0, %s24
      %s27 = sphi 0, %s25
      %s35 = sphi 0, %s35
      %s37 = sphi 0, %s35
      %s38 = sphi 0, %s37
      %s52 = sphi 0, %s38
      %s58 = sphi 0, %s60
      %s61 = sphi 0, %s58
      %s62 = sphi 0, %s61
      %s78 = sphi 0, %s62
      %s82 = sphi 0, %s82
      %s84 = sphi 0, %s82
      %s85 = sphi 0, %s84
      %s99 = sphi 0, %s85
      %s103 = sphi 0, %s103
      %s105 = sphi 0, %s103
      %s106 = sphi 0, %s105
      %s120 = sphi 0, %s106
      %s124 = sphi 0, %s124
      %s126 = sphi 0, %s124
      %s127 = sphi 0, %s126
      %s141 = sphi 0, %s127
      %s145 = sphi 0, %s145
      %s147 = sphi 0, %s145
      %s148 = sphi 0, %s147
      %s162 = sphi 0, %s148
      %s170 = sphi 0, %s172
      %s173 = sphi 0, %s170
      %s174 = sphi 0, %s173
      %s190 = sphi 0, %s174
    $region4: #{resblock_forward.1} parent=1 // loop_header_branch
      %18 = sbr.rel (%p16) target = $region8
    $region5: #{resblock_forward.1} parent=1 // loop_body
      %s20 = ssub.s32 %s15, 1
      %s21 = ssub.s32 %s15, 2
      %s28 = sadd.s32 1, %s23
      %p29 = scmp.ge.s32.totalorder %s28, 2
      %s30 = scalar_select %p29, 0, %s28
      %s31 = sadd.s32 1, %s22
      %s32 = scalar_select %p29, %s31, %s22
      %p33 = scmp.ge.s32.totalorder %s32, 2
      %s34 = scalar_select %p33, 0, %s32
      %s36 = sadd.s32 %s35, 1
      %p39 = scmp.eq.s32.totalorder %s15, 3
      %p40 = scmp.ne.s32.totalorder %s35, %s37
      %p41 = scmp.eq.s32.totalorder %s15, 0
      %p42 = por %p40, %p41
      %p43 = scmp.ne.s32.totalorder %s35, %s37
      %p44 = scmp.eq.s32.totalorder %s20, 3
      %p45 = por %p43, %p44
      %p46 = scmp.ne.s32.totalorder %s37, %s38
      %p47 = scmp.eq.s32.totalorder %s20, 0
      %p48 = por %p46, %p47
      %p49 = scmp.ne.s32.totalorder %s37, %s38
      %p50 = scmp.eq.s32.totalorder %s21, 3
      %p51 = por %p49, %p50
      %p53 = scmp.ne.s32.totalorder %s38, %s52
      %p54 = scmp.eq.s32.totalorder %s21, 0
      %p55 = por %p53, %p54
      %s56 = ssub.s32 %s22, %s34
      %p57 = scmp.eq.s32.totalorder %s56, 0
      %s59 = sadd.s32 %s58, 1
      %s60 = scalar_select %p57, %s58, %s59
      %p63 = pneg %p57
      %p64 = scmp.eq.s32.totalorder %s15, 3
      %p65 = por %p63, %p64
      %p66 = scmp.ne.s32.totalorder %s58, %s61
      %p67 = scmp.eq.s32.totalorder %s15, 0
      %p68 = por %p66, %p67
      %p69 = scmp.ne.s32.totalorder %s58, %s61
      %p70 = scmp.eq.s32.totalorder %s20, 3
      %p71 = por %p69, %p70
      %p72 = scmp.ne.s32.totalorder %s61, %s62
      %p73 = scmp.eq.s32.totalorder %s20, 0
      %p74 = por %p72, %p73
      %p75 = scmp.ne.s32.totalorder %s61, %s62
      %p76 = scmp.eq.s32.totalorder %s21, 3
      %p77 = por %p75, %p76
      %p79 = scmp.ne.s32.totalorder %s62, %s78
      %p80 = scmp.eq.s32.totalorder %s21, 0
      %p81 = por %p79, %p80
      %s83 = sadd.s32 %s82, 1
      %p86 = scmp.eq.s32.totalorder %s15, 3
      %p87 = scmp.ne.s32.totalorder %s82, %s84
      %p88 = scmp.eq.s32.totalorder %s15, 0
      %p89 = por %p87, %p88
      %p90 = scmp.ne.s32.totalorder %s82, %s84
      %p91 = scmp.eq.s32.totalorder %s20, 3
      %p92 = por %p90, %p91
      %p93 = scmp.ne.s32.totalorder %s84, %s85
      %p94 = scmp.eq.s32.totalorder %s20, 0
      %p95 = por %p93, %p94
      %p96 = scmp.ne.s32.totalorder %s84, %s85
      %p97 = scmp.eq.s32.totalorder %s21, 3
      %p98 = por %p96, %p97
      %p100 = scmp.ne.s32.totalorder %s85, %s99
      %p101 = scmp.eq.s32.totalorder %s21, 0
      %p102 = por %p100, %p101
      %s104 = sadd.s32 %s103, 1
      %p107 = scmp.eq.s32.totalorder %s15, 3
      %p108 = scmp.ne.s32.totalorder %s103, %s105
      %p109 = scmp.eq.s32.totalorder %s15, 0
      %p110 = por %p108, %p109
      %p111 = scmp.ne.s32.totalorder %s103, %s105
      %p112 = scmp.eq.s32.totalorder %s20, 3
      %p113 = por %p111, %p112
      %p114 = scmp.ne.s32.totalorder %s105, %s106
      %p115 = scmp.eq.s32.totalorder %s20, 0
      %p116 = por %p114, %p115
      %p117 = scmp.ne.s32.totalorder %s105, %s106
      %p118 = scmp.eq.s32.totalorder %s21, 3
      %p119 = por %p117, %p118
      %p121 = scmp.ne.s32.totalorder %s106, %s120
      %p122 = scmp.eq.s32.totalorder %s21, 0
      %p123 = por %p121, %p122
      %s125 = sadd.s32 %s124, 1
      %p128 = scmp.eq.s32.totalorder %s15, 3
      %p129 = scmp.ne.s32.totalorder %s124, %s126
      %p130 = scmp.eq.s32.totalorder %s15, 0
      %p131 = por %p129, %p130
      %p132 = scmp.ne.s32.totalorder %s124, %s126
      %p133 = scmp.eq.s32.totalorder %s20, 3
      %p134 = por %p132, %p133
      %p135 = scmp.ne.s32.totalorder %s126, %s127
      %p136 = scmp.eq.s32.totalorder %s20, 0
      %p137 = por %p135, %p136
      %p138 = scmp.ne.s32.totalorder %s126, %s127
      %p139 = scmp.eq.s32.totalorder %s21, 3
      %p140 = por %p138, %p139
      %p142 = scmp.ne.s32.totalorder %s127, %s141
      %p143 = scmp.eq.s32.totalorder %s21, 0
      %p144 = por %p142, %p143
      %s146 = sadd.s32 %s145, 1
      %p149 = scmp.eq.s32.totalorder %s15, 3
      %p150 = scmp.ne.s32.totalorder %s145, %s147
      %p151 = scmp.eq.s32.totalorder %s15, 0
      %p152 = por %p150, %p151
      %p153 = scmp.ne.s32.totalorder %s145, %s147
      %p154 = scmp.eq.s32.totalorder %s20, 3
      %p155 = por %p153, %p154
      %p156 = scmp.ne.s32.totalorder %s147, %s148
      %p157 = scmp.eq.s32.totalorder %s20, 0
      %p158 = por %p156, %p157
      %p159 = scmp.ne.s32.totalorder %s147, %s148
      %p160 = scmp.eq.s32.totalorder %s21, 3
      %p161 = por %p159, %p160
      %p163 = scmp.ne.s32.totalorder %s148, %s162
      %p164 = scmp.eq.s32.totalorder %s21, 0
      %p165 = por %p163, %p164
      %s166 = ssub.s32 %s22, %s34
      %s167 = ssub.s32 %s23, %s30
      %s168 = sor.u32 %s166, %s167
      %p169 = scmp.eq.s32.totalorder %s168, 0
      %s171 = sadd.s32 %s170, 1
      %s172 = scalar_select %p169, %s170, %s171
      %p175 = pneg %p169
      %p176 = scmp.eq.s32.totalorder %s15, 3
      %p177 = por %p175, %p176
      %p178 = scmp.ne.s32.totalorder %s170, %s173
      %p179 = scmp.eq.s32.totalorder %s15, 0
      %p180 = por %p178, %p179
      %p181 = scmp.ne.s32.totalorder %s170, %s173
      %p182 = scmp.eq.s32.totalorder %s20, 3
      %p183 = por %p181, %p182
      %p184 = scmp.ne.s32.totalorder %s173, %s174
      %p185 = scmp.eq.s32.totalorder %s20, 0
      %p186 = por %p184, %p185
      %p187 = scmp.ne.s32.totalorder %s173, %s174
      %p188 = scmp.eq.s32.totalorder %s21, 3
      %p189 = por %p187, %p188
      %p191 = scmp.ne.s32.totalorder %s174, %s190
      %p192 = scmp.eq.s32.totalorder %s21, 0
      %p193 = por %p191, %p192
      %p194 = scmp.le.s32.totalorder 1, %s15
      %p195 = scmp.lt.s32.totalorder %s15, 5
      %p196 = pnand %p194, %p195
      %p197 = pneg %p196
      // Predicated region
      $region9: #{resblock_forward.1} parent=5 // pred_check
        _
      $region10: #{resblock_forward.1} parent=5 // pred_check_branch
        %199 = sbr.rel (%p196) target = $region12
      $region11: #{resblock_forward.1} parent=5 // pred_region
        %s200 = ssub.s32 %s15, 1
        // Predicated region
        $region13: #{resblock_forward.1} parent=11 // pred_check
          %p201 = pneg %p48
        $region14: #{resblock_forward.1} parent=11 // pred_check_branch
          %203 = sbr.rel (%p201) target = $region16
        $region15: #{resblock_forward.1} parent=11 // pred_region
          _
        $region16: #{resblock_forward.1} parent=11 // pred_fallthru
          _
        // Predicated region
        $region17: #{resblock_forward.1} parent=11 // pred_check
          %p204 = pneg %p95
        $region18: #{resblock_forward.1} parent=11 // pred_check_branch
          %206 = sbr.rel (%p204) target = $region20
        $region19: #{resblock_forward.1} parent=11 // pred_region
          _
        $region20: #{resblock_forward.1} parent=11 // pred_fallthru
          _
        // Predicated region
        $region21: #{resblock_forward.1} parent=11 // pred_check
          %p207 = pneg %p116
        $region22: #{resblock_forward.1} parent=11 // pred_check_branch
          %209 = sbr.rel (%p207) target = $region24
        $region23: #{resblock_forward.1} parent=11 // pred_region
          _
        $region24: #{resblock_forward.1} parent=11 // pred_fallthru
          _
        // Predicated region
        $region25: #{resblock_forward.1} parent=11 // pred_check
          %p210 = pneg %p137
        $region26: #{resblock_forward.1} parent=11 // pred_check_branch
          %212 = sbr.rel (%p210) target = $region28
        $region27: #{resblock_forward.1} parent=11 // pred_region
          _
        $region28: #{resblock_forward.1} parent=11 // pred_fallthru
          _
        // Predicated region
        $region29: #{resblock_forward.1} parent=11 // pred_check
          %p213 = pneg %p158
        $region30: #{resblock_forward.1} parent=11 // pred_check_branch
          %215 = sbr.rel (%p213) target = $region32
        $region31: #{resblock_forward.1} parent=11 // pred_region
          _
        $region32: #{resblock_forward.1} parent=11 // pred_fallthru
          _
      $region12: #{resblock_forward.1} parent=5 // pred_fallthru
        _
      %p216 = scmp.lt.s32.totalorder %s15, 4
      // Predicated region
      $region33: #{resblock_forward.1} parent=5 // pred_check
        %p217 = pneg %p216
      $region34: #{resblock_forward.1} parent=5 // pred_check_branch
        %219 = sbr.rel (%p217) target = $region36
      $region35: #{resblock_forward.1} parent=5 // pred_region
        // Predicated region
        $region37: #{resblock_forward.1} parent=35 // pred_check
          %p220 = pneg %p68
        $region38: #{resblock_forward.1} parent=35 // pred_check_branch
          %222 = sbr.rel (%p220) target = $region40
        $region39: #{resblock_forward.1} parent=35 // pred_region
          %p223 = scmp.lt.s32.totalorder %s22, 1
          %s224 = scalar_select %p223, %s22, 1
          %s225 = smul.addr %s224, 32
          %s226 = smul.addr %s225, 8
          %s227 = scalar_lea.vmem %s1, %s226
        $region40: #{resblock_forward.1} parent=35 // pred_fallthru
          _
      $region36: #{resblock_forward.1} parent=5 // pred_fallthru
        _
      %p228 = scmp.le.s32.totalorder 1, %s15
      %p229 = scmp.lt.s32.totalorder %s15, 5
      %p230 = pnand %p228, %p229
      %p231 = pneg %p230
      // Predicated region
      $region41: #{resblock_forward.1} parent=5 // pred_check
        _
      $region42: #{resblock_forward.1} parent=5 // pred_check_branch
        %233 = sbr.rel (%p230) target = $region44
      $region43: #{resblock_forward.1} parent=5 // pred_region
        %s234 = ssub.s32 %s15, 1
        %p235 = pneg %p48
        %p236 = pneg %p45
        %p237 = scmp.lt.s32.totalorder %s24, 1
        %s238 = scalar_select %p237, %s24, 1
        %s239 = smul.addr %s238, 32
        %s240 = smul.addr %s239, 8
        %s241 = scalar_lea.vmem %s1, %s240
        %p242 = pneg %p74
        %p243 = pneg %p71
        %p244 = pneg %p95
        %p245 = pneg %p92
        %p246 = pneg %p116
        %p247 = pneg %p113
        %p248 = pneg %p137
        %p249 = pneg %p134
        %p250 = pneg %p158
        %p251 = pneg %p155
        %p252 = pneg %p186
        %p253 = pneg %p183
        %s254 = sand.u32 %s173, 1
        %s255 = scalar_lea.sflag [#allocation5], %s254
        %s256 = sand.u32 %s173, 1
        %s257 = smul.addr %s256, 128
        %s258 = scalar_lea.vmem [#allocation4], %s257
        %p259 = scmp.lt.s32.totalorder %s24, 1
        %s260 = scalar_select %p259, %s24, 1
        %s261 = smul.addr %s260, 32
        %s262 = smul.addr %s261, 8
        %s263 = scalar_lea.vmem %s1, %s262
        %s264 = smul.u32 8, %s25
        %s266 = smul.u32 %s25, 8
        %vm267 = vcmask 519168
        %268 = vst.msk [vmem:[#allocation2] sm:$0xf] %vm267, 0
        %269 = vst.msk [vmem:[#allocation2 + $0x4] sm:$0xf] %vm267, 0
        %270 = vst.msk [vmem:[#allocation2 + $0x8] sm:$0xf] %vm267, 0
        %271 = vst.msk [vmem:[#allocation2 + $0xc] sm:$0xf] %vm267, 0
        %272 = vst.msk [vmem:[#allocation2 + $0x10] sm:$0xf] %vm267, 0
        %273 = vst.msk [vmem:[#allocation2 + $0x14] sm:$0xf] %vm267, 0
        %274 = vst.msk [vmem:[#allocation2 + $0x18] sm:$0xf] %vm267, 0
        %275 = vst.msk [vmem:[#allocation2 + $0x1c] sm:$0xf] %vm267, 0
        %276 = vst.msk [vmem:[#allocation2 + $0x20] sm:$0xf] %vm267, 0
        %277 = vst.msk [vmem:[#allocation2 + $0x24] sm:$0xf] %vm267, 0
        %278 = vst.msk [vmem:[#allocation2 + $0x28] sm:$0xf] %vm267, 0
        %279 = vst.msk [vmem:[#allocation2 + $0x2c] sm:$0xf] %vm267, 0
        %280 = vst.msk [vmem:[#allocation2 + $0x30] sm:$0xf] %vm267, 0
        %281 = vst.msk [vmem:[#allocation2 + $0x34] sm:$0xf] %vm267, 0
        %282 = vst.msk [vmem:[#allocation2 + $0x38] sm:$0xf] %vm267, 0
        %283 = vst.msk [vmem:[#allocation2 + $0x3c] sm:$0xf] %vm267, 0
        %284 = vst.msk [vmem:[#allocation2 + $0x40] sm:$0xf] %vm267, 0
        %285 = vst.msk [vmem:[#allocation2 + $0x44] sm:$0xf] %vm267, 0
        %286 = vst.msk [vmem:[#allocation2 + $0x48] sm:$0xf] %vm267, 0
        %287 = vst.msk [vmem:[#allocation2 + $0x4c] sm:$0xf] %vm267, 0
        %288 = vst.msk [vmem:[#allocation2 + $0x50] sm:$0xf] %vm267, 0
        %289 = vst.msk [vmem:[#allocation2 + $0x54] sm:$0xf] %vm267, 0
        %290 = vst.msk [vmem:[#allocation2 + $0x58] sm:$0xf] %vm267, 0
        %291 = vst.msk [vmem:[#allocation2 + $0x5c] sm:$0xf] %vm267, 0
        %292 = vst.msk [vmem:[#allocation2 + $0x60] sm:$0xf] %vm267, 0
        %293 = vst.msk [vmem:[#allocation2 + $0x64] sm:$0xf] %vm267, 0
        %294 = vst.msk [vmem:[#allocation2 + $0x68] sm:$0xf] %vm267, 0
        %vm295 = vcmask 516096
        %296 = vst.msk [vmem:[#allocation2 + $0x6c] sm:$0x1] %vm295, 0
        %s297 = sadd.s32 %s266, 4294967294
        %p298 = scmp.ge.s32.totalorder %s297, 0
        %p299 = scmp.lt.s32.totalorder %s297, 16
        %p300 = pnand %p298, %p299
        %p301 = pneg %p300
        // Predicated region
        $region45: #{resblock_forward.1} parent=43 // pred_check
          _
        $region46: #{resblock_forward.1} parent=43 // pred_check_branch
          %303 = sbr.rel (%p300) target = $region48
        $region47: #{resblock_forward.1} parent=43 // pred_region
          %s304 = smul.u32 %s297, 16
          %s305 = scalar_lea.vmem %s263, %s304
          %v306 = vld [vmem:[%s305] sm:$0xff]
          %v307 = vld [vmem:[%s305 + $0x8] sm:$0xff]
          %v308 = vpack.c.bf16 %v307, %v306
          %v310 = vunpack.c.l.b16 %v308
          %v311 = vunpack.c.h.b16 %v308
          %v312 = vpack.c.b16 %v310, %v310
          %v313 = vpack.c.b16 %v311, %v311
          %vm314 = vcmask 1040384
          %vm315 = vcmask 1044484
          %vm316 = vmor %vm314, %vm315
          %v317 = vrot.slane %v312, 7
          %v318 = vrot.slane %v317, 4
          %v319 = vrot.slane %v313, 7
          %v320 = vsel %vm316, %v318, %v319
          %v321 = vrot.slane %v319, 4
          %vm325 = vcmask 519169
          %326 = vst.msk [vmem:[#allocation2] sm:$0xe] %vm325, %v317
          %327 = vst.msk [vmem:[#allocation2 + $0x4] sm:$0xf] %vm267, %v320
          %328 = vst.msk [vmem:[#allocation2 + $0x8] sm:$0x1] %vm295, %v321
        $region48: #{resblock_forward.1} parent=43 // pred_fallthru
          _
        %s329 = sadd.s32 %s266, 4294967295
        %p330 = scmp.ge.s32.totalorder %s329, 0
        %p331 = scmp.lt.s32.totalorder %s329, 16
        %p332 = pnand %p330, %p331
        %p333 = pneg %p332
        // Predicated region
        $region49: #{resblock_forward.1} parent=43 // pred_check
          _
        $region50: #{resblock_forward.1} parent=43 // pred_check_branch
          %335 = sbr.rel (%p332) target = $region52
        $region51: #{resblock_forward.1} parent=43 // pred_region
          %s336 = smul.u32 %s329, 16
          %s337 = scalar_lea.vmem %s263, %s336
          %v338 = vld [vmem:[%s337] sm:$0xff]
          %v339 = vld [vmem:[%s337 + $0x8] sm:$0xff]
          %v340 = vpack.c.bf16 %v339, %v338
          %v342 = vunpack.c.l.b16 %v340
          %v343 = vunpack.c.h.b16 %v340
          %v344 = vpack.c.b16 %v342, %v342
          %v345 = vpack.c.b16 %v343, %v343
          %vm346 = vcmask 1041408
          %vm347 = vcmask 1045508
          %vm348 = vmor %vm346, %vm347
          %v349 = vrot.slane %v344, 6
          %v350 = vrot.slane %v349, 4
          %v351 = vrot.slane %v345, 6
          %v352 = vsel %vm348, %v350, %v351
          %v353 = vrot.slane %v351, 4
          %vm357 = vcmask 519170
          %358 = vst.msk [vmem:[#allocation2 + $0x8] sm:$0xc] %vm357, %v349
          %359 = vst.msk [vmem:[#allocation2 + $0xc] sm:$0xf] %vm267, %v352
          %vm360 = vcmask 517120
          %361 = vst.msk [vmem:[#allocation2 + $0x10] sm:$0x3] %vm360, %v353
        $region52: #{resblock_forward.1} parent=43 // pred_fallthru
          _
        %p362 = scmp.ge.s32.totalorder %s266, 0
        %p363 = scmp.lt.s32.totalorder %s266, 16
        %p364 = pnand %p362, %p363
        %p365 = pneg %p364
        // Predicated region
        $region53: #{resblock_forward.1} parent=43 // pred_check
          _
        $region54: #{resblock_forward.1} parent=43 // pred_check_branch
          %367 = sbr.rel (%p364) target = $region56
        $region55: #{resblock_forward.1} parent=43 // pred_region
          %s368 = smul.u32 %s266, 16
          %s369 = scalar_lea.vmem %s263, %s368
          %v370 = vld [vmem:[%s369] sm:$0xff]
          %v371 = vld [vmem:[%s369 + $0x8] sm:$0xff]
          %v372 = vpack.c.bf16 %v371, %v370
          %v374 = vunpack.c.l.b16 %v372
          %v375 = vunpack.c.h.b16 %v372
          %v376 = vpack.c.b16 %v374, %v374
          %v377 = vpack.c.b16 %v375, %v375
          %vm378 = vcmask 1042432
          %vm379 = vcmask 1046532
          %vm380 = vmor %vm378, %vm379
          %v381 = vrot.slane %v376, 5
          %v382 = vrot.slane %v381, 4
          %v383 = vrot.slane %v377, 5
          %v384 = vsel %vm380, %v382, %v383
          %v385 = vrot.slane %v383, 4
          %vm389 = vcmask 519171
          %390 = vst.msk [vmem:[#allocation2 + $0x10] sm:$0x8] %vm389, %v381
          %391 = vst.msk [vmem:[#allocation2 + $0x14] sm:$0xf] %vm267, %v384
          %vm392 = vcmask 518144
          %393 = vst.msk [vmem:[#allocation2 + $0x18] sm:$0x7] %vm392, %v385
        $region56: #{resblock_forward.1} parent=43 // pred_fallthru
          _
        %s394 = sadd.s32 %s266, 1
        %p395 = scmp.ge.s32.totalorder %s394, 0
        %p396 = scmp.lt.s32.totalorder %s394, 16
        %p397 = pnand %p395, %p396
        %p398 = pneg %p397
        // Predicated region
        $region57: #{resblock_forward.1} parent=43 // pred_check
          _
        $region58: #{resblock_forward.1} parent=43 // pred_check_branch
          %400 = sbr.rel (%p397) target = $region60
        $region59: #{resblock_forward.1} parent=43 // pred_region
          %s401 = smul.u32 %s394, 16
          %s402 = scalar_lea.vmem %s263, %s401
          %v403 = vld [vmem:[%s402] sm:$0xff]
          %v404 = vld [vmem:[%s402 + $0x8] sm:$0xff]
          %v405 = vpack.c.bf16 %v404, %v403
          %v407 = vunpack.c.l.b16 %v405
          %v408 = vunpack.c.h.b16 %v405
          %v409 = vpack.c.b16 %v407, %v407
          %v410 = vpack.c.b16 %v408, %v408
          %413 = vst.msk [vmem:[#allocation2 + $0x1c] sm:$0xf] %vm267, %v409
          %414 = vst.msk [vmem:[#allocation2 + $0x20] sm:$0xf] %vm267, %v410
        $region60: #{resblock_forward.1} parent=43 // pred_fallthru
          _
        %s415 = sadd.s32 %s266, 2
        %p416 = scmp.ge.s32.totalorder %s415, 0
        %p417 = scmp.lt.s32.totalorder %s415, 16
        %p418 = pnand %p416, %p417
        %p419 = pneg %p418
        // Predicated region
        $region61: #{resblock_forward.1} parent=43 // pred_check
          _
        $region62: #{resblock_forward.1} parent=43 // pred_check_branch
          %421 = sbr.rel (%p418) target = $region64
        $region63: #{resblock_forward.1} parent=43 // pred_region
          %s422 = smul.u32 %s415, 16
          %s423 = scalar_lea.vmem %s263, %s422
          %v424 = vld [vmem:[%s423] sm:$0xff]
          %v425 = vld [vmem:[%s423 + $0x8] sm:$0xff]
          %v426 = vpack.c.bf16 %v425, %v424
          %v428 = vunpack.c.l.b16 %v426
          %v429 = vunpack.c.h.b16 %v426
          %v430 = vpack.c.b16 %v428, %v428
          %v431 = vpack.c.b16 %v429, %v429
          %vm432 = vcmask 1040384
          %vm433 = vcmask 1044484
          %vm434 = vmor %vm432, %vm433
          %v435 = vrot.slane %v430, 7
          %v436 = vrot.slane %v435, 4
          %v437 = vrot.slane %v431, 7
          %v438 = vsel %vm434, %v436, %v437
          %v439 = vrot.slane %v437, 4
          %vm443 = vcmask 519169
          %444 = vst.msk [vmem:[#allocation2 + $0x24] sm:$0xe] %vm443, %v435
          %445 = vst.msk [vmem:[#allocation2 + $0x28] sm:$0xf] %vm267, %v438
          %446 = vst.msk [vmem:[#allocation2 + $0x2c] sm:$0x1] %vm295, %v439
        $region64: #{resblock_forward.1} parent=43 // pred_fallthru
          _
        %s447 = sadd.s32 %s266, 3
        %p448 = scmp.ge.s32.totalorder %s447, 0
        %p449 = scmp.lt.s32.totalorder %s447, 16
        %p450 = pnand %p448, %p449
        %p451 = pneg %p450
        // Predicated region
        $region65: #{resblock_forward.1} parent=43 // pred_check
          _
        $region66: #{resblock_forward.1} parent=43 // pred_check_branch
          %453 = sbr.rel (%p450) target = $region68
        $region67: #{resblock_forward.1} parent=43 // pred_region
          %s454 = smul.u32 %s447, 16
          %s455 = scalar_lea.vmem %s263, %s454
          %v456 = vld [vmem:[%s455] sm:$0xff]
          %v457 = vld [vmem:[%s455 + $0x8] sm:$0xff]
          %v458 = vpack.c.bf16 %v457, %v456
          %v460 = vunpack.c.l.b16 %v458
          %v461 = vunpack.c.h.b16 %v458
          %v462 = vpack.c.b16 %v460, %v460
          %v463 = vpack.c.b16 %v461, %v461
          %vm464 = vcmask 1041408
          %vm465 = vcmask 1045508
          %vm466 = vmor %vm464, %vm465
          %v467 = vrot.slane %v462, 6
          %v468 = vrot.slane %v467, 4
          %v469 = vrot.slane %v463, 6
          %v470 = vsel %vm466, %v468, %v469
          %v471 = vrot.slane %v469, 4
          %vm475 = vcmask 519170
          %476 = vst.msk [vmem:[#allocation2 + $0x2c] sm:$0xc] %vm475, %v467
          %477 = vst.msk [vmem:[#allocation2 + $0x30] sm:$0xf] %vm267, %v470
          %vm478 = vcmask 517120
          %479 = vst.msk [vmem:[#allocation2 + $0x34] sm:$0x3] %vm478, %v471
        $region68: #{resblock_forward.1} parent=43 // pred_fallthru
          _
        %s480 = sadd.s32 %s266, 4
        %p481 = scmp.ge.s32.totalorder %s480, 0
        %p482 = scmp.lt.s32.totalorder %s480, 16
        %p483 = pnand %p481, %p482
        %p484 = pneg %p483
        // Predicated region
        $region69: #{resblock_forward.1} parent=43 // pred_check
          _
        $region70: #{resblock_forward.1} parent=43 // pred_check_branch
          %486 = sbr.rel (%p483) target = $region72
        $region71: #{resblock_forward.1} parent=43 // pred_region
          %s487 = smul.u32 %s480, 16
          %s488 = scalar_lea.vmem %s263, %s487
          %v489 = vld [vmem:[%s488] sm:$0xff]
          %v490 = vld [vmem:[%s488 + $0x8] sm:$0xff]
          %v491 = vpack.c.bf16 %v490, %v489
          %v493 = vunpack.c.l.b16 %v491
          %v494 = vunpack.c.h.b16 %v491
          %v495 = vpack.c.b16 %v493, %v493
          %v496 = vpack.c.b16 %v494, %v494
          %vm497 = vcmask 1042432
          %vm498 = vcmask 1046532
          %vm499 = vmor %vm497, %vm498
          %v500 = vrot.slane %v495, 5
          %v501 = vrot.slane %v500, 4
          %v502 = vrot.slane %v496, 5
          %v503 = vsel %vm499, %v501, %v502
          %v504 = vrot.slane %v502, 4
          %vm508 = vcmask 519171
          %509 = vst.msk [vmem:[#allocation2 + $0x34] sm:$0x8] %vm508, %v500
          %510 = vst.msk [vmem:[#allocation2 + $0x38] sm:$0xf] %vm267, %v503
          %vm511 = vcmask 518144
          %512 = vst.msk [vmem:[#allocation2 + $0x3c] sm:$0x7] %vm511, %v504
        $region72: #{resblock_forward.1} parent=43 // pred_fallthru
          _
        %s513 = sadd.s32 %s266, 5
        %p514 = scmp.ge.s32.totalorder %s513, 0
        %p515 = scmp.lt.s32.totalorder %s513, 16
        %p516 = pnand %p514, %p515
        %p517 = pneg %p516
        // Predicated region
        $region73: #{resblock_forward.1} parent=43 // pred_check
          _
        $region74: #{resblock_forward.1} parent=43 // pred_check_branch
          %519 = sbr.rel (%p516) target = $region76
        $region75: #{resblock_forward.1} parent=43 // pred_region
          %s520 = smul.u32 %s513, 16
          %s521 = scalar_lea.vmem %s263, %s520
          %v522 = vld [vmem:[%s521] sm:$0xff]
          %v523 = vld [vmem:[%s521 + $0x8] sm:$0xff]
          %v524 = vpack.c.bf16 %v523, %v522
          %v526 = vunpack.c.l.b16 %v524
          %v527 = vunpack.c.h.b16 %v524
          %v528 = vpack.c.b16 %v526, %v526
          %v529 = vpack.c.b16 %v527, %v527
          %532 = vst.msk [vmem:[#allocation2 + $0x40] sm:$0xf] %vm267, %v528
          %533 = vst.msk [vmem:[#allocation2 + $0x44] sm:$0xf] %vm267, %v529
        $region76: #{resblock_forward.1} parent=43 // pred_fallthru
          _
        %s534 = sadd.s32 %s266, 6
        %p535 = scmp.ge.s32.totalorder %s534, 0
        %p536 = scmp.lt.s32.totalorder %s534, 16
        %p537 = pnand %p535, %p536
        %p538 = pneg %p537
        // Predicated region
        $region77: #{resblock_forward.1} parent=43 // pred_check
          _
        $region78: #{resblock_forward.1} parent=43 // pred_check_branch
          %540 = sbr.rel (%p537) target = $region80
        $region79: #{resblock_forward.1} parent=43 // pred_region
          %s541 = smul.u32 %s534, 16
          %s542 = scalar_lea.vmem %s263, %s541
          %v543 = vld [vmem:[%s542] sm:$0xff]
          %v544 = vld [vmem:[%s542 + $0x8] sm:$0xff]
          %v545 = vpack.c.bf16 %v544, %v543
          %v547 = vunpack.c.l.b16 %v545
          %v548 = vunpack.c.h.b16 %v545
          %v549 = vpack.c.b16 %v547, %v547
          %v550 = vpack.c.b16 %v548, %v548
          %vm551 = vcmask 1040384
          %vm552 = vcmask 1044484
          %vm553 = vmor %vm551, %vm552
          %v554 = vrot.slane %v549, 7
          %v555 = vrot.slane %v554, 4
          %v556 = vrot.slane %v550, 7
          %v557 = vsel %vm553, %v555, %v556
          %v558 = vrot.slane %v556, 4
          %vm562 = vcmask 519169
          %563 = vst.msk [vmem:[#allocation2 + $0x48] sm:$0xe] %vm562, %v554
          %564 = vst.msk [vmem:[#allocation2 + $0x4c] sm:$0xf] %vm267, %v557
          %565 = vst.msk [vmem:[#allocation2 + $0x50] sm:$0x1] %vm295, %v558
        $region80: #{resblock_forward.1} parent=43 // pred_fallthru
          _
        %s566 = sadd.s32 %s266, 7
        %p567 = scmp.ge.s32.totalorder %s566, 0
        %p568 = scmp.lt.s32.totalorder %s566, 16
        %p569 = pnand %p567, %p568
        %p570 = pneg %p569
        // Predicated region
        $region81: #{resblock_forward.1} parent=43 // pred_check
          _
        $region82: #{resblock_forward.1} parent=43 // pred_check_branch
          %572 = sbr.rel (%p569) target = $region84
        $region83: #{resblock_forward.1} parent=43 // pred_region
          %s573 = smul.u32 %s566, 16
          %s574 = scalar_lea.vmem %s263, %s573
          %v575 = vld [vmem:[%s574] sm:$0xff]
          %v576 = vld [vmem:[%s574 + $0x8] sm:$0xff]
          %v577 = vpack.c.bf16 %v576, %v575
          %v579 = vunpack.c.l.b16 %v577
          %v580 = vunpack.c.h.b16 %v577
          %v581 = vpack.c.b16 %v579, %v579
          %v582 = vpack.c.b16 %v580, %v580
          %vm583 = vcmask 1041408
          %vm584 = vcmask 1045508
          %vm585 = vmor %vm583, %vm584
          %v586 = vrot.slane %v581, 6
          %v587 = vrot.slane %v586, 4
          %v588 = vrot.slane %v582, 6
          %v589 = vsel %vm585, %v587, %v588
          %v590 = vrot.slane %v588, 4
          %vm594 = vcmask 519170
          %595 = vst.msk [vmem:[#allocation2 + $0x50] sm:$0xc] %vm594, %v586
          %596 = vst.msk [vmem:[#allocation2 + $0x54] sm:$0xf] %vm267, %v589
          %vm597 = vcmask 517120
          %598 = vst.msk [vmem:[#allocation2 + $0x58] sm:$0x3] %vm597, %v590
        $region84: #{resblock_forward.1} parent=43 // pred_fallthru
          _
        %s599 = sadd.s32 %s266, 8
        %p600 = scmp.ge.s32.totalorder %s599, 0
        %p601 = scmp.lt.s32.totalorder %s599, 16
        %p602 = pnand %p600, %p601
        %p603 = pneg %p602
        // Predicated region
        $region85: #{resblock_forward.1} parent=43 // pred_check
          _
        $region86: #{resblock_forward.1} parent=43 // pred_check_branch
          %605 = sbr.rel (%p602) target = $region88
        $region87: #{resblock_forward.1} parent=43 // pred_region
          %s606 = smul.u32 %s599, 16
          %s607 = scalar_lea.vmem %s263, %s606
          %v608 = vld [vmem:[%s607] sm:$0xff]
          %v609 = vld [vmem:[%s607 + $0x8] sm:$0xff]
          %v610 = vpack.c.bf16 %v609, %v608
          %v612 = vunpack.c.l.b16 %v610
          %v613 = vunpack.c.h.b16 %v610
          %v614 = vpack.c.b16 %v612, %v612
          %v615 = vpack.c.b16 %v613, %v613
          %vm616 = vcmask 1042432
          %vm617 = vcmask 1046532
          %vm618 = vmor %vm616, %vm617
          %v619 = vrot.slane %v614, 5
          %v620 = vrot.slane %v619, 4
          %v621 = vrot.slane %v615, 5
          %v622 = vsel %vm618, %v620, %v621
          %v623 = vrot.slane %v621, 4
          %vm627 = vcmask 519171
          %628 = vst.msk [vmem:[#allocation2 + $0x58] sm:$0x8] %vm627, %v619
          %629 = vst.msk [vmem:[#allocation2 + $0x5c] sm:$0xf] %vm267, %v622
          %vm630 = vcmask 518144
          %631 = vst.msk [vmem:[#allocation2 + $0x60] sm:$0x7] %vm630, %v623
        $region88: #{resblock_forward.1} parent=43 // pred_fallthru
          _
        %s632 = sadd.s32 %s266, 9
        %p633 = scmp.ge.s32.totalorder %s632, 0
        %p634 = scmp.lt.s32.totalorder %s632, 16
        %p635 = pnand %p633, %p634
        %p636 = pneg %p635
        // Predicated region
        $region89: #{resblock_forward.1} parent=43 // pred_check
          _
        $region90: #{resblock_forward.1} parent=43 // pred_check_branch
          %638 = sbr.rel (%p635) target = $region92
        $region91: #{resblock_forward.1} parent=43 // pred_region
          %s639 = smul.u32 %s632, 16
          %s640 = scalar_lea.vmem %s263, %s639
          %v641 = vld [vmem:[%s640] sm:$0xff]
          %v642 = vld [vmem:[%s640 + $0x8] sm:$0xff]
          %v643 = vpack.c.bf16 %v642, %v641
          %v645 = vunpack.c.l.b16 %v643
          %v646 = vunpack.c.h.b16 %v643
          %v647 = vpack.c.b16 %v645, %v645
          %v648 = vpack.c.b16 %v646, %v646
          %651 = vst.msk [vmem:[#allocation2 + $0x64] sm:$0xf] %vm267, %v647
          %652 = vst.msk [vmem:[#allocation2 + $0x68] sm:$0xf] %vm267, %v648
        $region92: #{resblock_forward.1} parent=43 // pred_fallthru
          _
        %v653 = vld [vmem:[#allocation2] sm:$0xf]
        %v654 = vld [vmem:[#allocation2 + $0x4] sm:$0xf]
        %v655 = vld [vmem:[#allocation2 + $0x8] sm:$0xf]
        %v656 = vld [vmem:[#allocation2 + $0xc] sm:$0xf]
        %v657 = vld [vmem:[#allocation2 + $0x10] sm:$0xf]
        %v658 = vld [vmem:[#allocation2 + $0x14] sm:$0xf]
        %v659 = vld [vmem:[#allocation2 + $0x18] sm:$0xf]
        %v660 = vld [vmem:[#allocation2 + $0x1c] sm:$0xf]
        %v661 = vld [vmem:[#allocation2 + $0x20] sm:$0xf]
        %v662 = vld [vmem:[#allocation2 + $0x24] sm:$0xf]
        %v663 = vld [vmem:[#allocation2 + $0x28] sm:$0xf]
        %v664 = vld [vmem:[#allocation2 + $0x2c] sm:$0xf]
        %v665 = vld [vmem:[#allocation2 + $0x30] sm:$0xf]
        %v666 = vld [vmem:[#allocation2 + $0x34] sm:$0xf]
        %v667 = vld [vmem:[#allocation2 + $0x38] sm:$0xf]
        %v668 = vld [vmem:[#allocation2 + $0x3c] sm:$0xf]
        %v669 = vld [vmem:[#allocation2 + $0x40] sm:$0xf]
        %v670 = vld [vmem:[#allocation2 + $0x44] sm:$0xf]
        %v671 = vld [vmem:[#allocation2 + $0x48] sm:$0xf]
        %v672 = vld [vmem:[#allocation2 + $0x4c] sm:$0xf]
        %v673 = vld [vmem:[#allocation2 + $0x50] sm:$0xf]
        %v674 = vld [vmem:[#allocation2 + $0x54] sm:$0xf]
        %v675 = vld [vmem:[#allocation2 + $0x58] sm:$0x3]
        %v676 = vld [vmem:[%s2] sm:$0xf]
        %v677 = vld [vmem:[%s2 + $0x4] sm:$0xf]
        %v678 = vld [vmem:[%s2 + $0x8] sm:$0xf]
        %v679 = vld [vmem:[%s2 + $0xc] sm:$0xf]
        %v680 = vld [vmem:[%s2 + $0x10] sm:$0xf]
        %v681 = vld [vmem:[%s2 + $0x14] sm:$0xf]
        %v682 = vld [vmem:[%s2 + $0x18] sm:$0xf]
        %v683 = vld [vmem:[%s2 + $0x1c] sm:$0xf]
        %v684 = vld [vmem:[#allocation2 + $0x58] sm:$0x7]
        %s685 = scalar_lea.vmem %s2, 32
        %v686 = vld [vmem:[%s685] sm:$0xf]
        %v687 = vld [vmem:[%s685 + $0x4] sm:$0xf]
        %v688 = vld [vmem:[%s685 + $0x8] sm:$0xf]
        %v689 = vld [vmem:[%s685 + $0xc] sm:$0xf]
        %v690 = vld [vmem:[%s685 + $0x10] sm:$0xf]
        %v691 = vld [vmem:[%s685 + $0x14] sm:$0xf]
        %v692 = vld [vmem:[%s685 + $0x18] sm:$0xf]
        %v693 = vld [vmem:[%s685 + $0x1c] sm:$0xf]
        %v717 = vunpack.c.l.b16 %v653
        %v718 = vunpack.c.l.b16 %v654
        %v719 = vunpack.c.l.b16 %v655
        %v720 = vunpack.c.l.b16 %v656
        %v721 = vunpack.c.l.b16 %v657
        %v722 = vunpack.c.l.b16 %v658
        %v723 = vunpack.c.l.b16 %v659
        %v724 = vunpack.c.l.b16 %v660
        %v725 = vunpack.c.l.b16 %v661
        %v726 = vunpack.c.l.b16 %v662
        %v727 = vunpack.c.l.b16 %v663
        %v728 = vunpack.c.l.b16 %v664
        %v729 = vunpack.c.l.b16 %v665
        %v730 = vunpack.c.l.b16 %v666
        %v731 = vunpack.c.l.b16 %v667
        %v732 = vunpack.c.l.b16 %v668
        %v733 = vunpack.c.l.b16 %v669
        %v734 = vunpack.c.l.b16 %v670
        %v735 = vunpack.c.l.b16 %v671
        %v736 = vunpack.c.l.b16 %v672
        %v737 = vunpack.c.l.b16 %v673
        %v738 = vunpack.c.l.b16 %v674
        %v739 = vunpack.c.l.b16 %v684
        %v740 = vpack.c.b16 %v718, %v717
        %v741 = vpack.c.b16 %v720, %v719
        %v742 = vpack.c.b16 %v722, %v721
        %v743 = vpack.c.b16 %v724, %v723
        %v744 = vpack.c.b16 %v726, %v725
        %v745 = vpack.c.b16 %v728, %v727
        %v746 = vpack.c.b16 %v730, %v729
        %v747 = vpack.c.b16 %v732, %v731
        %v748 = vpack.c.b16 %v734, %v733
        %v749 = vpack.c.b16 %v736, %v735
        %v750 = vpack.c.b16 %v738, %v737
        %v751 = vpack.c.b16 %v739, %v739
        %vm752 = vsmask.f32 7424
        %v754 = vshrl.u32 %v740, 16
        %v756 = vshll.u32 %v740, 16
        %v758 = vrot.slane %v756, 1
        %v759 = vor.u32 %v754, %v758
        %v761 = vshll.u32 %v741, 16
        %v763 = vrot.slane %v761, 1
        %v764 = vsel %vm752, %v759, %v763
        %v765 = vshrl.u32 %v741, 16
        %v767 = vor.u32 %v765, %v763
        %v769 = vshll.u32 %v742, 16
        %v771 = vrot.slane %v769, 1
        %v772 = vsel %vm752, %v767, %v771
        %v773 = vshrl.u32 %v742, 16
        %v775 = vor.u32 %v773, %v771
        %v777 = vshll.u32 %v743, 16
        %v779 = vrot.slane %v777, 1
        %v780 = vsel %vm752, %v775, %v779
        %v781 = vshrl.u32 %v743, 16
        %v783 = vor.u32 %v781, %v779
        %v785 = vshll.u32 %v744, 16
        %v787 = vrot.slane %v785, 1
        %v788 = vsel %vm752, %v783, %v787
        %v789 = vshrl.u32 %v744, 16
        %v791 = vor.u32 %v789, %v787
        %v793 = vshll.u32 %v745, 16
        %v795 = vrot.slane %v793, 1
        %v796 = vsel %vm752, %v791, %v795
        %v797 = vshrl.u32 %v745, 16
        %v799 = vor.u32 %v797, %v795
        %v801 = vshll.u32 %v746, 16
        %v803 = vrot.slane %v801, 1
        %v804 = vsel %vm752, %v799, %v803
        %v805 = vshrl.u32 %v746, 16
        %v807 = vor.u32 %v805, %v803
        %v809 = vshll.u32 %v747, 16
        %v811 = vrot.slane %v809, 1
        %v812 = vsel %vm752, %v807, %v811
        %v813 = vshrl.u32 %v747, 16
        %v815 = vor.u32 %v813, %v811
        %v817 = vshll.u32 %v748, 16
        %v819 = vrot.slane %v817, 1
        %v820 = vsel %vm752, %v815, %v819
        %v821 = vshrl.u32 %v748, 16
        %v823 = vor.u32 %v821, %v819
        %v825 = vshll.u32 %v749, 16
        %v827 = vrot.slane %v825, 1
        %v828 = vsel %vm752, %v823, %v827
        %v829 = vshrl.u32 %v749, 16
        %v831 = vor.u32 %v829, %v827
        %v833 = vshll.u32 %v750, 16
        %v835 = vrot.slane %v833, 1
        %v836 = vsel %vm752, %v831, %v835
        %v837 = vshrl.u32 %v750, 16
        %v839 = vor.u32 %v837, %v835
        %v841 = vshll.u32 %v751, 16
        %v843 = vrot.slane %v841, 1
        %v844 = vsel %vm752, %v839, %v843
        %v845 = vshrl.u32 %v751, 16
        %v847 = vor.u32 %v845, %v843
        %v856 = vunpack.c.l.b16 %v686
        %v857 = vunpack.c.l.b16 %v687
        %v858 = vunpack.c.l.b16 %v688
        %v859 = vunpack.c.l.b16 %v689
        %v860 = vunpack.c.l.b16 %v690
        %v861 = vunpack.c.l.b16 %v691
        %v862 = vunpack.c.l.b16 %v692
        %v863 = vunpack.c.l.b16 %v693
        %v864 = vpack.c.b16 %v857, %v856
        %v865 = vpack.c.b16 %v859, %v858
        %v866 = vpack.c.b16 %v861, %v860
        %v867 = vpack.c.b16 %v863, %v862
        %vm872 = vcmask 523264
        %v874 = vsel %vm872, %v764, 0
        %v877 = vsel %vm872, %v772, 0
        %v880 = vsel %vm872, %v780, 0
        %v883 = vsel %vm872, %v788, 0
        %v886 = vsel %vm872, %v796, 0
        %v889 = vsel %vm872, %v804, 0
        %v892 = vsel %vm872, %v812, 0
        %v895 = vsel %vm872, %v820, 0
        %v898 = vsel %vm872, %v828, 0
        %v901 = vsel %vm872, %v836, 0
        %v904 = vsel %vm872, %v844, 0
        %v907 = vsel %vm872, %v847, 0
        %909 = vmatprep.subr.bf16.mxu0 0
        %910 = vmatpush1.bf16.msra.mxu0 0
        %911 = vmatprep.subr.bf16.mxu0 0
        %912 = vmatpush1.bf16.msra.mxu0 0
        %913 = vmatprep.subr.bf16.mxu0 0
        %914 = vmatpush1.bf16.msra.mxu0 0
        %915 = vmatprep.subr.bf16.mxu0 0
        %916 = vmatpush1.bf16.msra.mxu0 0
        %917 = vmatprep.subr.bf16.mxu0 0
        %918 = vmatpush1.bf16.msra.mxu0 %v867
        %919 = vmatprep.subr.bf16.mxu0 0
        %920 = vmatpush1.bf16.msra.mxu0 %v866
        %921 = vmatprep.subr.bf16.mxu0 0
        %922 = vmatpush1.bf16.msra.mxu0 %v865
        %923 = vmatprep.subr.bf16.mxu0 0
        %924 = vmatpush1.bf16.msra.mxu0 %v864
        %925 = vmatprep.subr.bf16.mxu0 0
        %926 = vmatpush2.bf16.msra.mxu0 0
        %927 = vmatprep.subr.bf16.mxu0 0
        %928 = vmatpush2.bf16.msra.mxu0 0
        %929 = vmatprep.subr.bf16.mxu0 0
        %930 = vmatpush2.bf16.msra.mxu0 0
        %931 = vmatprep.subr.bf16.mxu0 0
        %932 = vmatpush2.bf16.msra.mxu0 0
        %933 = vmatprep.subr.bf16.mxu0 0
        %934 = vmatpush2.bf16.msra.mxu0 0
        %935 = vmatprep.subr.bf16.mxu0 0
        %936 = vmatpush2.bf16.msra.mxu0 0
        %937 = vmatprep.subr.bf16.mxu0 0
        %938 = vmatpush2.bf16.msra.mxu0 0
        %939 = vmatprep.subr.bf16.mxu0 0
        %940 = vmatpush2.bf16.msra.mxu0 0
        %941 = vmatprep.mubr.bf16.mxu0 0
        %942 = vmatmul.mubr.bf16.gmra.mxu0 %v874
        %v943 = vpop.f32.mrf.mxu0
        %v944 = vadd.f32 0.0, %v943
        %v945 = vpop.f32.mrf.mxu0
        %v946 = vpop.f32.mrf.mxu0
        %v947 = vadd.f32 0.0, %v946
        %v948 = vpop.f32.mrf.mxu0
        %949 = vmatprep.mubr.bf16.mxu0 0
        %950 = vmatmul.mubr.bf16.gmra.mxu0 %v877
        %v951 = vpop.f32.mrf.mxu0
        %v952 = vadd.f32 0.0, %v951
        %v953 = vpop.f32.mrf.mxu0
        %v954 = vpop.f32.mrf.mxu0
        %v955 = vadd.f32 0.0, %v954
        %v956 = vpop.f32.mrf.mxu0
        %957 = vmatprep.mubr.bf16.mxu0 0
        %958 = vmatmul.mubr.bf16.gmra.mxu0 %v880
        %v959 = vpop.f32.mrf.mxu0
        %v960 = vadd.f32 0.0, %v959
        %v961 = vpop.f32.mrf.mxu0
        %v962 = vpop.f32.mrf.mxu0
        %v963 = vadd.f32 0.0, %v962
        %v964 = vpop.f32.mrf.mxu0
        %965 = vmatprep.mubr.bf16.mxu0 0
        %966 = vmatmul.mubr.bf16.gmra.mxu0 %v883
        %v967 = vpop.f32.mrf.mxu0
        %v968 = vadd.f32 0.0, %v967
        %v969 = vpop.f32.mrf.mxu0
        %v970 = vpop.f32.mrf.mxu0
        %v971 = vadd.f32 0.0, %v970
        %v972 = vpop.f32.mrf.mxu0
        %973 = vmatprep.mubr.bf16.mxu0 0
        %974 = vmatmul.mubr.bf16.gmra.mxu0 %v886
        %v975 = vpop.f32.mrf.mxu0
        %v976 = vadd.f32 0.0, %v975
        %v977 = vpop.f32.mrf.mxu0
        %v978 = vpop.f32.mrf.mxu0
        %v979 = vadd.f32 0.0, %v978
        %v980 = vpop.f32.mrf.mxu0
        %981 = vmatprep.mubr.bf16.mxu0 0
        %982 = vmatmul.mubr.bf16.gmra.mxu0 %v889
        %v983 = vpop.f32.mrf.mxu0
        %v984 = vadd.f32 0.0, %v983
        %v985 = vpop.f32.mrf.mxu0
        %v986 = vpop.f32.mrf.mxu0
        %v987 = vadd.f32 0.0, %v986
        %v988 = vpop.f32.mrf.mxu0
        %989 = vmatprep.mubr.bf16.mxu0 0
        %990 = vmatmul.mubr.bf16.gmra.mxu0 %v892
        %v991 = vpop.f32.mrf.mxu0
        %v992 = vadd.f32 0.0, %v991
        %v993 = vpop.f32.mrf.mxu0
        %v994 = vpop.f32.mrf.mxu0
        %v995 = vadd.f32 0.0, %v994
        %v996 = vpop.f32.mrf.mxu0
        %997 = vmatprep.mubr.bf16.mxu0 0
        %998 = vmatmul.mubr.bf16.gmra.mxu0 %v895
        %v999 = vpop.f32.mrf.mxu0
        %v1000 = vadd.f32 0.0, %v999
        %v1001 = vpop.f32.mrf.mxu0
        %v1002 = vpop.f32.mrf.mxu0
        %v1003 = vadd.f32 0.0, %v1002
        %v1004 = vpop.f32.mrf.mxu0
        %1005 = vmatprep.mubr.bf16.mxu0 0
        %1006 = vmatmul.mubr.bf16.gmra.mxu0 %v898
        %v1007 = vpop.f32.mrf.mxu0
        %v1008 = vadd.f32 0.0, %v1007
        %v1009 = vpop.f32.mrf.mxu0
        %v1010 = vpop.f32.mrf.mxu0
        %v1011 = vadd.f32 0.0, %v1010
        %v1012 = vpop.f32.mrf.mxu0
        %1013 = vmatprep.mubr.bf16.mxu0 0
        %1014 = vmatmul.mubr.bf16.gmra.mxu0 %v901
        %v1015 = vpop.f32.mrf.mxu0
        %v1016 = vadd.f32 0.0, %v1015
        %v1017 = vpop.f32.mrf.mxu0
        %v1018 = vpop.f32.mrf.mxu0
        %v1019 = vadd.f32 0.0, %v1018
        %v1020 = vpop.f32.mrf.mxu0
        %1021 = vmatprep.mubr.bf16.mxu0 0
        %1022 = vmatmul.mubr.bf16.gmra.mxu0 %v904
        %v1023 = vpop.f32.mrf.mxu0
        %v1024 = vadd.f32 0.0, %v1023
        %v1025 = vpop.f32.mrf.mxu0
        %v1026 = vpop.f32.mrf.mxu0
        %v1027 = vadd.f32 0.0, %v1026
        %v1028 = vpop.f32.mrf.mxu0
        %1029 = vmatprep.mubr.bf16.mxu0 0
        %1030 = vmatmul.mubr.bf16.gmra.mxu0 %v907
        %v1031 = vpop.f32.mrf.mxu0
        %v1032 = vadd.f32 0.0, %v1031
        %v1033 = vpop.f32.mrf.mxu0
        %v1034 = vpop.f32.mrf.mxu0
        %v1035 = vpop.f32.mrf.mxu0
        %1036 = vdwg.mxu0
        %v1038 = vunpack.c.l.b16 %v675
        %v1039 = vpack.c.b16 %v1038, %v1038
        %v1048 = vunpack.c.l.b16 %v676
        %v1049 = vunpack.c.l.b16 %v677
        %v1050 = vunpack.c.l.b16 %v678
        %v1051 = vunpack.c.l.b16 %v679
        %v1052 = vunpack.c.l.b16 %v680
        %v1053 = vunpack.c.l.b16 %v681
        %v1054 = vunpack.c.l.b16 %v682
        %v1055 = vunpack.c.l.b16 %v683
        %v1056 = vpack.c.b16 %v1049, %v1048
        %v1057 = vpack.c.b16 %v1051, %v1050
        %v1058 = vpack.c.b16 %v1053, %v1052
        %v1059 = vpack.c.b16 %v1055, %v1054
        %v1064 = vsel %vm872, %v740, 0
        %v1066 = vsel %vm872, %v741, 0
        %v1068 = vsel %vm872, %v742, 0
        %v1070 = vsel %vm872, %v743, 0
        %v1072 = vsel %vm872, %v744, 0
        %v1074 = vsel %vm872, %v745, 0
        %v1076 = vsel %vm872, %v746, 0
        %v1078 = vsel %vm872, %v747, 0
        %v1080 = vsel %vm872, %v748, 0
        %v1082 = vsel %vm872, %v749, 0
        %v1084 = vsel %vm872, %v750, 0
        %v1087 = vsel %vm872, %v1039, 0
        %1089 = vmatprep.subr.bf16.mxu0 0
        %1090 = vmatpush1.bf16.msra.mxu0 0
        %1091 = vmatprep.subr.bf16.mxu0 0
        %1092 = vmatpush1.bf16.msra.mxu0 0
        %1093 = vmatprep.subr.bf16.mxu0 0
        %1094 = vmatpush1.bf16.msra.mxu0 0
        %1095 = vmatprep.subr.bf16.mxu0 0
        %1096 = vmatpush1.bf16.msra.mxu0 0
        %1097 = vmatprep.subr.bf16.mxu0 0
        %1098 = vmatpush1.bf16.msra.mxu0 %v1059
        %1099 = vmatprep.subr.bf16.mxu0 0
        %1100 = vmatpush1.bf16.msra.mxu0 %v1058
        %1101 = vmatprep.subr.bf16.mxu0 0
        %1102 = vmatpush1.bf16.msra.mxu0 %v1057
        %1103 = vmatprep.subr.bf16.mxu0 0
        %1104 = vmatpush1.bf16.msra.mxu0 %v1056
        %1105 = vmatprep.subr.bf16.mxu0 0
        %1106 = vmatpush2.bf16.msra.mxu0 0
        %1107 = vmatprep.subr.bf16.mxu0 0
        %1108 = vmatpush2.bf16.msra.mxu0 0
        %1109 = vmatprep.subr.bf16.mxu0 0
        %1110 = vmatpush2.bf16.msra.mxu0 0
        %1111 = vmatprep.subr.bf16.mxu0 0
        %1112 = vmatpush2.bf16.msra.mxu0 0
        %1113 = vmatprep.subr.bf16.mxu0 0
        %1114 = vmatpush2.bf16.msra.mxu0 0
        %1115 = vmatprep.subr.bf16.mxu0 0
        %1116 = vmatpush2.bf16.msra.mxu0 0
        %1117 = vmatprep.subr.bf16.mxu0 0
        %1118 = vmatpush2.bf16.msra.mxu0 0
        %1119 = vmatprep.subr.bf16.mxu0 0
        %1120 = vmatpush2.bf16.msra.mxu0 0
        %1121 = vmatprep.mubr.bf16.mxu0 0
        %1122 = vmatmul.mubr.bf16.gmra.mxu0 %v1064
        %v1123 = vpop.f32.mrf.mxu0
        %v1124 = vadd.f32 %v944, %v1123
        %v1125 = vpop.f32.mrf.mxu0
        %v1126 = vpop.f32.mrf.mxu0
        %v1127 = vadd.f32 %v947, %v1126
        %v1128 = vpop.f32.mrf.mxu0
        %1129 = vmatprep.mubr.bf16.mxu0 0
        %1130 = vmatmul.mubr.bf16.gmra.mxu0 %v1066
        %v1131 = vpop.f32.mrf.mxu0
        %v1132 = vadd.f32 %v952, %v1131
        %v1133 = vpop.f32.mrf.mxu0
        %v1134 = vpop.f32.mrf.mxu0
        %v1135 = vadd.f32 %v955, %v1134
        %v1136 = vpop.f32.mrf.mxu0
        %1137 = vmatprep.mubr.bf16.mxu0 0
        %1138 = vmatmul.mubr.bf16.gmra.mxu0 %v1068
        %v1139 = vpop.f32.mrf.mxu0
        %v1140 = vadd.f32 %v960, %v1139
        %v1141 = vpop.f32.mrf.mxu0
        %v1142 = vpop.f32.mrf.mxu0
        %v1143 = vadd.f32 %v963, %v1142
        %v1144 = vpop.f32.mrf.mxu0
        %1145 = vmatprep.mubr.bf16.mxu0 0
        %1146 = vmatmul.mubr.bf16.gmra.mxu0 %v1070
        %v1147 = vpop.f32.mrf.mxu0
        %v1148 = vadd.f32 %v968, %v1147
        %v1149 = vpop.f32.mrf.mxu0
        %v1150 = vpop.f32.mrf.mxu0
        %v1151 = vadd.f32 %v971, %v1150
        %v1152 = vpop.f32.mrf.mxu0
        %1153 = vmatprep.mubr.bf16.mxu0 0
        %1154 = vmatmul.mubr.bf16.gmra.mxu0 %v1072
        %v1155 = vpop.f32.mrf.mxu0
        %v1156 = vadd.f32 %v976, %v1155
        %v1157 = vpop.f32.mrf.mxu0
        %v1158 = vpop.f32.mrf.mxu0
        %v1159 = vadd.f32 %v979, %v1158
        %v1160 = vpop.f32.mrf.mxu0
        %1161 = vmatprep.mubr.bf16.mxu0 0
        %1162 = vmatmul.mubr.bf16.gmra.mxu0 %v1074
        %v1163 = vpop.f32.mrf.mxu0
        %v1164 = vadd.f32 %v984, %v1163
        %v1165 = vpop.f32.mrf.mxu0
        %v1166 = vpop.f32.mrf.mxu0
        %v1167 = vadd.f32 %v987, %v1166
        %v1168 = vpop.f32.mrf.mxu0
        %1169 = vmatprep.mubr.bf16.mxu0 0
        %1170 = vmatmul.mubr.bf16.gmra.mxu0 %v1076
        %v1171 = vpop.f32.mrf.mxu0
        %v1172 = vadd.f32 %v992, %v1171
        %v1173 = vpop.f32.mrf.mxu0
        %v1174 = vpop.f32.mrf.mxu0
        %v1175 = vadd.f32 %v995, %v1174
        %v1176 = vpop.f32.mrf.mxu0
        %1177 = vmatprep.mubr.bf16.mxu0 0
        %1178 = vmatmul.mubr.bf16.gmra.mxu0 %v1078
        %v1179 = vpop.f32.mrf.mxu0
        %v1180 = vadd.f32 %v1000, %v1179
        %v1181 = vpop.f32.mrf.mxu0
        %v1182 = vpop.f32.mrf.mxu0
        %v1183 = vadd.f32 %v1003, %v1182
        %v1184 = vpop.f32.mrf.mxu0
        %1185 = vmatprep.mubr.bf16.mxu0 0
        %1186 = vmatmul.mubr.bf16.gmra.mxu0 %v1080
        %v1187 = vpop.f32.mrf.mxu0
        %v1188 = vadd.f32 %v1008, %v1187
        %v1189 = vpop.f32.mrf.mxu0
        %v1190 = vpop.f32.mrf.mxu0
        %v1191 = vadd.f32 %v1011, %v1190
        %v1192 = vpop.f32.mrf.mxu0
        %1193 = vmatprep.mubr.bf16.mxu0 0
        %1194 = vmatmul.mubr.bf16.gmra.mxu0 %v1082
        %v1195 = vpop.f32.mrf.mxu0
        %v1196 = vadd.f32 %v1016, %v1195
        %v1197 = vpop.f32.mrf.mxu0
        %v1198 = vpop.f32.mrf.mxu0
        %v1199 = vadd.f32 %v1019, %v1198
        %v1200 = vpop.f32.mrf.mxu0
        %1201 = vmatprep.mubr.bf16.mxu0 0
        %1202 = vmatmul.mubr.bf16.gmra.mxu0 %v1084
        %v1203 = vpop.f32.mrf.mxu0
        %v1204 = vadd.f32 %v1024, %v1203
        %v1205 = vpop.f32.mrf.mxu0
        %v1206 = vpop.f32.mrf.mxu0
        %v1207 = vadd.f32 %v1027, %v1206
        %v1208 = vpop.f32.mrf.mxu0
        %1209 = vmatprep.mubr.bf16.mxu0 0
        %1210 = vmatmul.mubr.bf16.gmra.mxu0 %v1087
        %v1211 = vpop.f32.mrf.mxu0
        %v1212 = vadd.f32 %v1032, %v1211
        %v1213 = vpop.f32.mrf.mxu0
        %v1214 = vpop.f32.mrf.mxu0
        %v1215 = vpop.f32.mrf.mxu0
        %1216 = vdwg.mxu0
        %v1217 = vld [vmem:[#allocation2] sm:$0xe]
        %s1218 = scalar_lea.vmem %s2, 64
        %v1219 = vld [vmem:[%s1218] sm:$0xf]
        %v1220 = vld [vmem:[%s1218 + $0x4] sm:$0xf]
        %v1221 = vld [vmem:[%s1218 + $0x8] sm:$0xf]
        %v1222 = vld [vmem:[%s1218 + $0xc] sm:$0xf]
        %v1223 = vld [vmem:[%s1218 + $0x10] sm:$0xf]
        %v1224 = vld [vmem:[%s1218 + $0x14] sm:$0xf]
        %v1225 = vld [vmem:[%s1218 + $0x18] sm:$0xf]
        %v1226 = vld [vmem:[%s1218 + $0x1c] sm:$0xf]
        %v1228 = vunpack.c.l.b16 %v1217
        %v1229 = vpack.c.b16 %v718, %v1228
        %vm1230 = vcmask 1046528
        %v1231 = vrot.slane %v1229, 1
        %v1232 = vrot.slane %v741, 1
        %v1233 = vsel %vm1230, %v1231, %v1232
        %v1234 = vrot.slane %v742, 1
        %v1235 = vsel %vm1230, %v1232, %v1234
        %v1236 = vrot.slane %v743, 1
        %v1237 = vsel %vm1230, %v1234, %v1236
        %v1238 = vrot.slane %v744, 1
        %v1239 = vsel %vm1230, %v1236, %v1238
        %v1240 = vrot.slane %v745, 1
        %v1241 = vsel %vm1230, %v1238, %v1240
        %v1242 = vrot.slane %v746, 1
        %v1243 = vsel %vm1230, %v1240, %v1242
        %v1244 = vrot.slane %v747, 1
        %v1245 = vsel %vm1230, %v1242, %v1244
        %v1246 = vrot.slane %v748, 1
        %v1247 = vsel %vm1230, %v1244, %v1246
        %v1248 = vrot.slane %v749, 1
        %v1249 = vsel %vm1230, %v1246, %v1248
        %v1250 = vrot.slane %v750, 1
        %v1251 = vsel %vm1230, %v1248, %v1250
        %v1252 = vrot.slane %v751, 1
        %v1253 = vsel %vm1230, %v1250, %v1252
        %v1262 = vunpack.c.l.b16 %v1219
        %v1263 = vunpack.c.l.b16 %v1220
        %v1264 = vunpack.c.l.b16 %v1221
        %v1265 = vunpack.c.l.b16 %v1222
        %v1266 = vunpack.c.l.b16 %v1223
        %v1267 = vunpack.c.l.b16 %v1224
        %v1268 = vunpack.c.l.b16 %v1225
        %v1269 = vunpack.c.l.b16 %v1226
        %v1270 = vpack.c.b16 %v1263, %v1262
        %v1271 = vpack.c.b16 %v1265, %v1264
        %v1272 = vpack.c.b16 %v1267, %v1266
        %v1273 = vpack.c.b16 %v1269, %v1268
        %v1279 = vsel %vm872, %v1233, 0
        %v1282 = vsel %vm872, %v1235, 0
        %v1285 = vsel %vm872, %v1237, 0
        %v1288 = vsel %vm872, %v1239, 0
        %v1291 = vsel %vm872, %v1241, 0
        %v1294 = vsel %vm872, %v1243, 0
        %v1297 = vsel %vm872, %v1245, 0
        %v1300 = vsel %vm872, %v1247, 0
        %v1303 = vsel %vm872, %v1249, 0
        %v1306 = vsel %vm872, %v1251, 0
        %v1309 = vsel %vm872, %v1253, 0
        %v1312 = vsel %vm872, %v1252, 0
        %1314 = vmatprep.subr.bf16.mxu0 0
        %1315 = vmatpush1.bf16.msra.mxu0 0
        %1316 = vmatprep.subr.bf16.mxu0 0
        %1317 = vmatpush1.bf16.msra.mxu0 0
        %1318 = vmatprep.subr.bf16.mxu0 0
        %1319 = vmatpush1.bf16.msra.mxu0 0
        %1320 = vmatprep.subr.bf16.mxu0 0
        %1321 = vmatpush1.bf16.msra.mxu0 0
        %1322 = vmatprep.subr.bf16.mxu0 0
        %1323 = vmatpush1.bf16.msra.mxu0 %v1273
        %1324 = vmatprep.subr.bf16.mxu0 0
        %1325 = vmatpush1.bf16.msra.mxu0 %v1272
        %1326 = vmatprep.subr.bf16.mxu0 0
        %1327 = vmatpush1.bf16.msra.mxu0 %v1271
        %1328 = vmatprep.subr.bf16.mxu0 0
        %1329 = vmatpush1.bf16.msra.mxu0 %v1270
        %1330 = vmatprep.subr.bf16.mxu0 0
        %1331 = vmatpush2.bf16.msra.mxu0 0
        %1332 = vmatprep.subr.bf16.mxu0 0
        %1333 = vmatpush2.bf16.msra.mxu0 0
        %1334 = vmatprep.subr.bf16.mxu0 0
        %1335 = vmatpush2.bf16.msra.mxu0 0
        %1336 = vmatprep.subr.bf16.mxu0 0
        %1337 = vmatpush2.bf16.msra.mxu0 0
        %1338 = vmatprep.subr.bf16.mxu0 0
        %1339 = vmatpush2.bf16.msra.mxu0 0
        %1340 = vmatprep.subr.bf16.mxu0 0
        %1341 = vmatpush2.bf16.msra.mxu0 0
        %1342 = vmatprep.subr.bf16.mxu0 0
        %1343 = vmatpush2.bf16.msra.mxu0 0
        %1344 = vmatprep.subr.bf16.mxu0 0
        %1345 = vmatpush2.bf16.msra.mxu0 0
        %1346 = vmatprep.mubr.bf16.mxu0 0
        %1347 = vmatmul.mubr.bf16.gmra.mxu0 %v1279
        %v1348 = vpop.f32.mrf.mxu0
        %v1349 = vadd.f32 0.0, %v1348
        %v1350 = vpop.f32.mrf.mxu0
        %v1351 = vpop.f32.mrf.mxu0
        %v1352 = vadd.f32 0.0, %v1351
        %v1353 = vpop.f32.mrf.mxu0
        %1354 = vmatprep.mubr.bf16.mxu0 0
        %1355 = vmatmul.mubr.bf16.gmra.mxu0 %v1282
        %v1356 = vpop.f32.mrf.mxu0
        %v1357 = vadd.f32 0.0, %v1356
        %v1358 = vpop.f32.mrf.mxu0
        %v1359 = vpop.f32.mrf.mxu0
        %v1360 = vadd.f32 0.0, %v1359
        %v1361 = vpop.f32.mrf.mxu0
        %1362 = vmatprep.mubr.bf16.mxu0 0
        %1363 = vmatmul.mubr.bf16.gmra.mxu0 %v1285
        %v1364 = vpop.f32.mrf.mxu0
        %v1365 = vadd.f32 0.0, %v1364
        %v1366 = vpop.f32.mrf.mxu0
        %v1367 = vpop.f32.mrf.mxu0
        %v1368 = vadd.f32 0.0, %v1367
        %v1369 = vpop.f32.mrf.mxu0
        %1370 = vmatprep.mubr.bf16.mxu0 0
        %1371 = vmatmul.mubr.bf16.gmra.mxu0 %v1288
        %v1372 = vpop.f32.mrf.mxu0
        %v1373 = vadd.f32 0.0, %v1372
        %v1374 = vpop.f32.mrf.mxu0
        %v1375 = vpop.f32.mrf.mxu0
        %v1376 = vadd.f32 0.0, %v1375
        %v1377 = vpop.f32.mrf.mxu0
        %1378 = vmatprep.mubr.bf16.mxu0 0
        %1379 = vmatmul.mubr.bf16.gmra.mxu0 %v1291
        %v1380 = vpop.f32.mrf.mxu0
        %v1381 = vadd.f32 0.0, %v1380
        %v1382 = vpop.f32.mrf.mxu0
        %v1383 = vpop.f32.mrf.mxu0
        %v1384 = vadd.f32 0.0, %v1383
        %v1385 = vpop.f32.mrf.mxu0
        %1386 = vmatprep.mubr.bf16.mxu0 0
        %1387 = vmatmul.mubr.bf16.gmra.mxu0 %v1294
        %v1388 = vpop.f32.mrf.mxu0
        %v1389 = vadd.f32 0.0, %v1388
        %v1390 = vpop.f32.mrf.mxu0
        %v1391 = vpop.f32.mrf.mxu0
        %v1392 = vadd.f32 0.0, %v1391
        %v1393 = vpop.f32.mrf.mxu0
        %1394 = vmatprep.mubr.bf16.mxu0 0
        %1395 = vmatmul.mubr.bf16.gmra.mxu0 %v1297
        %v1396 = vpop.f32.mrf.mxu0
        %v1397 = vadd.f32 0.0, %v1396
        %v1398 = vpop.f32.mrf.mxu0
        %v1399 = vpop.f32.mrf.mxu0
        %v1400 = vadd.f32 0.0, %v1399
        %v1401 = vpop.f32.mrf.mxu0
        %1402 = vmatprep.mubr.bf16.mxu0 0
        %1403 = vmatmul.mubr.bf16.gmra.mxu0 %v1300
        %v1404 = vpop.f32.mrf.mxu0
        %v1405 = vadd.f32 0.0, %v1404
        %v1406 = vpop.f32.mrf.mxu0
        %v1407 = vpop.f32.mrf.mxu0
        %v1408 = vadd.f32 0.0, %v1407
        %v1409 = vpop.f32.mrf.mxu0
        %1410 = vmatprep.mubr.bf16.mxu0 0
        %1411 = vmatmul.mubr.bf16.gmra.mxu0 %v1303
        %v1412 = vpop.f32.mrf.mxu0
        %v1413 = vadd.f32 0.0, %v1412
        %v1414 = vpop.f32.mrf.mxu0
        %v1415 = vpop.f32.mrf.mxu0
        %v1416 = vadd.f32 0.0, %v1415
        %v1417 = vpop.f32.mrf.mxu0
        %1418 = vmatprep.mubr.bf16.mxu0 0
        %1419 = vmatmul.mubr.bf16.gmra.mxu0 %v1306
        %v1420 = vpop.f32.mrf.mxu0
        %v1421 = vadd.f32 0.0, %v1420
        %v1422 = vpop.f32.mrf.mxu0
        %v1423 = vpop.f32.mrf.mxu0
        %v1424 = vadd.f32 0.0, %v1423
        %v1425 = vpop.f32.mrf.mxu0
        %1426 = vmatprep.mubr.bf16.mxu0 0
        %1427 = vmatmul.mubr.bf16.gmra.mxu0 %v1309
        %v1428 = vpop.f32.mrf.mxu0
        %v1429 = vadd.f32 0.0, %v1428
        %v1430 = vpop.f32.mrf.mxu0
        %v1431 = vpop.f32.mrf.mxu0
        %v1432 = vadd.f32 0.0, %v1431
        %v1433 = vpop.f32.mrf.mxu0
        %1434 = vmatprep.mubr.bf16.mxu0 0
        %1435 = vmatmul.mubr.bf16.gmra.mxu0 %v1312
        %v1436 = vpop.f32.mrf.mxu0
        %v1437 = vadd.f32 0.0, %v1436
        %v1438 = vpop.f32.mrf.mxu0
        %v1439 = vpop.f32.mrf.mxu0
        %v1440 = vpop.f32.mrf.mxu0
        %1441 = vdwg.mxu0
        %v1442 = vadd.f32 %v1124, %v1349
        %v1443 = vadd.f32 %v1127, %v1352
        %v1444 = vadd.f32 %v1132, %v1357
        %v1445 = vadd.f32 %v1135, %v1360
        %v1446 = vadd.f32 %v1140, %v1365
        %v1447 = vadd.f32 %v1143, %v1368
        %v1448 = vadd.f32 %v1148, %v1373
        %v1449 = vadd.f32 %v1151, %v1376
        %v1450 = vadd.f32 %v1156, %v1381
        %v1451 = vadd.f32 %v1159, %v1384
        %v1452 = vadd.f32 %v1164, %v1389
        %v1453 = vadd.f32 %v1167, %v1392
        %v1454 = vadd.f32 %v1172, %v1397
        %v1455 = vadd.f32 %v1175, %v1400
        %v1456 = vadd.f32 %v1180, %v1405
        %v1457 = vadd.f32 %v1183, %v1408
        %v1458 = vadd.f32 %v1188, %v1413
        %v1459 = vadd.f32 %v1191, %v1416
        %v1460 = vadd.f32 %v1196, %v1421
        %v1461 = vadd.f32 %v1199, %v1424
        %v1462 = vadd.f32 %v1204, %v1429
        %v1463 = vadd.f32 %v1207, %v1432
        %v1464 = vadd.f32 %v1212, %v1437
        %v1465 = vld [vmem:[#allocation2 + $0x8] sm:$0xe]
        %v1466 = vld [vmem:[#allocation2 + $0xc] sm:$0xf]
        %v1467 = vld [vmem:[#allocation2 + $0x10] sm:$0xf]
        %v1468 = vld [vmem:[#allocation2 + $0x14] sm:$0xf]
        %v1469 = vld [vmem:[#allocation2 + $0x18] sm:$0xf]
        %v1470 = vld [vmem:[#allocation2 + $0x1c] sm:$0xf]
        %v1471 = vld [vmem:[#allocation2 + $0x20] sm:$0xf]
        %v1472 = vld [vmem:[#allocation2 + $0x24] sm:$0xf]
        %v1473 = vld [vmem:[#allocation2 + $0x28] sm:$0xf]
        %v1474 = vld [vmem:[#allocation2 + $0x2c] sm:$0xf]
        %v1475 = vld [vmem:[#allocation2 + $0x30] sm:$0xf]
        %v1476 = vld [vmem:[#allocation2 + $0x34] sm:$0xf]
        %v1477 = vld [vmem:[#allocation2 + $0x38] sm:$0xf]
        %v1478 = vld [vmem:[#allocation2 + $0x3c] sm:$0xf]
        %v1479 = vld [vmem:[#allocation2 + $0x40] sm:$0xf]
        %v1480 = vld [vmem:[#allocation2 + $0x44] sm:$0xf]
        %v1481 = vld [vmem:[#allocation2 + $0x48] sm:$0xf]
        %v1482 = vld [vmem:[#allocation2 + $0x4c] sm:$0xf]
        %v1483 = vld [vmem:[#allocation2 + $0x50] sm:$0xf]
        %v1484 = vld [vmem:[#allocation2 + $0x54] sm:$0xf]
        %v1485 = vld [vmem:[#allocation2 + $0x58] sm:$0xf]
        %v1486 = vld [vmem:[#allocation2 + $0x5c] sm:$0xf]
        %v1487 = vld [vmem:[#allocation2 + $0x60] sm:$0x7]
        %s1488 = scalar_lea.vmem %s2, 96
        %v1489 = vld [vmem:[%s1488] sm:$0xf]
        %v1490 = vld [vmem:[%s1488 + $0x4] sm:$0xf]
        %v1491 = vld [vmem:[%s1488 + $0x8] sm:$0xf]
        %v1492 = vld [vmem:[%s1488 + $0xc] sm:$0xf]
        %v1493 = vld [vmem:[%s1488 + $0x10] sm:$0xf]
        %v1494 = vld [vmem:[%s1488 + $0x14] sm:$0xf]
        %v1495 = vld [vmem:[%s1488 + $0x18] sm:$0xf]
        %v1496 = vld [vmem:[%s1488 + $0x1c] sm:$0xf]
        %v1520 = vunpack.c.l.b16 %v1465
        %v1521 = vunpack.c.l.b16 %v1466
        %v1522 = vunpack.c.l.b16 %v1467
        %v1523 = vunpack.c.l.b16 %v1468
        %v1524 = vunpack.c.l.b16 %v1469
        %v1525 = vunpack.c.l.b16 %v1470
        %v1526 = vunpack.c.l.b16 %v1471
        %v1527 = vunpack.c.l.b16 %v1472
        %v1528 = vunpack.c.l.b16 %v1473
        %v1529 = vunpack.c.l.b16 %v1474
        %v1530 = vunpack.c.l.b16 %v1475
        %v1531 = vunpack.c.l.b16 %v1476
        %v1532 = vunpack.c.l.b16 %v1477
        %v1533 = vunpack.c.l.b16 %v1478
        %v1534 = vunpack.c.l.b16 %v1479
        %v1535 = vunpack.c.l.b16 %v1480
        %v1536 = vunpack.c.l.b16 %v1481
        %v1537 = vunpack.c.l.b16 %v1482
        %v1538 = vunpack.c.l.b16 %v1483
        %v1539 = vunpack.c.l.b16 %v1484
        %v1540 = vunpack.c.l.b16 %v1485
        %v1541 = vunpack.c.l.b16 %v1486
        %v1542 = vunpack.c.l.b16 %v1487
        %v1543 = vpack.c.b16 %v1521, %v1520
        %v1544 = vpack.c.b16 %v1523, %v1522
        %v1545 = vpack.c.b16 %v1525, %v1524
        %v1546 = vpack.c.b16 %v1527, %v1526
        %v1547 = vpack.c.b16 %v1529, %v1528
        %v1548 = vpack.c.b16 %v1531, %v1530
        %v1549 = vpack.c.b16 %v1533, %v1532
        %v1550 = vpack.c.b16 %v1535, %v1534
        %v1551 = vpack.c.b16 %v1537, %v1536
        %v1552 = vpack.c.b16 %v1539, %v1538
        %v1553 = vpack.c.b16 %v1541, %v1540
        %v1554 = vpack.c.b16 %v1542, %v1542
        %v1555 = vrot.slane %v1543, 1
        %v1556 = vrot.slane %v1544, 1
        %v1557 = vsel %vm1230, %v1555, %v1556
        %v1558 = vrot.slane %v1545, 1
        %v1559 = vsel %vm1230, %v1556, %v1558
        %v1560 = vrot.slane %v1546, 1
        %v1561 = vsel %vm1230, %v1558, %v1560
        %v1562 = vrot.slane %v1547, 1
        %v1563 = vsel %vm1230, %v1560, %v1562
        %v1564 = vrot.slane %v1548, 1
        %v1565 = vsel %vm1230, %v1562, %v1564
        %v1566 = vrot.slane %v1549, 1
        %v1567 = vsel %vm1230, %v1564, %v1566
        %v1568 = vrot.slane %v1550, 1
        %v1569 = vsel %vm1230, %v1566, %v1568
        %v1570 = vrot.slane %v1551, 1
        %v1571 = vsel %vm1230, %v1568, %v1570
        %v1572 = vrot.slane %v1552, 1
        %v1573 = vsel %vm1230, %v1570, %v1572
        %v1574 = vrot.slane %v1553, 1
        %v1575 = vsel %vm1230, %v1572, %v1574
        %v1576 = vrot.slane %v1554, 1
        %v1577 = vsel %vm1230, %v1574, %v1576
        %v1586 = vunpack.c.l.b16 %v1489
        %v1587 = vunpack.c.l.b16 %v1490
        %v1588 = vunpack.c.l.b16 %v1491
        %v1589 = vunpack.c.l.b16 %v1492
        %v1590 = vunpack.c.l.b16 %v1493
        %v1591 = vunpack.c.l.b16 %v1494
        %v1592 = vunpack.c.l.b16 %v1495
        %v1593 = vunpack.c.l.b16 %v1496
        %v1594 = vpack.c.b16 %v1587, %v1586
        %v1595 = vpack.c.b16 %v1589, %v1588
        %v1596 = vpack.c.b16 %v1591, %v1590
        %v1597 = vpack.c.b16 %v1593, %v1592
        %v1603 = vsel %vm872, %v1557, 0
        %v1606 = vsel %vm872, %v1559, 0
        %v1609 = vsel %vm872, %v1561, 0
        %v1612 = vsel %vm872, %v1563, 0
        %v1615 = vsel %vm872, %v1565, 0
        %v1618 = vsel %vm872, %v1567, 0
        %v1621 = vsel %vm872, %v1569, 0
        %v1624 = vsel %vm872, %v1571, 0
        %v1627 = vsel %vm872, %v1573, 0
        %v1630 = vsel %vm872, %v1575, 0
        %v1633 = vsel %vm872, %v1577, 0
        %v1636 = vsel %vm872, %v1576, 0
        %1638 = vmatprep.subr.bf16.mxu0 0
        %1639 = vmatpush1.bf16.msra.mxu0 0
        %1640 = vmatprep.subr.bf16.mxu0 0
        %1641 = vmatpush1.bf16.msra.mxu0 0
        %1642 = vmatprep.subr.bf16.mxu0 0
        %1643 = vmatpush1.bf16.msra.mxu0 0
        %1644 = vmatprep.subr.bf16.mxu0 0
        %1645 = vmatpush1.bf16.msra.mxu0 0
        %1646 = vmatprep.subr.bf16.mxu0 0
        %1647 = vmatpush1.bf16.msra.mxu0 %v1597
        %1648 = vmatprep.subr.bf16.mxu0 0
        %1649 = vmatpush1.bf16.msra.mxu0 %v1596
        %1650 = vmatprep.subr.bf16.mxu0 0
        %1651 = vmatpush1.bf16.msra.mxu0 %v1595
        %1652 = vmatprep.subr.bf16.mxu0 0
        %1653 = vmatpush1.bf16.msra.mxu0 %v1594
        %1654 = vmatprep.subr.bf16.mxu0 0
        %1655 = vmatpush2.bf16.msra.mxu0 0
        %1656 = vmatprep.subr.bf16.mxu0 0
        %1657 = vmatpush2.bf16.msra.mxu0 0
        %1658 = vmatprep.subr.bf16.mxu0 0
        %1659 = vmatpush2.bf16.msra.mxu0 0
        %1660 = vmatprep.subr.bf16.mxu0 0
        %1661 = vmatpush2.bf16.msra.mxu0 0
        %1662 = vmatprep.subr.bf16.mxu0 0
        %1663 = vmatpush2.bf16.msra.mxu0 0
        %1664 = vmatprep.subr.bf16.mxu0 0
        %1665 = vmatpush2.bf16.msra.mxu0 0
        %1666 = vmatprep.subr.bf16.mxu0 0
        %1667 = vmatpush2.bf16.msra.mxu0 0
        %1668 = vmatprep.subr.bf16.mxu0 0
        %1669 = vmatpush2.bf16.msra.mxu0 0
        %1670 = vmatprep.mubr.bf16.mxu0 0
        %1671 = vmatmul.mubr.bf16.gmra.mxu0 %v1603
        %v1672 = vpop.f32.mrf.mxu0
        %v1673 = vadd.f32 0.0, %v1672
        %v1674 = vpop.f32.mrf.mxu0
        %v1675 = vpop.f32.mrf.mxu0
        %v1676 = vadd.f32 0.0, %v1675
        %v1677 = vpop.f32.mrf.mxu0
        %1678 = vmatprep.mubr.bf16.mxu0 0
        %1679 = vmatmul.mubr.bf16.gmra.mxu0 %v1606
        %v1680 = vpop.f32.mrf.mxu0
        %v1681 = vadd.f32 0.0, %v1680
        %v1682 = vpop.f32.mrf.mxu0
        %v1683 = vpop.f32.mrf.mxu0
        %v1684 = vadd.f32 0.0, %v1683
        %v1685 = vpop.f32.mrf.mxu0
        %1686 = vmatprep.mubr.bf16.mxu0 0
        %1687 = vmatmul.mubr.bf16.gmra.mxu0 %v1609
        %v1688 = vpop.f32.mrf.mxu0
        %v1689 = vadd.f32 0.0, %v1688
        %v1690 = vpop.f32.mrf.mxu0
        %v1691 = vpop.f32.mrf.mxu0
        %v1692 = vadd.f32 0.0, %v1691
        %v1693 = vpop.f32.mrf.mxu0
        %1694 = vmatprep.mubr.bf16.mxu0 0
        %1695 = vmatmul.mubr.bf16.gmra.mxu0 %v1612
        %v1696 = vpop.f32.mrf.mxu0
        %v1697 = vadd.f32 0.0, %v1696
        %v1698 = vpop.f32.mrf.mxu0
        %v1699 = vpop.f32.mrf.mxu0
        %v1700 = vadd.f32 0.0, %v1699
        %v1701 = vpop.f32.mrf.mxu0
        %1702 = vmatprep.mubr.bf16.mxu0 0
        %1703 = vmatmul.mubr.bf16.gmra.mxu0 %v1615
        %v1704 = vpop.f32.mrf.mxu0
        %v1705 = vadd.f32 0.0, %v1704
        %v1706 = vpop.f32.mrf.mxu0
        %v1707 = vpop.f32.mrf.mxu0
        %v1708 = vadd.f32 0.0, %v1707
        %v1709 = vpop.f32.mrf.mxu0
        %1710 = vmatprep.mubr.bf16.mxu0 0
        %1711 = vmatmul.mubr.bf16.gmra.mxu0 %v1618
        %v1712 = vpop.f32.mrf.mxu0
        %v1713 = vadd.f32 0.0, %v1712
        %v1714 = vpop.f32.mrf.mxu0
        %v1715 = vpop.f32.mrf.mxu0
        %v1716 = vadd.f32 0.0, %v1715
        %v1717 = vpop.f32.mrf.mxu0
        %1718 = vmatprep.mubr.bf16.mxu0 0
        %1719 = vmatmul.mubr.bf16.gmra.mxu0 %v1621
        %v1720 = vpop.f32.mrf.mxu0
        %v1721 = vadd.f32 0.0, %v1720
        %v1722 = vpop.f32.mrf.mxu0
        %v1723 = vpop.f32.mrf.mxu0
        %v1724 = vadd.f32 0.0, %v1723
        %v1725 = vpop.f32.mrf.mxu0
        %1726 = vmatprep.mubr.bf16.mxu0 0
        %1727 = vmatmul.mubr.bf16.gmra.mxu0 %v1624
        %v1728 = vpop.f32.mrf.mxu0
        %v1729 = vadd.f32 0.0, %v1728
        %v1730 = vpop.f32.mrf.mxu0
        %v1731 = vpop.f32.mrf.mxu0
        %v1732 = vadd.f32 0.0, %v1731
        %v1733 = vpop.f32.mrf.mxu0
        %1734 = vmatprep.mubr.bf16.mxu0 0
        %1735 = vmatmul.mubr.bf16.gmra.mxu0 %v1627
        %v1736 = vpop.f32.mrf.mxu0
        %v1737 = vadd.f32 0.0, %v1736
        %v1738 = vpop.f32.mrf.mxu0
        %v1739 = vpop.f32.mrf.mxu0
        %v1740 = vadd.f32 0.0, %v1739
        %v1741 = vpop.f32.mrf.mxu0
        %1742 = vmatprep.mubr.bf16.mxu0 0
        %1743 = vmatmul.mubr.bf16.gmra.mxu0 %v1630
        %v1744 = vpop.f32.mrf.mxu0
        %v1745 = vadd.f32 0.0, %v1744
        %v1746 = vpop.f32.mrf.mxu0
        %v1747 = vpop.f32.mrf.mxu0
        %v1748 = vadd.f32 0.0, %v1747
        %v1749 = vpop.f32.mrf.mxu0
        %1750 = vmatprep.mubr.bf16.mxu0 0
        %1751 = vmatmul.mubr.bf16.gmra.mxu0 %v1633
        %v1752 = vpop.f32.mrf.mxu0
        %v1753 = vadd.f32 0.0, %v1752
        %v1754 = vpop.f32.mrf.mxu0
        %v1755 = vpop.f32.mrf.mxu0
        %v1756 = vadd.f32 0.0, %v1755
        %v1757 = vpop.f32.mrf.mxu0
        %1758 = vmatprep.mubr.bf16.mxu0 0
        %1759 = vmatmul.mubr.bf16.gmra.mxu0 %v1636
        %v1760 = vpop.f32.mrf.mxu0
        %v1761 = vadd.f32 0.0, %v1760
        %v1762 = vpop.f32.mrf.mxu0
        %v1763 = vpop.f32.mrf.mxu0
        %v1764 = vpop.f32.mrf.mxu0
        %1765 = vdwg.mxu0
        %v1766 = vadd.f32 %v1442, %v1673
        %v1767 = vadd.f32 %v1443, %v1676
        %v1768 = vadd.f32 %v1444, %v1681
        %v1769 = vadd.f32 %v1445, %v1684
        %v1770 = vadd.f32 %v1446, %v1689
        %v1771 = vadd.f32 %v1447, %v1692
        %v1772 = vadd.f32 %v1448, %v1697
        %v1773 = vadd.f32 %v1449, %v1700
        %v1774 = vadd.f32 %v1450, %v1705
        %v1775 = vadd.f32 %v1451, %v1708
        %v1776 = vadd.f32 %v1452, %v1713
        %v1777 = vadd.f32 %v1453, %v1716
        %v1778 = vadd.f32 %v1454, %v1721
        %v1779 = vadd.f32 %v1455, %v1724
        %v1780 = vadd.f32 %v1456, %v1729
        %v1781 = vadd.f32 %v1457, %v1732
        %v1782 = vadd.f32 %v1458, %v1737
        %v1783 = vadd.f32 %v1459, %v1740
        %v1784 = vadd.f32 %v1460, %v1745
        %v1785 = vadd.f32 %v1461, %v1748
        %v1786 = vadd.f32 %v1462, %v1753
        %v1787 = vadd.f32 %v1463, %v1756
        %v1788 = vadd.f32 %v1464, %v1761
        %v1789 = vld [vmem:[#allocation2 + $0x60] sm:$0xf]
        %s1790 = scalar_lea.vmem %s2, 128
        %v1791 = vld [vmem:[%s1790] sm:$0xf]
        %v1792 = vld [vmem:[%s1790 + $0x4] sm:$0xf]
        %v1793 = vld [vmem:[%s1790 + $0x8] sm:$0xf]
        %v1794 = vld [vmem:[%s1790 + $0xc] sm:$0xf]
        %v1795 = vld [vmem:[%s1790 + $0x10] sm:$0xf]
        %v1796 = vld [vmem:[%s1790 + $0x14] sm:$0xf]
        %v1797 = vld [vmem:[%s1790 + $0x18] sm:$0xf]
        %v1798 = vld [vmem:[%s1790 + $0x1c] sm:$0xf]
        %v1800 = vunpack.c.l.b16 %v1789
        %v1801 = vpack.c.b16 %v1800, %v1800
        %vm1802 = vsmask.f32 6400
        %v1804 = vshrl.u32 %v1543, 16
        %v1806 = vrot.slane %v1804, 1
        %v1807 = vshll.u32 %v1543, 16
        %v1809 = vrot.slane %v1807, 2
        %v1810 = vor.u32 %v1806, %v1809
        %v1812 = vshrl.u32 %v1544, 16
        %v1814 = vrot.slane %v1812, 1
        %v1815 = vshll.u32 %v1544, 16
        %v1817 = vrot.slane %v1815, 2
        %v1818 = vor.u32 %v1814, %v1817
        %v1819 = vsel %vm1802, %v1810, %v1818
        %v1821 = vshrl.u32 %v1545, 16
        %v1823 = vrot.slane %v1821, 1
        %v1824 = vshll.u32 %v1545, 16
        %v1826 = vrot.slane %v1824, 2
        %v1827 = vor.u32 %v1823, %v1826
        %v1828 = vsel %vm1802, %v1818, %v1827
        %v1830 = vshrl.u32 %v1546, 16
        %v1832 = vrot.slane %v1830, 1
        %v1833 = vshll.u32 %v1546, 16
        %v1835 = vrot.slane %v1833, 2
        %v1836 = vor.u32 %v1832, %v1835
        %v1837 = vsel %vm1802, %v1827, %v1836
        %v1839 = vshrl.u32 %v1547, 16
        %v1841 = vrot.slane %v1839, 1
        %v1842 = vshll.u32 %v1547, 16
        %v1844 = vrot.slane %v1842, 2
        %v1845 = vor.u32 %v1841, %v1844
        %v1846 = vsel %vm1802, %v1836, %v1845
        %v1848 = vshrl.u32 %v1548, 16
        %v1850 = vrot.slane %v1848, 1
        %v1851 = vshll.u32 %v1548, 16
        %v1853 = vrot.slane %v1851, 2
        %v1854 = vor.u32 %v1850, %v1853
        %v1855 = vsel %vm1802, %v1845, %v1854
        %v1857 = vshrl.u32 %v1549, 16
        %v1859 = vrot.slane %v1857, 1
        %v1860 = vshll.u32 %v1549, 16
        %v1862 = vrot.slane %v1860, 2
        %v1863 = vor.u32 %v1859, %v1862
        %v1864 = vsel %vm1802, %v1854, %v1863
        %v1866 = vshrl.u32 %v1550, 16
        %v1868 = vrot.slane %v1866, 1
        %v1869 = vshll.u32 %v1550, 16
        %v1871 = vrot.slane %v1869, 2
        %v1872 = vor.u32 %v1868, %v1871
        %v1873 = vsel %vm1802, %v1863, %v1872
        %v1875 = vshrl.u32 %v1551, 16
        %v1877 = vrot.slane %v1875, 1
        %v1878 = vshll.u32 %v1551, 16
        %v1880 = vrot.slane %v1878, 2
        %v1881 = vor.u32 %v1877, %v1880
        %v1882 = vsel %vm1802, %v1872, %v1881
        %v1884 = vshrl.u32 %v1552, 16
        %v1886 = vrot.slane %v1884, 1
        %v1887 = vshll.u32 %v1552, 16
        %v1889 = vrot.slane %v1887, 2
        %v1890 = vor.u32 %v1886, %v1889
        %v1891 = vsel %vm1802, %v1881, %v1890
        %v1893 = vshrl.u32 %v1553, 16
        %v1895 = vrot.slane %v1893, 1
        %v1896 = vshll.u32 %v1553, 16
        %v1898 = vrot.slane %v1896, 2
        %v1899 = vor.u32 %v1895, %v1898
        %v1900 = vsel %vm1802, %v1890, %v1899
        %v1902 = vshrl.u32 %v1801, 16
        %v1904 = vrot.slane %v1902, 1
        %v1905 = vshll.u32 %v1801, 16
        %v1907 = vrot.slane %v1905, 2
        %v1908 = vor.u32 %v1904, %v1907
        %v1909 = vsel %vm1802, %v1899, %v1908
        %v1918 = vunpack.c.l.b16 %v1791
        %v1919 = vunpack.c.l.b16 %v1792
        %v1920 = vunpack.c.l.b16 %v1793
        %v1921 = vunpack.c.l.b16 %v1794
        %v1922 = vunpack.c.l.b16 %v1795
        %v1923 = vunpack.c.l.b16 %v1796
        %v1924 = vunpack.c.l.b16 %v1797
        %v1925 = vunpack.c.l.b16 %v1798
        %v1926 = vpack.c.b16 %v1919, %v1918
        %v1927 = vpack.c.b16 %v1921, %v1920
        %v1928 = vpack.c.b16 %v1923, %v1922
        %v1929 = vpack.c.b16 %v1925, %v1924
        %v1935 = vsel %vm872, %v1819, 0
        %v1938 = vsel %vm872, %v1828, 0
        %v1941 = vsel %vm872, %v1837, 0
        %v1944 = vsel %vm872, %v1846, 0
        %v1947 = vsel %vm872, %v1855, 0
        %v1950 = vsel %vm872, %v1864, 0
        %v1953 = vsel %vm872, %v1873, 0
        %v1956 = vsel %vm872, %v1882, 0
        %v1959 = vsel %vm872, %v1891, 0
        %v1962 = vsel %vm872, %v1900, 0
        %v1965 = vsel %vm872, %v1909, 0
        %v1968 = vsel %vm872, %v1908, 0
        %1970 = vmatprep.subr.bf16.mxu0 0
        %1971 = vmatpush1.bf16.msra.mxu0 0
        %1972 = vmatprep.subr.bf16.mxu0 0
        %1973 = vmatpush1.bf16.msra.mxu0 0
        %1974 = vmatprep.subr.bf16.mxu0 0
        %1975 = vmatpush1.bf16.msra.mxu0 0
        %1976 = vmatprep.subr.bf16.mxu0 0
        %1977 = vmatpush1.bf16.msra.mxu0 0
        %1978 = vmatprep.subr.bf16.mxu0 0
        %1979 = vmatpush1.bf16.msra.mxu0 %v1929
        %1980 = vmatprep.subr.bf16.mxu0 0
        %1981 = vmatpush1.bf16.msra.mxu0 %v1928
        %1982 = vmatprep.subr.bf16.mxu0 0
        %1983 = vmatpush1.bf16.msra.mxu0 %v1927
        %1984 = vmatprep.subr.bf16.mxu0 0
        %1985 = vmatpush1.bf16.msra.mxu0 %v1926
        %1986 = vmatprep.subr.bf16.mxu0 0
        %1987 = vmatpush2.bf16.msra.mxu0 0
        %1988 = vmatprep.subr.bf16.mxu0 0
        %1989 = vmatpush2.bf16.msra.mxu0 0
        %1990 = vmatprep.subr.bf16.mxu0 0
        %1991 = vmatpush2.bf16.msra.mxu0 0
        %1992 = vmatprep.subr.bf16.mxu0 0
        %1993 = vmatpush2.bf16.msra.mxu0 0
        %1994 = vmatprep.subr.bf16.mxu0 0
        %1995 = vmatpush2.bf16.msra.mxu0 0
        %1996 = vmatprep.subr.bf16.mxu0 0
        %1997 = vmatpush2.bf16.msra.mxu0 0
        %1998 = vmatprep.subr.bf16.mxu0 0
        %1999 = vmatpush2.bf16.msra.mxu0 0
        %2000 = vmatprep.subr.bf16.mxu0 0
        %2001 = vmatpush2.bf16.msra.mxu0 0
        %2002 = vmatprep.mubr.bf16.mxu0 0
        %2003 = vmatmul.mubr.bf16.gmra.mxu0 %v1935
        %v2004 = vpop.f32.mrf.mxu0
        %v2005 = vadd.f32 0.0, %v2004
        %v2006 = vpop.f32.mrf.mxu0
        %v2007 = vpop.f32.mrf.mxu0
        %v2008 = vadd.f32 0.0, %v2007
        %v2009 = vpop.f32.mrf.mxu0
        %2010 = vmatprep.mubr.bf16.mxu0 0
        %2011 = vmatmul.mubr.bf16.gmra.mxu0 %v1938
        %v2012 = vpop.f32.mrf.mxu0
        %v2013 = vadd.f32 0.0, %v2012
        %v2014 = vpop.f32.mrf.mxu0
        %v2015 = vpop.f32.mrf.mxu0
        %v2016 = vadd.f32 0.0, %v2015
        %v2017 = vpop.f32.mrf.mxu0
        %2018 = vmatprep.mubr.bf16.mxu0 0
        %2019 = vmatmul.mubr.bf16.gmra.mxu0 %v1941
        %v2020 = vpop.f32.mrf.mxu0
        %v2021 = vadd.f32 0.0, %v2020
        %v2022 = vpop.f32.mrf.mxu0
        %v2023 = vpop.f32.mrf.mxu0
        %v2024 = vadd.f32 0.0, %v2023
        %v2025 = vpop.f32.mrf.mxu0
        %2026 = vmatprep.mubr.bf16.mxu0 0
        %2027 = vmatmul.mubr.bf16.gmra.mxu0 %v1944
        %v2028 = vpop.f32.mrf.mxu0
        %v2029 = vadd.f32 0.0, %v2028
        %v2030 = vpop.f32.mrf.mxu0
        %v2031 = vpop.f32.mrf.mxu0
        %v2032 = vadd.f32 0.0, %v2031
        %v2033 = vpop.f32.mrf.mxu0
        %2034 = vmatprep.mubr.bf16.mxu0 0
        %2035 = vmatmul.mubr.bf16.gmra.mxu0 %v1947
        %v2036 = vpop.f32.mrf.mxu0
        %v2037 = vadd.f32 0.0, %v2036
        %v2038 = vpop.f32.mrf.mxu0
        %v2039 = vpop.f32.mrf.mxu0
        %v2040 = vadd.f32 0.0, %v2039
        %v2041 = vpop.f32.mrf.mxu0
        %2042 = vmatprep.mubr.bf16.mxu0 0
        %2043 = vmatmul.mubr.bf16.gmra.mxu0 %v1950
        %v2044 = vpop.f32.mrf.mxu0
        %v2045 = vadd.f32 0.0, %v2044
        %v2046 = vpop.f32.mrf.mxu0
        %v2047 = vpop.f32.mrf.mxu0
        %v2048 = vadd.f32 0.0, %v2047
        %v2049 = vpop.f32.mrf.mxu0
        %2050 = vmatprep.mubr.bf16.mxu0 0
        %2051 = vmatmul.mubr.bf16.gmra.mxu0 %v1953
        %v2052 = vpop.f32.mrf.mxu0
        %v2053 = vadd.f32 0.0, %v2052
        %v2054 = vpop.f32.mrf.mxu0
        %v2055 = vpop.f32.mrf.mxu0
        %v2056 = vadd.f32 0.0, %v2055
        %v2057 = vpop.f32.mrf.mxu0
        %2058 = vmatprep.mubr.bf16.mxu0 0
        %2059 = vmatmul.mubr.bf16.gmra.mxu0 %v1956
        %v2060 = vpop.f32.mrf.mxu0
        %v2061 = vadd.f32 0.0, %v2060
        %v2062 = vpop.f32.mrf.mxu0
        %v2063 = vpop.f32.mrf.mxu0
        %v2064 = vadd.f32 0.0, %v2063
        %v2065 = vpop.f32.mrf.mxu0
        %2066 = vmatprep.mubr.bf16.mxu0 0
        %2067 = vmatmul.mubr.bf16.gmra.mxu0 %v1959
        %v2068 = vpop.f32.mrf.mxu0
        %v2069 = vadd.f32 0.0, %v2068
        %v2070 = vpop.f32.mrf.mxu0
        %v2071 = vpop.f32.mrf.mxu0
        %v2072 = vadd.f32 0.0, %v2071
        %v2073 = vpop.f32.mrf.mxu0
        %2074 = vmatprep.mubr.bf16.mxu0 0
        %2075 = vmatmul.mubr.bf16.gmra.mxu0 %v1962
        %v2076 = vpop.f32.mrf.mxu0
        %v2077 = vadd.f32 0.0, %v2076
        %v2078 = vpop.f32.mrf.mxu0
        %v2079 = vpop.f32.mrf.mxu0
        %v2080 = vadd.f32 0.0, %v2079
        %v2081 = vpop.f32.mrf.mxu0
        %2082 = vmatprep.mubr.bf16.mxu0 0
        %2083 = vmatmul.mubr.bf16.gmra.mxu0 %v1965
        %v2084 = vpop.f32.mrf.mxu0
        %v2085 = vadd.f32 0.0, %v2084
        %v2086 = vpop.f32.mrf.mxu0
        %v2087 = vpop.f32.mrf.mxu0
        %v2088 = vadd.f32 0.0, %v2087
        %v2089 = vpop.f32.mrf.mxu0
        %2090 = vmatprep.mubr.bf16.mxu0 0
        %2091 = vmatmul.mubr.bf16.gmra.mxu0 %v1968
        %v2092 = vpop.f32.mrf.mxu0
        %v2093 = vadd.f32 0.0, %v2092
        %v2094 = vpop.f32.mrf.mxu0
        %v2095 = vpop.f32.mrf.mxu0
        %v2096 = vpop.f32.mrf.mxu0
        %2097 = vdwg.mxu0
        %v2098 = vadd.f32 %v1766, %v2005
        %v2099 = vadd.f32 %v1767, %v2008
        %v2100 = vadd.f32 %v1768, %v2013
        %v2101 = vadd.f32 %v1769, %v2016
        %v2102 = vadd.f32 %v1770, %v2021
        %v2103 = vadd.f32 %v1771, %v2024
        %v2104 = vadd.f32 %v1772, %v2029
        %v2105 = vadd.f32 %v1773, %v2032
        %v2106 = vadd.f32 %v1774, %v2037
        %v2107 = vadd.f32 %v1775, %v2040
        %v2108 = vadd.f32 %v1776, %v2045
        %v2109 = vadd.f32 %v1777, %v2048
        %v2110 = vadd.f32 %v1778, %v2053
        %v2111 = vadd.f32 %v1779, %v2056
        %v2112 = vadd.f32 %v1780, %v2061
        %v2113 = vadd.f32 %v1781, %v2064
        %v2114 = vadd.f32 %v1782, %v2069
        %v2115 = vadd.f32 %v1783, %v2072
        %v2116 = vadd.f32 %v1784, %v2077
        %v2117 = vadd.f32 %v1785, %v2080
        %v2118 = vadd.f32 %v1786, %v2085
        %v2119 = vadd.f32 %v1787, %v2088
        %v2120 = vadd.f32 %v1788, %v2093
        %v2121 = vld [vmem:[#allocation2 + $0x8] sm:$0xc]
        %s2122 = scalar_lea.vmem %s2, 160
        %v2123 = vld [vmem:[%s2122] sm:$0xf]
        %v2124 = vld [vmem:[%s2122 + $0x4] sm:$0xf]
        %v2125 = vld [vmem:[%s2122 + $0x8] sm:$0xf]
        %v2126 = vld [vmem:[%s2122 + $0xc] sm:$0xf]
        %v2127 = vld [vmem:[%s2122 + $0x10] sm:$0xf]
        %v2128 = vld [vmem:[%s2122 + $0x14] sm:$0xf]
        %v2129 = vld [vmem:[%s2122 + $0x18] sm:$0xf]
        %v2130 = vld [vmem:[%s2122 + $0x1c] sm:$0xf]
        %v2132 = vunpack.c.l.b16 %v2121
        %v2133 = vpack.c.b16 %v1521, %v2132
        %vm2134 = vcmask 1045504
        %v2135 = vrot.slane %v2133, 2
        %v2136 = vrot.slane %v1544, 2
        %v2137 = vsel %vm2134, %v2135, %v2136
        %v2138 = vrot.slane %v1545, 2
        %v2139 = vsel %vm2134, %v2136, %v2138
        %v2140 = vrot.slane %v1546, 2
        %v2141 = vsel %vm2134, %v2138, %v2140
        %v2142 = vrot.slane %v1547, 2
        %v2143 = vsel %vm2134, %v2140, %v2142
        %v2144 = vrot.slane %v1548, 2
        %v2145 = vsel %vm2134, %v2142, %v2144
        %v2146 = vrot.slane %v1549, 2
        %v2147 = vsel %vm2134, %v2144, %v2146
        %v2148 = vrot.slane %v1550, 2
        %v2149 = vsel %vm2134, %v2146, %v2148
        %v2150 = vrot.slane %v1551, 2
        %v2151 = vsel %vm2134, %v2148, %v2150
        %v2152 = vrot.slane %v1552, 2
        %v2153 = vsel %vm2134, %v2150, %v2152
        %v2154 = vrot.slane %v1553, 2
        %v2155 = vsel %vm2134, %v2152, %v2154
        %v2156 = vrot.slane %v1801, 2
        %v2157 = vsel %vm2134, %v2154, %v2156
        %v2166 = vunpack.c.l.b16 %v2123
        %v2167 = vunpack.c.l.b16 %v2124
        %v2168 = vunpack.c.l.b16 %v2125
        %v2169 = vunpack.c.l.b16 %v2126
        %v2170 = vunpack.c.l.b16 %v2127
        %v2171 = vunpack.c.l.b16 %v2128
        %v2172 = vunpack.c.l.b16 %v2129
        %v2173 = vunpack.c.l.b16 %v2130
        %v2174 = vpack.c.b16 %v2167, %v2166
        %v2175 = vpack.c.b16 %v2169, %v2168
        %v2176 = vpack.c.b16 %v2171, %v2170
        %v2177 = vpack.c.b16 %v2173, %v2172
        %v2183 = vsel %vm872, %v2137, 0
        %v2186 = vsel %vm872, %v2139, 0
        %v2189 = vsel %vm872, %v2141, 0
        %v2192 = vsel %vm872, %v2143, 0
        %v2195 = vsel %vm872, %v2145, 0
        %v2198 = vsel %vm872, %v2147, 0
        %v2201 = vsel %vm872, %v2149, 0
        %v2204 = vsel %vm872, %v2151, 0
        %v2207 = vsel %vm872, %v2153, 0
        %v2210 = vsel %vm872, %v2155, 0
        %v2213 = vsel %vm872, %v2157, 0
        %v2216 = vsel %vm872, %v2156, 0
        %2218 = vmatprep.subr.bf16.mxu0 0
        %2219 = vmatpush1.bf16.msra.mxu0 0
        %2220 = vmatprep.subr.bf16.mxu0 0
        %2221 = vmatpush1.bf16.msra.mxu0 0
        %2222 = vmatprep.subr.bf16.mxu0 0
        %2223 = vmatpush1.bf16.msra.mxu0 0
        %2224 = vmatprep.subr.bf16.mxu0 0
        %2225 = vmatpush1.bf16.msra.mxu0 0
        %2226 = vmatprep.subr.bf16.mxu0 0
        %2227 = vmatpush1.bf16.msra.mxu0 %v2177
        %2228 = vmatprep.subr.bf16.mxu0 0
        %2229 = vmatpush1.bf16.msra.mxu0 %v2176
        %2230 = vmatprep.subr.bf16.mxu0 0
        %2231 = vmatpush1.bf16.msra.mxu0 %v2175
        %2232 = vmatprep.subr.bf16.mxu0 0
        %2233 = vmatpush1.bf16.msra.mxu0 %v2174
        %2234 = vmatprep.subr.bf16.mxu0 0
        %2235 = vmatpush2.bf16.msra.mxu0 0
        %2236 = vmatprep.subr.bf16.mxu0 0
        %2237 = vmatpush2.bf16.msra.mxu0 0
        %2238 = vmatprep.subr.bf16.mxu0 0
        %2239 = vmatpush2.bf16.msra.mxu0 0
        %2240 = vmatprep.subr.bf16.mxu0 0
        %2241 = vmatpush2.bf16.msra.mxu0 0
        %2242 = vmatprep.subr.bf16.mxu0 0
        %2243 = vmatpush2.bf16.msra.mxu0 0
        %2244 = vmatprep.subr.bf16.mxu0 0
        %2245 = vmatpush2.bf16.msra.mxu0 0
        %2246 = vmatprep.subr.bf16.mxu0 0
        %2247 = vmatpush2.bf16.msra.mxu0 0
        %2248 = vmatprep.subr.bf16.mxu0 0
        %2249 = vmatpush2.bf16.msra.mxu0 0
        %2250 = vmatprep.mubr.bf16.mxu0 0
        %2251 = vmatmul.mubr.bf16.gmra.mxu0 %v2183
        %v2252 = vpop.f32.mrf.mxu0
        %v2253 = vadd.f32 0.0, %v2252
        %v2254 = vpop.f32.mrf.mxu0
        %v2255 = vpop.f32.mrf.mxu0
        %v2256 = vadd.f32 0.0, %v2255
        %v2257 = vpop.f32.mrf.mxu0
        %2258 = vmatprep.mubr.bf16.mxu0 0
        %2259 = vmatmul.mubr.bf16.gmra.mxu0 %v2186
        %v2260 = vpop.f32.mrf.mxu0
        %v2261 = vadd.f32 0.0, %v2260
        %v2262 = vpop.f32.mrf.mxu0
        %v2263 = vpop.f32.mrf.mxu0
        %v2264 = vadd.f32 0.0, %v2263
        %v2265 = vpop.f32.mrf.mxu0
        %2266 = vmatprep.mubr.bf16.mxu0 0
        %2267 = vmatmul.mubr.bf16.gmra.mxu0 %v2189
        %v2268 = vpop.f32.mrf.mxu0
        %v2269 = vadd.f32 0.0, %v2268
        %v2270 = vpop.f32.mrf.mxu0
        %v2271 = vpop.f32.mrf.mxu0
        %v2272 = vadd.f32 0.0, %v2271
        %v2273 = vpop.f32.mrf.mxu0
        %2274 = vmatprep.mubr.bf16.mxu0 0
        %2275 = vmatmul.mubr.bf16.gmra.mxu0 %v2192
        %v2276 = vpop.f32.mrf.mxu0
        %v2277 = vadd.f32 0.0, %v2276
        %v2278 = vpop.f32.mrf.mxu0
        %v2279 = vpop.f32.mrf.mxu0
        %v2280 = vadd.f32 0.0, %v2279
        %v2281 = vpop.f32.mrf.mxu0
        %2282 = vmatprep.mubr.bf16.mxu0 0
        %2283 = vmatmul.mubr.bf16.gmra.mxu0 %v2195
        %v2284 = vpop.f32.mrf.mxu0
        %v2285 = vadd.f32 0.0, %v2284
        %v2286 = vpop.f32.mrf.mxu0
        %v2287 = vpop.f32.mrf.mxu0
        %v2288 = vadd.f32 0.0, %v2287
        %v2289 = vpop.f32.mrf.mxu0
        %2290 = vmatprep.mubr.bf16.mxu0 0
        %2291 = vmatmul.mubr.bf16.gmra.mxu0 %v2198
        %v2292 = vpop.f32.mrf.mxu0
        %v2293 = vadd.f32 0.0, %v2292
        %v2294 = vpop.f32.mrf.mxu0
        %v2295 = vpop.f32.mrf.mxu0
        %v2296 = vadd.f32 0.0, %v2295
        %v2297 = vpop.f32.mrf.mxu0
        %2298 = vmatprep.mubr.bf16.mxu0 0
        %2299 = vmatmul.mubr.bf16.gmra.mxu0 %v2201
        %v2300 = vpop.f32.mrf.mxu0
        %v2301 = vadd.f32 0.0, %v2300
        %v2302 = vpop.f32.mrf.mxu0
        %v2303 = vpop.f32.mrf.mxu0
        %v2304 = vadd.f32 0.0, %v2303
        %v2305 = vpop.f32.mrf.mxu0
        %2306 = vmatprep.mubr.bf16.mxu0 0
        %2307 = vmatmul.mubr.bf16.gmra.mxu0 %v2204
        %v2308 = vpop.f32.mrf.mxu0
        %v2309 = vadd.f32 0.0, %v2308
        %v2310 = vpop.f32.mrf.mxu0
        %v2311 = vpop.f32.mrf.mxu0
        %v2312 = vadd.f32 0.0, %v2311
        %v2313 = vpop.f32.mrf.mxu0
        %2314 = vmatprep.mubr.bf16.mxu0 0
        %2315 = vmatmul.mubr.bf16.gmra.mxu0 %v2207
        %v2316 = vpop.f32.mrf.mxu0
        %v2317 = vadd.f32 0.0, %v2316
        %v2318 = vpop.f32.mrf.mxu0
        %v2319 = vpop.f32.mrf.mxu0
        %v2320 = vadd.f32 0.0, %v2319
        %v2321 = vpop.f32.mrf.mxu0
        %2322 = vmatprep.mubr.bf16.mxu0 0
        %2323 = vmatmul.mubr.bf16.gmra.mxu0 %v2210
        %v2324 = vpop.f32.mrf.mxu0
        %v2325 = vadd.f32 0.0, %v2324
        %v2326 = vpop.f32.mrf.mxu0
        %v2327 = vpop.f32.mrf.mxu0
        %v2328 = vadd.f32 0.0, %v2327
        %v2329 = vpop.f32.mrf.mxu0
        %2330 = vmatprep.mubr.bf16.mxu0 0
        %2331 = vmatmul.mubr.bf16.gmra.mxu0 %v2213
        %v2332 = vpop.f32.mrf.mxu0
        %v2333 = vadd.f32 0.0, %v2332
        %v2334 = vpop.f32.mrf.mxu0
        %v2335 = vpop.f32.mrf.mxu0
        %v2336 = vadd.f32 0.0, %v2335
        %v2337 = vpop.f32.mrf.mxu0
        %2338 = vmatprep.mubr.bf16.mxu0 0
        %2339 = vmatmul.mubr.bf16.gmra.mxu0 %v2216
        %v2340 = vpop.f32.mrf.mxu0
        %v2341 = vadd.f32 0.0, %v2340
        %v2342 = vpop.f32.mrf.mxu0
        %v2343 = vpop.f32.mrf.mxu0
        %v2344 = vpop.f32.mrf.mxu0
        %2345 = vdwg.mxu0
        %v2346 = vadd.f32 %v2098, %v2253
        %v2347 = vadd.f32 %v2099, %v2256
        %v2348 = vadd.f32 %v2100, %v2261
        %v2349 = vadd.f32 %v2101, %v2264
        %v2350 = vadd.f32 %v2102, %v2269
        %v2351 = vadd.f32 %v2103, %v2272
        %v2352 = vadd.f32 %v2104, %v2277
        %v2353 = vadd.f32 %v2105, %v2280
        %v2354 = vadd.f32 %v2106, %v2285
        %v2355 = vadd.f32 %v2107, %v2288
        %v2356 = vadd.f32 %v2108, %v2293
        %v2357 = vadd.f32 %v2109, %v2296
        %v2358 = vadd.f32 %v2110, %v2301
        %v2359 = vadd.f32 %v2111, %v2304
        %v2360 = vadd.f32 %v2112, %v2309
        %v2361 = vadd.f32 %v2113, %v2312
        %v2362 = vadd.f32 %v2114, %v2317
        %v2363 = vadd.f32 %v2115, %v2320
        %v2364 = vadd.f32 %v2116, %v2325
        %v2365 = vadd.f32 %v2117, %v2328
        %v2366 = vadd.f32 %v2118, %v2333
        %v2367 = vadd.f32 %v2119, %v2336
        %v2368 = vadd.f32 %v2120, %v2341
        %v2369 = vld [vmem:[#allocation2 + $0x10] sm:$0xc]
        %v2370 = vld [vmem:[#allocation2 + $0x14] sm:$0xf]
        %v2371 = vld [vmem:[#allocation2 + $0x18] sm:$0xf]
        %v2372 = vld [vmem:[#allocation2 + $0x1c] sm:$0xf]
        %v2373 = vld [vmem:[#allocation2 + $0x20] sm:$0xf]
        %v2374 = vld [vmem:[#allocation2 + $0x24] sm:$0xf]
        %v2375 = vld [vmem:[#allocation2 + $0x28] sm:$0xf]
        %v2376 = vld [vmem:[#allocation2 + $0x2c] sm:$0xf]
        %v2377 = vld [vmem:[#allocation2 + $0x30] sm:$0xf]
        %v2378 = vld [vmem:[#allocation2 + $0x34] sm:$0xf]
        %v2379 = vld [vmem:[#allocation2 + $0x38] sm:$0xf]
        %v2380 = vld [vmem:[#allocation2 + $0x3c] sm:$0xf]
        %v2381 = vld [vmem:[#allocation2 + $0x40] sm:$0xf]
        %v2382 = vld [vmem:[#allocation2 + $0x44] sm:$0xf]
        %v2383 = vld [vmem:[#allocation2 + $0x48] sm:$0xf]
        %v2384 = vld [vmem:[#allocation2 + $0x4c] sm:$0xf]
        %v2385 = vld [vmem:[#allocation2 + $0x50] sm:$0xf]
        %v2386 = vld [vmem:[#allocation2 + $0x54] sm:$0xf]
        %v2387 = vld [vmem:[#allocation2 + $0x58] sm:$0xf]
        %v2388 = vld [vmem:[#allocation2 + $0x5c] sm:$0xf]
        %v2389 = vld [vmem:[#allocation2 + $0x60] sm:$0xf]
        %v2390 = vld [vmem:[#allocation2 + $0x64] sm:$0xf]
        %v2391 = vld [vmem:[#allocation2 + $0x68] sm:$0xf]
        %s2392 = scalar_lea.vmem %s2, 192
        %v2393 = vld [vmem:[%s2392] sm:$0xf]
        %v2394 = vld [vmem:[%s2392 + $0x4] sm:$0xf]
        %v2395 = vld [vmem:[%s2392 + $0x8] sm:$0xf]
        %v2396 = vld [vmem:[%s2392 + $0xc] sm:$0xf]
        %v2397 = vld [vmem:[%s2392 + $0x10] sm:$0xf]
        %v2398 = vld [vmem:[%s2392 + $0x14] sm:$0xf]
        %v2399 = vld [vmem:[%s2392 + $0x18] sm:$0xf]
        %v2400 = vld [vmem:[%s2392 + $0x1c] sm:$0xf]
        %v2424 = vunpack.c.l.b16 %v2369
        %v2425 = vunpack.c.l.b16 %v2370
        %v2426 = vunpack.c.l.b16 %v2371
        %v2427 = vunpack.c.l.b16 %v2372
        %v2428 = vunpack.c.l.b16 %v2373
        %v2429 = vunpack.c.l.b16 %v2374
        %v2430 = vunpack.c.l.b16 %v2375
        %v2431 = vunpack.c.l.b16 %v2376
        %v2432 = vunpack.c.l.b16 %v2377
        %v2433 = vunpack.c.l.b16 %v2378
        %v2434 = vunpack.c.l.b16 %v2379
        %v2435 = vunpack.c.l.b16 %v2380
        %v2436 = vunpack.c.l.b16 %v2381
        %v2437 = vunpack.c.l.b16 %v2382
        %v2438 = vunpack.c.l.b16 %v2383
        %v2439 = vunpack.c.l.b16 %v2384
        %v2440 = vunpack.c.l.b16 %v2385
        %v2441 = vunpack.c.l.b16 %v2386
        %v2442 = vunpack.c.l.b16 %v2387
        %v2443 = vunpack.c.l.b16 %v2388
        %v2444 = vunpack.c.l.b16 %v2389
        %v2445 = vunpack.c.l.b16 %v2390
        %v2446 = vunpack.c.l.b16 %v2391
        %v2447 = vpack.c.b16 %v2425, %v2424
        %v2448 = vpack.c.b16 %v2427, %v2426
        %v2449 = vpack.c.b16 %v2429, %v2428
        %v2450 = vpack.c.b16 %v2431, %v2430
        %v2451 = vpack.c.b16 %v2433, %v2432
        %v2452 = vpack.c.b16 %v2435, %v2434
        %v2453 = vpack.c.b16 %v2437, %v2436
        %v2454 = vpack.c.b16 %v2439, %v2438
        %v2455 = vpack.c.b16 %v2441, %v2440
        %v2456 = vpack.c.b16 %v2443, %v2442
        %v2457 = vpack.c.b16 %v2445, %v2444
        %v2458 = vpack.c.b16 %v2446, %v2446
        %v2459 = vrot.slane %v2447, 2
        %v2460 = vrot.slane %v2448, 2
        %v2461 = vsel %vm2134, %v2459, %v2460
        %v2462 = vrot.slane %v2449, 2
        %v2463 = vsel %vm2134, %v2460, %v2462
        %v2464 = vrot.slane %v2450, 2
        %v2465 = vsel %vm2134, %v2462, %v2464
        %v2466 = vrot.slane %v2451, 2
        %v2467 = vsel %vm2134, %v2464, %v2466
        %v2468 = vrot.slane %v2452, 2
        %v2469 = vsel %vm2134, %v2466, %v2468
        %v2470 = vrot.slane %v2453, 2
        %v2471 = vsel %vm2134, %v2468, %v2470
        %v2472 = vrot.slane %v2454, 2
        %v2473 = vsel %vm2134, %v2470, %v2472
        %v2474 = vrot.slane %v2455, 2
        %v2475 = vsel %vm2134, %v2472, %v2474
        %v2476 = vrot.slane %v2456, 2
        %v2477 = vsel %vm2134, %v2474, %v2476
        %v2478 = vrot.slane %v2457, 2
        %v2479 = vsel %vm2134, %v2476, %v2478
        %v2480 = vrot.slane %v2458, 2
        %v2481 = vsel %vm2134, %v2478, %v2480
        %v2490 = vunpack.c.l.b16 %v2393
        %v2491 = vunpack.c.l.b16 %v2394
        %v2492 = vunpack.c.l.b16 %v2395
        %v2493 = vunpack.c.l.b16 %v2396
        %v2494 = vunpack.c.l.b16 %v2397
        %v2495 = vunpack.c.l.b16 %v2398
        %v2496 = vunpack.c.l.b16 %v2399
        %v2497 = vunpack.c.l.b16 %v2400
        %v2498 = vpack.c.b16 %v2491, %v2490
        %v2499 = vpack.c.b16 %v2493, %v2492
        %v2500 = vpack.c.b16 %v2495, %v2494
        %v2501 = vpack.c.b16 %v2497, %v2496
        %v2507 = vsel %vm872, %v2461, 0
        %v2510 = vsel %vm872, %v2463, 0
        %v2513 = vsel %vm872, %v2465, 0
        %v2516 = vsel %vm872, %v2467, 0
        %v2519 = vsel %vm872, %v2469, 0
        %v2522 = vsel %vm872, %v2471, 0
        %v2525 = vsel %vm872, %v2473, 0
        %v2528 = vsel %vm872, %v2475, 0
        %v2531 = vsel %vm872, %v2477, 0
        %v2534 = vsel %vm872, %v2479, 0
        %v2537 = vsel %vm872, %v2481, 0
        %v2540 = vsel %vm872, %v2480, 0
        %2542 = vmatprep.subr.bf16.mxu0 0
        %2543 = vmatpush1.bf16.msra.mxu0 0
        %2544 = vmatprep.subr.bf16.mxu0 0
        %2545 = vmatpush1.bf16.msra.mxu0 0
        %2546 = vmatprep.subr.bf16.mxu0 0
        %2547 = vmatpush1.bf16.msra.mxu0 0
        %2548 = vmatprep.subr.bf16.mxu0 0
        %2549 = vmatpush1.bf16.msra.mxu0 0
        %2550 = vmatprep.subr.bf16.mxu0 0
        %2551 = vmatpush1.bf16.msra.mxu0 %v2501
        %2552 = vmatprep.subr.bf16.mxu0 0
        %2553 = vmatpush1.bf16.msra.mxu0 %v2500
        %2554 = vmatprep.subr.bf16.mxu0 0
        %2555 = vmatpush1.bf16.msra.mxu0 %v2499
        %2556 = vmatprep.subr.bf16.mxu0 0
        %2557 = vmatpush1.bf16.msra.mxu0 %v2498
        %2558 = vmatprep.subr.bf16.mxu0 0
        %2559 = vmatpush2.bf16.msra.mxu0 0
        %2560 = vmatprep.subr.bf16.mxu0 0
        %2561 = vmatpush2.bf16.msra.mxu0 0
        %2562 = vmatprep.subr.bf16.mxu0 0
        %2563 = vmatpush2.bf16.msra.mxu0 0
        %2564 = vmatprep.subr.bf16.mxu0 0
        %2565 = vmatpush2.bf16.msra.mxu0 0
        %2566 = vmatprep.subr.bf16.mxu0 0
        %2567 = vmatpush2.bf16.msra.mxu0 0
        %2568 = vmatprep.subr.bf16.mxu0 0
        %2569 = vmatpush2.bf16.msra.mxu0 0
        %2570 = vmatprep.subr.bf16.mxu0 0
        %2571 = vmatpush2.bf16.msra.mxu0 0
        %2572 = vmatprep.subr.bf16.mxu0 0
        %2573 = vmatpush2.bf16.msra.mxu0 0
        %2574 = vmatprep.mubr.bf16.mxu0 0
        %2575 = vmatmul.mubr.bf16.gmra.mxu0 %v2507
        %v2576 = vpop.f32.mrf.mxu0
        %v2577 = vadd.f32 0.0, %v2576
        %v2578 = vpop.f32.mrf.mxu0
        %v2579 = vpop.f32.mrf.mxu0
        %v2580 = vadd.f32 0.0, %v2579
        %v2581 = vpop.f32.mrf.mxu0
        %2582 = vmatprep.mubr.bf16.mxu0 0
        %2583 = vmatmul.mubr.bf16.gmra.mxu0 %v2510
        %v2584 = vpop.f32.mrf.mxu0
        %v2585 = vadd.f32 0.0, %v2584
        %v2586 = vpop.f32.mrf.mxu0
        %v2587 = vpop.f32.mrf.mxu0
        %v2588 = vadd.f32 0.0, %v2587
        %v2589 = vpop.f32.mrf.mxu0
        %2590 = vmatprep.mubr.bf16.mxu0 0
        %2591 = vmatmul.mubr.bf16.gmra.mxu0 %v2513
        %v2592 = vpop.f32.mrf.mxu0
        %v2593 = vadd.f32 0.0, %v2592
        %v2594 = vpop.f32.mrf.mxu0
        %v2595 = vpop.f32.mrf.mxu0
        %v2596 = vadd.f32 0.0, %v2595
        %v2597 = vpop.f32.mrf.mxu0
        %2598 = vmatprep.mubr.bf16.mxu0 0
        %2599 = vmatmul.mubr.bf16.gmra.mxu0 %v2516
        %v2600 = vpop.f32.mrf.mxu0
        %v2601 = vadd.f32 0.0, %v2600
        %v2602 = vpop.f32.mrf.mxu0
        %v2603 = vpop.f32.mrf.mxu0
        %v2604 = vadd.f32 0.0, %v2603
        %v2605 = vpop.f32.mrf.mxu0
        %2606 = vmatprep.mubr.bf16.mxu0 0
        %2607 = vmatmul.mubr.bf16.gmra.mxu0 %v2519
        %v2608 = vpop.f32.mrf.mxu0
        %v2609 = vadd.f32 0.0, %v2608
        %v2610 = vpop.f32.mrf.mxu0
        %v2611 = vpop.f32.mrf.mxu0
        %v2612 = vadd.f32 0.0, %v2611
        %v2613 = vpop.f32.mrf.mxu0
        %2614 = vmatprep.mubr.bf16.mxu0 0
        %2615 = vmatmul.mubr.bf16.gmra.mxu0 %v2522
        %v2616 = vpop.f32.mrf.mxu0
        %v2617 = vadd.f32 0.0, %v2616
        %v2618 = vpop.f32.mrf.mxu0
        %v2619 = vpop.f32.mrf.mxu0
        %v2620 = vadd.f32 0.0, %v2619
        %v2621 = vpop.f32.mrf.mxu0
        %2622 = vmatprep.mubr.bf16.mxu0 0
        %2623 = vmatmul.mubr.bf16.gmra.mxu0 %v2525
        %v2624 = vpop.f32.mrf.mxu0
        %v2625 = vadd.f32 0.0, %v2624
        %v2626 = vpop.f32.mrf.mxu0
        %v2627 = vpop.f32.mrf.mxu0
        %v2628 = vadd.f32 0.0, %v2627
        %v2629 = vpop.f32.mrf.mxu0
        %2630 = vmatprep.mubr.bf16.mxu0 0
        %2631 = vmatmul.mubr.bf16.gmra.mxu0 %v2528
        %v2632 = vpop.f32.mrf.mxu0
        %v2633 = vadd.f32 0.0, %v2632
        %v2634 = vpop.f32.mrf.mxu0
        %v2635 = vpop.f32.mrf.mxu0
        %v2636 = vadd.f32 0.0, %v2635
        %v2637 = vpop.f32.mrf.mxu0
        %2638 = vmatprep.mubr.bf16.mxu0 0
        %2639 = vmatmul.mubr.bf16.gmra.mxu0 %v2531
        %v2640 = vpop.f32.mrf.mxu0
        %v2641 = vadd.f32 0.0, %v2640
        %v2642 = vpop.f32.mrf.mxu0
        %v2643 = vpop.f32.mrf.mxu0
        %v2644 = vadd.f32 0.0, %v2643
        %v2645 = vpop.f32.mrf.mxu0
        %2646 = vmatprep.mubr.bf16.mxu0 0
        %2647 = vmatmul.mubr.bf16.gmra.mxu0 %v2534
        %v2648 = vpop.f32.mrf.mxu0
        %v2649 = vadd.f32 0.0, %v2648
        %v2650 = vpop.f32.mrf.mxu0
        %v2651 = vpop.f32.mrf.mxu0
        %v2652 = vadd.f32 0.0, %v2651
        %v2653 = vpop.f32.mrf.mxu0
        %2654 = vmatprep.mubr.bf16.mxu0 0
        %2655 = vmatmul.mubr.bf16.gmra.mxu0 %v2537
        %v2656 = vpop.f32.mrf.mxu0
        %v2657 = vadd.f32 0.0, %v2656
        %v2658 = vpop.f32.mrf.mxu0
        %v2659 = vpop.f32.mrf.mxu0
        %v2660 = vadd.f32 0.0, %v2659
        %v2661 = vpop.f32.mrf.mxu0
        %2662 = vmatprep.mubr.bf16.mxu0 0
        %2663 = vmatmul.mubr.bf16.gmra.mxu0 %v2540
        %v2664 = vpop.f32.mrf.mxu0
        %v2665 = vadd.f32 0.0, %v2664
        %v2666 = vpop.f32.mrf.mxu0
        %v2667 = vpop.f32.mrf.mxu0
        %v2668 = vpop.f32.mrf.mxu0
        %2669 = vdwg.mxu0
        %v2670 = vadd.f32 %v2346, %v2577
        %v2671 = vadd.f32 %v2347, %v2580
        %v2672 = vadd.f32 %v2348, %v2585
        %v2673 = vadd.f32 %v2349, %v2588
        %v2674 = vadd.f32 %v2350, %v2593
        %v2675 = vadd.f32 %v2351, %v2596
        %v2676 = vadd.f32 %v2352, %v2601
        %v2677 = vadd.f32 %v2353, %v2604
        %v2678 = vadd.f32 %v2354, %v2609
        %v2679 = vadd.f32 %v2355, %v2612
        %v2680 = vadd.f32 %v2356, %v2617
        %v2681 = vadd.f32 %v2357, %v2620
        %v2682 = vadd.f32 %v2358, %v2625
        %v2683 = vadd.f32 %v2359, %v2628
        %v2684 = vadd.f32 %v2360, %v2633
        %v2685 = vadd.f32 %v2361, %v2636
        %v2686 = vadd.f32 %v2362, %v2641
        %v2687 = vadd.f32 %v2363, %v2644
        %v2688 = vadd.f32 %v2364, %v2649
        %v2689 = vadd.f32 %v2365, %v2652
        %v2690 = vadd.f32 %v2366, %v2657
        %v2691 = vadd.f32 %v2367, %v2660
        %v2692 = vadd.f32 %v2368, %v2665
        %v2693 = vld [vmem:[#allocation2 + $0x10] sm:$0xc]
        %v2694 = vld [vmem:[#allocation2 + $0x14] sm:$0xf]
        %v2695 = vld [vmem:[#allocation2 + $0x18] sm:$0xf]
        %v2696 = vld [vmem:[#allocation2 + $0x1c] sm:$0xf]
        %v2697 = vld [vmem:[#allocation2 + $0x20] sm:$0xf]
        %v2698 = vld [vmem:[#allocation2 + $0x24] sm:$0xf]
        %v2699 = vld [vmem:[#allocation2 + $0x28] sm:$0xf]
        %v2700 = vld [vmem:[#allocation2 + $0x2c] sm:$0xf]
        %v2701 = vld [vmem:[#allocation2 + $0x30] sm:$0xf]
        %v2702 = vld [vmem:[#allocation2 + $0x34] sm:$0xf]
        %v2703 = vld [vmem:[#allocation2 + $0x38] sm:$0xf]
        %v2704 = vld [vmem:[#allocation2 + $0x3c] sm:$0xf]
        %v2705 = vld [vmem:[#allocation2 + $0x40] sm:$0xf]
        %v2706 = vld [vmem:[#allocation2 + $0x44] sm:$0xf]
        %v2707 = vld [vmem:[#allocation2 + $0x48] sm:$0xf]
        %v2708 = vld [vmem:[#allocation2 + $0x4c] sm:$0xf]
        %v2709 = vld [vmem:[#allocation2 + $0x50] sm:$0xf]
        %v2710 = vld [vmem:[#allocation2 + $0x54] sm:$0xf]
        %v2711 = vld [vmem:[#allocation2 + $0x58] sm:$0xf]
        %v2712 = vld [vmem:[#allocation2 + $0x5c] sm:$0xf]
        %v2713 = vld [vmem:[#allocation2 + $0x60] sm:$0xf]
        %v2714 = vld [vmem:[#allocation2 + $0x64] sm:$0xf]
        %v2715 = vld [vmem:[#allocation2 + $0x68] sm:$0xf]
        %v2716 = vld [vmem:[#allocation2 + $0x6c] sm:$0x1]
        %s2717 = scalar_lea.vmem %s2, 224
        %v2718 = vld [vmem:[%s2717] sm:$0xf]
        %v2719 = vld [vmem:[%s2717 + $0x4] sm:$0xf]
        %v2720 = vld [vmem:[%s2717 + $0x8] sm:$0xf]
        %v2721 = vld [vmem:[%s2717 + $0xc] sm:$0xf]
        %v2722 = vld [vmem:[%s2717 + $0x10] sm:$0xf]
        %v2723 = vld [vmem:[%s2717 + $0x14] sm:$0xf]
        %v2724 = vld [vmem:[%s2717 + $0x18] sm:$0xf]
        %v2725 = vld [vmem:[%s2717 + $0x1c] sm:$0xf]
        %v2750 = vunpack.c.l.b16 %v2693
        %v2751 = vunpack.c.l.b16 %v2694
        %v2752 = vunpack.c.l.b16 %v2695
        %v2753 = vunpack.c.l.b16 %v2696
        %v2754 = vunpack.c.l.b16 %v2697
        %v2755 = vunpack.c.l.b16 %v2698
        %v2756 = vunpack.c.l.b16 %v2699
        %v2757 = vunpack.c.l.b16 %v2700
        %v2758 = vunpack.c.l.b16 %v2701
        %v2759 = vunpack.c.l.b16 %v2702
        %v2760 = vunpack.c.l.b16 %v2703
        %v2761 = vunpack.c.l.b16 %v2704
        %v2762 = vunpack.c.l.b16 %v2705
        %v2763 = vunpack.c.l.b16 %v2706
        %v2764 = vunpack.c.l.b16 %v2707
        %v2765 = vunpack.c.l.b16 %v2708
        %v2766 = vunpack.c.l.b16 %v2709
        %v2767 = vunpack.c.l.b16 %v2710
        %v2768 = vunpack.c.l.b16 %v2711
        %v2769 = vunpack.c.l.b16 %v2712
        %v2770 = vunpack.c.l.b16 %v2713
        %v2771 = vunpack.c.l.b16 %v2714
        %v2772 = vunpack.c.l.b16 %v2715
        %v2773 = vunpack.c.l.b16 %v2716
        %v2774 = vpack.c.b16 %v2751, %v2750
        %v2775 = vpack.c.b16 %v2753, %v2752
        %v2776 = vpack.c.b16 %v2755, %v2754
        %v2777 = vpack.c.b16 %v2757, %v2756
        %v2778 = vpack.c.b16 %v2759, %v2758
        %v2779 = vpack.c.b16 %v2761, %v2760
        %v2780 = vpack.c.b16 %v2763, %v2762
        %v2781 = vpack.c.b16 %v2765, %v2764
        %v2782 = vpack.c.b16 %v2767, %v2766
        %v2783 = vpack.c.b16 %v2769, %v2768
        %v2784 = vpack.c.b16 %v2771, %v2770
        %v2785 = vpack.c.b16 %v2773, %v2772
        %vm2786 = vsmask.f32 5376
        %v2788 = vshrl.u32 %v2774, 16
        %v2790 = vrot.slane %v2788, 2
        %v2791 = vshll.u32 %v2774, 16
        %v2793 = vrot.slane %v2791, 3
        %v2794 = vor.u32 %v2790, %v2793
        %v2796 = vshrl.u32 %v2775, 16
        %v2798 = vrot.slane %v2796, 2
        %v2799 = vshll.u32 %v2775, 16
        %v2801 = vrot.slane %v2799, 3
        %v2802 = vor.u32 %v2798, %v2801
        %v2803 = vsel %vm2786, %v2794, %v2802
        %v2805 = vshrl.u32 %v2776, 16
        %v2807 = vrot.slane %v2805, 2
        %v2808 = vshll.u32 %v2776, 16
        %v2810 = vrot.slane %v2808, 3
        %v2811 = vor.u32 %v2807, %v2810
        %v2812 = vsel %vm2786, %v2802, %v2811
        %v2814 = vshrl.u32 %v2777, 16
        %v2816 = vrot.slane %v2814, 2
        %v2817 = vshll.u32 %v2777, 16
        %v2819 = vrot.slane %v2817, 3
        %v2820 = vor.u32 %v2816, %v2819
        %v2821 = vsel %vm2786, %v2811, %v2820
        %v2823 = vshrl.u32 %v2778, 16
        %v2825 = vrot.slane %v2823, 2
        %v2826 = vshll.u32 %v2778, 16
        %v2828 = vrot.slane %v2826, 3
        %v2829 = vor.u32 %v2825, %v2828
        %v2830 = vsel %vm2786, %v2820, %v2829
        %v2832 = vshrl.u32 %v2779, 16
        %v2834 = vrot.slane %v2832, 2
        %v2835 = vshll.u32 %v2779, 16
        %v2837 = vrot.slane %v2835, 3
        %v2838 = vor.u32 %v2834, %v2837
        %v2839 = vsel %vm2786, %v2829, %v2838
        %v2841 = vshrl.u32 %v2780, 16
        %v2843 = vrot.slane %v2841, 2
        %v2844 = vshll.u32 %v2780, 16
        %v2846 = vrot.slane %v2844, 3
        %v2847 = vor.u32 %v2843, %v2846
        %v2848 = vsel %vm2786, %v2838, %v2847
        %v2850 = vshrl.u32 %v2781, 16
        %v2852 = vrot.slane %v2850, 2
        %v2853 = vshll.u32 %v2781, 16
        %v2855 = vrot.slane %v2853, 3
        %v2856 = vor.u32 %v2852, %v2855
        %v2857 = vsel %vm2786, %v2847, %v2856
        %v2859 = vshrl.u32 %v2782, 16
        %v2861 = vrot.slane %v2859, 2
        %v2862 = vshll.u32 %v2782, 16
        %v2864 = vrot.slane %v2862, 3
        %v2865 = vor.u32 %v2861, %v2864
        %v2866 = vsel %vm2786, %v2856, %v2865
        %v2868 = vshrl.u32 %v2783, 16
        %v2870 = vrot.slane %v2868, 2
        %v2871 = vshll.u32 %v2783, 16
        %v2873 = vrot.slane %v2871, 3
        %v2874 = vor.u32 %v2870, %v2873
        %v2875 = vsel %vm2786, %v2865, %v2874
        %v2877 = vshrl.u32 %v2784, 16
        %v2879 = vrot.slane %v2877, 2
        %v2880 = vshll.u32 %v2784, 16
        %v2882 = vrot.slane %v2880, 3
        %v2883 = vor.u32 %v2879, %v2882
        %v2884 = vsel %vm2786, %v2874, %v2883
        %v2886 = vshrl.u32 %v2785, 16
        %v2888 = vrot.slane %v2886, 2
        %v2889 = vshll.u32 %v2785, 16
        %v2891 = vrot.slane %v2889, 3
        %v2892 = vor.u32 %v2888, %v2891
        %v2893 = vsel %vm2786, %v2883, %v2892
        %v2902 = vunpack.c.l.b16 %v2718
        %v2903 = vunpack.c.l.b16 %v2719
        %v2904 = vunpack.c.l.b16 %v2720
        %v2905 = vunpack.c.l.b16 %v2721
        %v2906 = vunpack.c.l.b16 %v2722
        %v2907 = vunpack.c.l.b16 %v2723
        %v2908 = vunpack.c.l.b16 %v2724
        %v2909 = vunpack.c.l.b16 %v2725
        %v2910 = vpack.c.b16 %v2903, %v2902
        %v2911 = vpack.c.b16 %v2905, %v2904
        %v2912 = vpack.c.b16 %v2907, %v2906
        %v2913 = vpack.c.b16 %v2909, %v2908
        %v2919 = vsel %vm872, %v2803, 0
        %v2922 = vsel %vm872, %v2812, 0
        %v2925 = vsel %vm872, %v2821, 0
        %v2928 = vsel %vm872, %v2830, 0
        %v2931 = vsel %vm872, %v2839, 0
        %v2934 = vsel %vm872, %v2848, 0
        %v2937 = vsel %vm872, %v2857, 0
        %v2940 = vsel %vm872, %v2866, 0
        %v2943 = vsel %vm872, %v2875, 0
        %v2946 = vsel %vm872, %v2884, 0
        %v2949 = vsel %vm872, %v2893, 0
        %v2952 = vsel %vm872, %v2892, 0
        %2954 = vmatprep.subr.bf16.mxu0 0
        %2955 = vmatpush1.bf16.msra.mxu0 0
        %2956 = vmatprep.subr.bf16.mxu0 0
        %2957 = vmatpush1.bf16.msra.mxu0 0
        %2958 = vmatprep.subr.bf16.mxu0 0
        %2959 = vmatpush1.bf16.msra.mxu0 0
        %2960 = vmatprep.subr.bf16.mxu0 0
        %2961 = vmatpush1.bf16.msra.mxu0 0
        %2962 = vmatprep.subr.bf16.mxu0 0
        %2963 = vmatpush1.bf16.msra.mxu0 %v2913
        %2964 = vmatprep.subr.bf16.mxu0 0
        %2965 = vmatpush1.bf16.msra.mxu0 %v2912
        %2966 = vmatprep.subr.bf16.mxu0 0
        %2967 = vmatpush1.bf16.msra.mxu0 %v2911
        %2968 = vmatprep.subr.bf16.mxu0 0
        %2969 = vmatpush1.bf16.msra.mxu0 %v2910
        %2970 = vmatprep.subr.bf16.mxu0 0
        %2971 = vmatpush2.bf16.msra.mxu0 0
        %2972 = vmatprep.subr.bf16.mxu0 0
        %2973 = vmatpush2.bf16.msra.mxu0 0
        %2974 = vmatprep.subr.bf16.mxu0 0
        %2975 = vmatpush2.bf16.msra.mxu0 0
        %2976 = vmatprep.subr.bf16.mxu0 0
        %2977 = vmatpush2.bf16.msra.mxu0 0
        %2978 = vmatprep.subr.bf16.mxu0 0
        %2979 = vmatpush2.bf16.msra.mxu0 0
        %2980 = vmatprep.subr.bf16.mxu0 0
        %2981 = vmatpush2.bf16.msra.mxu0 0
        %2982 = vmatprep.subr.bf16.mxu0 0
        %2983 = vmatpush2.bf16.msra.mxu0 0
        %2984 = vmatprep.subr.bf16.mxu0 0
        %2985 = vmatpush2.bf16.msra.mxu0 0
        %2986 = vmatprep.mubr.bf16.mxu0 0
        %2987 = vmatmul.mubr.bf16.gmra.mxu0 %v2919
        %v2988 = vpop.f32.mrf.mxu0
        %v2989 = vadd.f32 0.0, %v2988
        %v2990 = vpop.f32.mrf.mxu0
        %v2991 = vpop.f32.mrf.mxu0
        %v2992 = vadd.f32 0.0, %v2991
        %v2993 = vpop.f32.mrf.mxu0
        %2994 = vmatprep.mubr.bf16.mxu0 0
        %2995 = vmatmul.mubr.bf16.gmra.mxu0 %v2922
        %v2996 = vpop.f32.mrf.mxu0
        %v2997 = vadd.f32 0.0, %v2996
        %v2998 = vpop.f32.mrf.mxu0
        %v2999 = vpop.f32.mrf.mxu0
        %v3000 = vadd.f32 0.0, %v2999
        %v3001 = vpop.f32.mrf.mxu0
        %3002 = vmatprep.mubr.bf16.mxu0 0
        %3003 = vmatmul.mubr.bf16.gmra.mxu0 %v2925
        %v3004 = vpop.f32.mrf.mxu0
        %v3005 = vadd.f32 0.0, %v3004
        %v3006 = vpop.f32.mrf.mxu0
        %v3007 = vpop.f32.mrf.mxu0
        %v3008 = vadd.f32 0.0, %v3007
        %v3009 = vpop.f32.mrf.mxu0
        %3010 = vmatprep.mubr.bf16.mxu0 0
        %3011 = vmatmul.mubr.bf16.gmra.mxu0 %v2928
        %v3012 = vpop.f32.mrf.mxu0
        %v3013 = vadd.f32 0.0, %v3012
        %v3014 = vpop.f32.mrf.mxu0
        %v3015 = vpop.f32.mrf.mxu0
        %v3016 = vadd.f32 0.0, %v3015
        %v3017 = vpop.f32.mrf.mxu0
        %3018 = vmatprep.mubr.bf16.mxu0 0
        %3019 = vmatmul.mubr.bf16.gmra.mxu0 %v2931
        %v3020 = vpop.f32.mrf.mxu0
        %v3021 = vadd.f32 0.0, %v3020
        %v3022 = vpop.f32.mrf.mxu0
        %v3023 = vpop.f32.mrf.mxu0
        %v3024 = vadd.f32 0.0, %v3023
        %v3025 = vpop.f32.mrf.mxu0
        %3026 = vmatprep.mubr.bf16.mxu0 0
        %3027 = vmatmul.mubr.bf16.gmra.mxu0 %v2934
        %v3028 = vpop.f32.mrf.mxu0
        %v3029 = vadd.f32 0.0, %v3028
        %v3030 = vpop.f32.mrf.mxu0
        %v3031 = vpop.f32.mrf.mxu0
        %v3032 = vadd.f32 0.0, %v3031
        %v3033 = vpop.f32.mrf.mxu0
        %3034 = vmatprep.mubr.bf16.mxu0 0
        %3035 = vmatmul.mubr.bf16.gmra.mxu0 %v2937
        %v3036 = vpop.f32.mrf.mxu0
        %v3037 = vadd.f32 0.0, %v3036
        %v3038 = vpop.f32.mrf.mxu0
        %v3039 = vpop.f32.mrf.mxu0
        %v3040 = vadd.f32 0.0, %v3039
        %v3041 = vpop.f32.mrf.mxu0
        %3042 = vmatprep.mubr.bf16.mxu0 0
        %3043 = vmatmul.mubr.bf16.gmra.mxu0 %v2940
        %v3044 = vpop.f32.mrf.mxu0
        %v3045 = vadd.f32 0.0, %v3044
        %v3046 = vpop.f32.mrf.mxu0
        %v3047 = vpop.f32.mrf.mxu0
        %v3048 = vadd.f32 0.0, %v3047
        %v3049 = vpop.f32.mrf.mxu0
        %3050 = vmatprep.mubr.bf16.mxu0 0
        %3051 = vmatmul.mubr.bf16.gmra.mxu0 %v2943
        %v3052 = vpop.f32.mrf.mxu0
        %v3053 = vadd.f32 0.0, %v3052
        %v3054 = vpop.f32.mrf.mxu0
        %v3055 = vpop.f32.mrf.mxu0
        %v3056 = vadd.f32 0.0, %v3055
        %v3057 = vpop.f32.mrf.mxu0
        %3058 = vmatprep.mubr.bf16.mxu0 0
        %3059 = vmatmul.mubr.bf16.gmra.mxu0 %v2946
        %v3060 = vpop.f32.mrf.mxu0
        %v3061 = vadd.f32 0.0, %v3060
        %v3062 = vpop.f32.mrf.mxu0
        %v3063 = vpop.f32.mrf.mxu0
        %v3064 = vadd.f32 0.0, %v3063
        %v3065 = vpop.f32.mrf.mxu0
        %3066 = vmatprep.mubr.bf16.mxu0 0
        %3067 = vmatmul.mubr.bf16.gmra.mxu0 %v2949
        %v3068 = vpop.f32.mrf.mxu0
        %v3069 = vadd.f32 0.0, %v3068
        %v3070 = vpop.f32.mrf.mxu0
        %v3071 = vpop.f32.mrf.mxu0
        %v3072 = vadd.f32 0.0, %v3071
        %v3073 = vpop.f32.mrf.mxu0
        %3074 = vmatprep.mubr.bf16.mxu0 0
        %3075 = vmatmul.mubr.bf16.gmra.mxu0 %v2952
        %v3076 = vpop.f32.mrf.mxu0
        %v3077 = vadd.f32 0.0, %v3076
        %v3078 = vpop.f32.mrf.mxu0
        %v3079 = vpop.f32.mrf.mxu0
        %v3080 = vpop.f32.mrf.mxu0
        %3081 = vdwg.mxu0
        %v3082 = vadd.f32 %v2670, %v2989
        %v3083 = vadd.f32 %v2671, %v2992
        %v3084 = vadd.f32 %v2672, %v2997
        %v3085 = vadd.f32 %v2673, %v3000
        %v3086 = vadd.f32 %v2674, %v3005
        %v3087 = vadd.f32 %v2675, %v3008
        %v3088 = vadd.f32 %v2676, %v3013
        %v3089 = vadd.f32 %v2677, %v3016
        %v3090 = vadd.f32 %v2678, %v3021
        %v3091 = vadd.f32 %v2679, %v3024
        %v3092 = vadd.f32 %v2680, %v3029
        %v3093 = vadd.f32 %v2681, %v3032
        %v3094 = vadd.f32 %v2682, %v3037
        %v3095 = vadd.f32 %v2683, %v3040
        %v3096 = vadd.f32 %v2684, %v3045
        %v3097 = vadd.f32 %v2685, %v3048
        %v3098 = vadd.f32 %v2686, %v3053
        %v3099 = vadd.f32 %v2687, %v3056
        %v3100 = vadd.f32 %v2688, %v3061
        %v3101 = vadd.f32 %v2689, %v3064
        %v3102 = vadd.f32 %v2690, %v3069
        %v3103 = vadd.f32 %v2691, %v3072
        %v3104 = vadd.f32 %v2692, %v3077
        %v3105 = vld [vmem:[#allocation2 + $0x10] sm:$0x8]
        %s3106 = scalar_lea.vmem %s2, 256
        %v3107 = vld [vmem:[%s3106] sm:$0xf]
        %v3108 = vld [vmem:[%s3106 + $0x4] sm:$0xf]
        %v3109 = vld [vmem:[%s3106 + $0x8] sm:$0xf]
        %v3110 = vld [vmem:[%s3106 + $0xc] sm:$0xf]
        %v3111 = vld [vmem:[%s3106 + $0x10] sm:$0xf]
        %v3112 = vld [vmem:[%s3106 + $0x14] sm:$0xf]
        %v3113 = vld [vmem:[%s3106 + $0x18] sm:$0xf]
        %v3114 = vld [vmem:[%s3106 + $0x1c] sm:$0xf]
        %v3116 = vunpack.c.l.b16 %v3105
        %v3117 = vpack.c.b16 %v2751, %v3116
        %vm3118 = vcmask 1044480
        %v3119 = vrot.slane %v3117, 3
        %v3120 = vrot.slane %v2775, 3
        %v3121 = vsel %vm3118, %v3119, %v3120
        %v3122 = vrot.slane %v2776, 3
        %v3123 = vsel %vm3118, %v3120, %v3122
        %v3124 = vrot.slane %v2777, 3
        %v3125 = vsel %vm3118, %v3122, %v3124
        %v3126 = vrot.slane %v2778, 3
        %v3127 = vsel %vm3118, %v3124, %v3126
        %v3128 = vrot.slane %v2779, 3
        %v3129 = vsel %vm3118, %v3126, %v3128
        %v3130 = vrot.slane %v2780, 3
        %v3131 = vsel %vm3118, %v3128, %v3130
        %v3132 = vrot.slane %v2781, 3
        %v3133 = vsel %vm3118, %v3130, %v3132
        %v3134 = vrot.slane %v2782, 3
        %v3135 = vsel %vm3118, %v3132, %v3134
        %v3136 = vrot.slane %v2783, 3
        %v3137 = vsel %vm3118, %v3134, %v3136
        %v3138 = vrot.slane %v2784, 3
        %v3139 = vsel %vm3118, %v3136, %v3138
        %v3140 = vrot.slane %v2785, 3
        %v3141 = vsel %vm3118, %v3138, %v3140
        %v3150 = vunpack.c.l.b16 %v3107
        %v3151 = vunpack.c.l.b16 %v3108
        %v3152 = vunpack.c.l.b16 %v3109
        %v3153 = vunpack.c.l.b16 %v3110
        %v3154 = vunpack.c.l.b16 %v3111
        %v3155 = vunpack.c.l.b16 %v3112
        %v3156 = vunpack.c.l.b16 %v3113
        %v3157 = vunpack.c.l.b16 %v3114
        %v3158 = vpack.c.b16 %v3151, %v3150
        %v3159 = vpack.c.b16 %v3153, %v3152
        %v3160 = vpack.c.b16 %v3155, %v3154
        %v3161 = vpack.c.b16 %v3157, %v3156
        %v3167 = vsel %vm872, %v3121, 0
        %v3170 = vsel %vm872, %v3123, 0
        %v3173 = vsel %vm872, %v3125, 0
        %v3176 = vsel %vm872, %v3127, 0
        %v3179 = vsel %vm872, %v3129, 0
        %v3182 = vsel %vm872, %v3131, 0
        %v3185 = vsel %vm872, %v3133, 0
        %v3188 = vsel %vm872, %v3135, 0
        %v3191 = vsel %vm872, %v3137, 0
        %v3194 = vsel %vm872, %v3139, 0
        %v3197 = vsel %vm872, %v3141, 0
        %v3200 = vsel %vm872, %v3140, 0
        %3202 = vmatprep.subr.bf16.mxu0 0
        %3203 = vmatpush1.bf16.msra.mxu0 0
        %3204 = vmatprep.subr.bf16.mxu0 0
        %3205 = vmatpush1.bf16.msra.mxu0 0
        %3206 = vmatprep.subr.bf16.mxu0 0
        %3207 = vmatpush1.bf16.msra.mxu0 0
        %3208 = vmatprep.subr.bf16.mxu0 0
        %3209 = vmatpush1.bf16.msra.mxu0 0
        %3210 = vmatprep.subr.bf16.mxu0 0
        %3211 = vmatpush1.bf16.msra.mxu0 %v3161
        %3212 = vmatprep.subr.bf16.mxu0 0
        %3213 = vmatpush1.bf16.msra.mxu0 %v3160
        %3214 = vmatprep.subr.bf16.mxu0 0
        %3215 = vmatpush1.bf16.msra.mxu0 %v3159
        %3216 = vmatprep.subr.bf16.mxu0 0
        %3217 = vmatpush1.bf16.msra.mxu0 %v3158
        %3218 = vmatprep.subr.bf16.mxu0 0
        %3219 = vmatpush2.bf16.msra.mxu0 0
        %3220 = vmatprep.subr.bf16.mxu0 0
        %3221 = vmatpush2.bf16.msra.mxu0 0
        %3222 = vmatprep.subr.bf16.mxu0 0
        %3223 = vmatpush2.bf16.msra.mxu0 0
        %3224 = vmatprep.subr.bf16.mxu0 0
        %3225 = vmatpush2.bf16.msra.mxu0 0
        %3226 = vmatprep.subr.bf16.mxu0 0
        %3227 = vmatpush2.bf16.msra.mxu0 0
        %3228 = vmatprep.subr.bf16.mxu0 0
        %3229 = vmatpush2.bf16.msra.mxu0 0
        %3230 = vmatprep.subr.bf16.mxu0 0
        %3231 = vmatpush2.bf16.msra.mxu0 0
        %3232 = vmatprep.subr.bf16.mxu0 0
        %3233 = vmatpush2.bf16.msra.mxu0 0
        %3234 = vmatprep.mubr.bf16.mxu0 0
        %3235 = vmatmul.mubr.bf16.gmra.mxu0 %v3167
        %v3236 = vpop.f32.mrf.mxu0
        %v3237 = vadd.f32 0.0, %v3236
        %v3238 = vpop.f32.mrf.mxu0
        %v3239 = vpop.f32.mrf.mxu0
        %v3240 = vadd.f32 0.0, %v3239
        %v3241 = vpop.f32.mrf.mxu0
        %3242 = vmatprep.mubr.bf16.mxu0 0
        %3243 = vmatmul.mubr.bf16.gmra.mxu0 %v3170
        %v3244 = vpop.f32.mrf.mxu0
        %v3245 = vadd.f32 0.0, %v3244
        %v3246 = vpop.f32.mrf.mxu0
        %v3247 = vpop.f32.mrf.mxu0
        %v3248 = vadd.f32 0.0, %v3247
        %v3249 = vpop.f32.mrf.mxu0
        %3250 = vmatprep.mubr.bf16.mxu0 0
        %3251 = vmatmul.mubr.bf16.gmra.mxu0 %v3173
        %v3252 = vpop.f32.mrf.mxu0
        %v3253 = vadd.f32 0.0, %v3252
        %v3254 = vpop.f32.mrf.mxu0
        %v3255 = vpop.f32.mrf.mxu0
        %v3256 = vadd.f32 0.0, %v3255
        %v3257 = vpop.f32.mrf.mxu0
        %3258 = vmatprep.mubr.bf16.mxu0 0
        %3259 = vmatmul.mubr.bf16.gmra.mxu0 %v3176
        %v3260 = vpop.f32.mrf.mxu0
        %v3261 = vadd.f32 0.0, %v3260
        %v3262 = vpop.f32.mrf.mxu0
        %v3263 = vpop.f32.mrf.mxu0
        %v3264 = vadd.f32 0.0, %v3263
        %v3265 = vpop.f32.mrf.mxu0
        %3266 = vmatprep.mubr.bf16.mxu0 0
        %3267 = vmatmul.mubr.bf16.gmra.mxu0 %v3179
        %v3268 = vpop.f32.mrf.mxu0
        %v3269 = vadd.f32 0.0, %v3268
        %v3270 = vpop.f32.mrf.mxu0
        %v3271 = vpop.f32.mrf.mxu0
        %v3272 = vadd.f32 0.0, %v3271
        %v3273 = vpop.f32.mrf.mxu0
        %3274 = vmatprep.mubr.bf16.mxu0 0
        %3275 = vmatmul.mubr.bf16.gmra.mxu0 %v3182
        %v3276 = vpop.f32.mrf.mxu0
        %v3277 = vadd.f32 0.0, %v3276
        %v3278 = vpop.f32.mrf.mxu0
        %v3279 = vpop.f32.mrf.mxu0
        %v3280 = vadd.f32 0.0, %v3279
        %v3281 = vpop.f32.mrf.mxu0
        %3282 = vmatprep.mubr.bf16.mxu0 0
        %3283 = vmatmul.mubr.bf16.gmra.mxu0 %v3185
        %v3284 = vpop.f32.mrf.mxu0
        %v3285 = vadd.f32 0.0, %v3284
        %v3286 = vpop.f32.mrf.mxu0
        %v3287 = vpop.f32.mrf.mxu0
        %v3288 = vadd.f32 0.0, %v3287
        %v3289 = vpop.f32.mrf.mxu0
        %3290 = vmatprep.mubr.bf16.mxu0 0
        %3291 = vmatmul.mubr.bf16.gmra.mxu0 %v3188
        %v3292 = vpop.f32.mrf.mxu0
        %v3293 = vadd.f32 0.0, %v3292
        %v3294 = vpop.f32.mrf.mxu0
        %v3295 = vpop.f32.mrf.mxu0
        %v3296 = vadd.f32 0.0, %v3295
        %v3297 = vpop.f32.mrf.mxu0
        %3298 = vmatprep.mubr.bf16.mxu0 0
        %3299 = vmatmul.mubr.bf16.gmra.mxu0 %v3191
        %v3300 = vpop.f32.mrf.mxu0
        %v3301 = vadd.f32 0.0, %v3300
        %v3302 = vpop.f32.mrf.mxu0
        %v3303 = vpop.f32.mrf.mxu0
        %v3304 = vadd.f32 0.0, %v3303
        %v3305 = vpop.f32.mrf.mxu0
        %3306 = vmatprep.mubr.bf16.mxu0 0
        %3307 = vmatmul.mubr.bf16.gmra.mxu0 %v3194
        %v3308 = vpop.f32.mrf.mxu0
        %v3309 = vadd.f32 0.0, %v3308
        %v3310 = vpop.f32.mrf.mxu0
        %v3311 = vpop.f32.mrf.mxu0
        %v3312 = vadd.f32 0.0, %v3311
        %v3313 = vpop.f32.mrf.mxu0
        %3314 = vmatprep.mubr.bf16.mxu0 0
        %3315 = vmatmul.mubr.bf16.gmra.mxu0 %v3197
        %v3316 = vpop.f32.mrf.mxu0
        %v3317 = vadd.f32 0.0, %v3316
        %v3318 = vpop.f32.mrf.mxu0
        %v3319 = vpop.f32.mrf.mxu0
        %v3320 = vadd.f32 0.0, %v3319
        %v3321 = vpop.f32.mrf.mxu0
        %3322 = vmatprep.mubr.bf16.mxu0 0
        %3323 = vmatmul.mubr.bf16.gmra.mxu0 %v3200
        %v3324 = vpop.f32.mrf.mxu0
        %v3325 = vadd.f32 0.0, %v3324
        %v3326 = vpop.f32.mrf.mxu0
        %v3327 = vpop.f32.mrf.mxu0
        %v3328 = vpop.f32.mrf.mxu0
        %3329 = vdwg.mxu0
        %v3330 = vadd.f32 %v3082, %v3237
        %v3331 = vadd.f32 %v3083, %v3240
        %v3332 = vadd.f32 %v3084, %v3245
        %v3333 = vadd.f32 %v3085, %v3248
        %v3334 = vadd.f32 %v3086, %v3253
        %v3335 = vadd.f32 %v3087, %v3256
        %v3336 = vadd.f32 %v3088, %v3261
        %v3337 = vadd.f32 %v3089, %v3264
        %v3338 = vadd.f32 %v3090, %v3269
        %v3339 = vadd.f32 %v3091, %v3272
        %v3340 = vadd.f32 %v3092, %v3277
        %v3341 = vadd.f32 %v3093, %v3280
        %v3342 = vadd.f32 %v3094, %v3285
        %v3343 = vadd.f32 %v3095, %v3288
        %v3344 = vadd.f32 %v3096, %v3293
        %v3345 = vadd.f32 %v3097, %v3296
        %v3346 = vadd.f32 %v3098, %v3301
        %v3347 = vadd.f32 %v3099, %v3304
        %v3348 = vadd.f32 %v3100, %v3309
        %v3349 = vadd.f32 %v3101, %v3312
        %v3350 = vadd.f32 %v3102, %v3317
        %v3351 = vadd.f32 %v3103, %v3320
        %v3352 = vadd.f32 %v3104, %v3325
        %v3353 = vlaneseq
        %v3354 = vshrl.u32 %v3353, 7
        %v3355 = vadd.s32 %v3354, 8
        %v3356 = vadd.s32 %v3354, 16
        %v3357 = vadd.s32 %v3354, 24
        %v3358 = vadd.s32 %v3354, 32
        %v3359 = vadd.s32 %v3354, 40
        %v3360 = vadd.s32 %v3354, 48
        %v3361 = vadd.s32 %v3354, 56
        %v3362 = vadd.s32 %v3354, 64
        %v3363 = vadd.s32 %v3354, 72
        %v3364 = vadd.s32 %v3354, 80
        %v3365 = vadd.s32 %v3354, 88
        %v3366 = vadd.s32 %v3354, 96
        %v3367 = vadd.s32 %v3354, 104
        %v3368 = vadd.s32 %v3354, 112
        %v3369 = vadd.s32 %v3354, 120
        %v3370 = vadd.s32 %v3354, 128
        %v3371 = vadd.s32 %v3354, 136
        %v3372 = vadd.s32 %v3354, 144
        %v3373 = vadd.s32 %v3354, 152
        %v3374 = vadd.s32 %v3354, 160
        %v3375 = vadd.s32 %v3354, 168
        %v3376 = vadd.s32 %v3354, 176
        %p3377 = scmp.eq.s32.totalorder %s25, 0
        %s3378 = scalar_select %p3377, 18, 0
        %p3379 = scmp.eq.s32.totalorder %s25, 1
        %s3380 = scalar_select %p3379, 162, 180
        %v3381 = vld [vmem:[%s0] sm:$0xff]
        %v3382 = vld [vmem:[%s0 + $0x8] sm:$0xff]
        %v3383 = vld [vmem:[%s0 + $0x10] sm:$0xff]
        %v3384 = vld [vmem:[%s0 + $0x18] sm:$0xff]
        %v3385 = vld [vmem:[%s0 + $0x20] sm:$0xff]
        %v3386 = vld [vmem:[%s0 + $0x28] sm:$0xff]
        %v3387 = vld [vmem:[%s0 + $0x30] sm:$0xff]
        %v3388 = vld [vmem:[%s0 + $0x38] sm:$0xff]
        %v3389 = vld [vmem:[%s0 + $0x40] sm:$0xff]
        %v3390 = vld [vmem:[%s0 + $0x48] sm:$0xff]
        %v3391 = vld [vmem:[%s0 + $0x50] sm:$0xff]
        %v3392 = vld [vmem:[%s0 + $0x58] sm:$0xff]
        %v3393 = vld [vmem:[%s0 + $0x60] sm:$0xff]
        %v3394 = vld [vmem:[%s0 + $0x68] sm:$0xff]
        %v3395 = vld [vmem:[%s0 + $0x70] sm:$0xff]
        %v3396 = vld [vmem:[%s0 + $0x78] sm:$0xff]
        %v3397 = vld [vmem:[%s0 + $0x80] sm:$0xff]
        %v3398 = vld [vmem:[%s0 + $0x88] sm:$0xff]
        %v3399 = vld [vmem:[%s0 + $0x90] sm:$0xff]
        %v3400 = vld [vmem:[%s0 + $0x98] sm:$0xff]
        %v3401 = vld [vmem:[%s0 + $0xa0] sm:$0xff]
        %v3402 = vld [vmem:[%s0 + $0xa8] sm:$0xff]
        %v3403 = vld [vmem:[%s0 + $0xb0] sm:$0xf]
        %vm3404 = vcmp.gt.f32.partialorder %v3381, 0.5
        %vm3405 = vcmp.gt.f32.partialorder %v3382, 0.5
        %vm3406 = vcmp.gt.f32.partialorder %v3383, 0.5
        %vm3407 = vcmp.gt.f32.partialorder %v3384, 0.5
        %vm3408 = vcmp.gt.f32.partialorder %v3385, 0.5
        %vm3409 = vcmp.gt.f32.partialorder %v3386, 0.5
        %vm3410 = vcmp.gt.f32.partialorder %v3387, 0.5
        %vm3411 = vcmp.gt.f32.partialorder %v3388, 0.5
        %vm3412 = vcmp.gt.f32.partialorder %v3389, 0.5
        %vm3413 = vcmp.gt.f32.partialorder %v3390, 0.5
        %vm3414 = vcmp.gt.f32.partialorder %v3391, 0.5
        %vm3415 = vcmp.gt.f32.partialorder %v3392, 0.5
        %vm3416 = vcmp.gt.f32.partialorder %v3393, 0.5
        %vm3417 = vcmp.gt.f32.partialorder %v3394, 0.5
        %vm3418 = vcmp.gt.f32.partialorder %v3395, 0.5
        %vm3419 = vcmp.gt.f32.partialorder %v3396, 0.5
        %vm3420 = vcmp.gt.f32.partialorder %v3397, 0.5
        %vm3421 = vcmp.gt.f32.partialorder %v3398, 0.5
        %vm3422 = vcmp.gt.f32.partialorder %v3399, 0.5
        %vm3423 = vcmp.gt.f32.partialorder %v3400, 0.5
        %vm3424 = vcmp.gt.f32.partialorder %v3401, 0.5
        %vm3425 = vcmp.gt.f32.partialorder %v3402, 0.5
        %vm3426 = vcmp.gt.f32.partialorder %v3403, 0.5
        %v3427 = vstv %s3378
        %vm3428 = vcmp.ge.s32.totalorder %v3354, %v3427
        %vm3429 = vcmp.ge.s32.totalorder %v3355, %v3427
        %vm3430 = vcmp.ge.s32.totalorder %v3356, %v3427
        %vm3431 = vcmp.ge.s32.totalorder %v3357, %v3427
        %vm3432 = vcmp.ge.s32.totalorder %v3358, %v3427
        %vm3433 = vcmp.ge.s32.totalorder %v3359, %v3427
        %vm3434 = vcmp.ge.s32.totalorder %v3360, %v3427
        %vm3435 = vcmp.ge.s32.totalorder %v3361, %v3427
        %vm3436 = vcmp.ge.s32.totalorder %v3362, %v3427
        %vm3437 = vcmp.ge.s32.totalorder %v3363, %v3427
        %vm3438 = vcmp.ge.s32.totalorder %v3364, %v3427
        %vm3439 = vcmp.ge.s32.totalorder %v3365, %v3427
        %vm3440 = vcmp.ge.s32.totalorder %v3366, %v3427
        %vm3441 = vcmp.ge.s32.totalorder %v3367, %v3427
        %vm3442 = vcmp.ge.s32.totalorder %v3368, %v3427
        %vm3443 = vcmp.ge.s32.totalorder %v3369, %v3427
        %vm3444 = vcmp.ge.s32.totalorder %v3370, %v3427
        %vm3445 = vcmp.ge.s32.totalorder %v3371, %v3427
        %vm3446 = vcmp.ge.s32.totalorder %v3372, %v3427
        %vm3447 = vcmp.ge.s32.totalorder %v3373, %v3427
        %vm3448 = vcmp.ge.s32.totalorder %v3374, %v3427
        %vm3449 = vcmp.ge.s32.totalorder %v3375, %v3427
        %vm3450 = vcmp.ge.s32.totalorder %v3376, %v3427
        %v3451 = vstv %s3380
        %vm3452 = vcmp.lt.s32.totalorder %v3354, %v3451
        %vm3453 = vcmp.lt.s32.totalorder %v3355, %v3451
        %vm3454 = vcmp.lt.s32.totalorder %v3356, %v3451
        %vm3455 = vcmp.lt.s32.totalorder %v3357, %v3451
        %vm3456 = vcmp.lt.s32.totalorder %v3358, %v3451
        %vm3457 = vcmp.lt.s32.totalorder %v3359, %v3451
        %vm3458 = vcmp.lt.s32.totalorder %v3360, %v3451
        %vm3459 = vcmp.lt.s32.totalorder %v3361, %v3451
        %vm3460 = vcmp.lt.s32.totalorder %v3362, %v3451
        %vm3461 = vcmp.lt.s32.totalorder %v3363, %v3451
        %vm3462 = vcmp.lt.s32.totalorder %v3364, %v3451
        %vm3463 = vcmp.lt.s32.totalorder %v3365, %v3451
        %vm3464 = vcmp.lt.s32.totalorder %v3366, %v3451
        %vm3465 = vcmp.lt.s32.totalorder %v3367, %v3451
        %vm3466 = vcmp.lt.s32.totalorder %v3368, %v3451
        %vm3467 = vcmp.lt.s32.totalorder %v3369, %v3451
        %vm3468 = vcmp.lt.s32.totalorder %v3370, %v3451
        %vm3469 = vcmp.lt.s32.totalorder %v3371, %v3451
        %vm3470 = vcmp.lt.s32.totalorder %v3372, %v3451
        %vm3471 = vcmp.lt.s32.totalorder %v3373, %v3451
        %vm3472 = vcmp.lt.s32.totalorder %v3374, %v3451
        %vm3473 = vcmp.lt.s32.totalorder %v3375, %v3451
        %vm3474 = vcmp.lt.s32.totalorder %v3376, %v3451
        %vm3475 = vmand %vm3428, %vm3452
        %vm3476 = vmand %vm3429, %vm3453
        %vm3477 = vmand %vm3430, %vm3454
        %vm3478 = vmand %vm3431, %vm3455
        %vm3479 = vmand %vm3432, %vm3456
        %vm3480 = vmand %vm3433, %vm3457
        %vm3481 = vmand %vm3434, %vm3458
        %vm3482 = vmand %vm3435, %vm3459
        %vm3483 = vmand %vm3436, %vm3460
        %vm3484 = vmand %vm3437, %vm3461
        %vm3485 = vmand %vm3438, %vm3462
        %vm3486 = vmand %vm3439, %vm3463
        %vm3487 = vmand %vm3440, %vm3464
        %vm3488 = vmand %vm3441, %vm3465
        %vm3489 = vmand %vm3442, %vm3466
        %vm3490 = vmand %vm3443, %vm3467
        %vm3491 = vmand %vm3444, %vm3468
        %vm3492 = vmand %vm3445, %vm3469
        %vm3493 = vmand %vm3446, %vm3470
        %vm3494 = vmand %vm3447, %vm3471
        %vm3495 = vmand %vm3448, %vm3472
        %vm3496 = vmand %vm3449, %vm3473
        %vm3497 = vmand %vm3450, %vm3474
        %vm3498 = vmand %vm3404, %vm3475
        %vm3499 = vmand %vm3405, %vm3476
        %vm3500 = vmand %vm3406, %vm3477
        %vm3501 = vmand %vm3407, %vm3478
        %vm3502 = vmand %vm3408, %vm3479
        %vm3503 = vmand %vm3409, %vm3480
        %vm3504 = vmand %vm3410, %vm3481
        %vm3505 = vmand %vm3411, %vm3482
        %vm3506 = vmand %vm3412, %vm3483
        %vm3507 = vmand %vm3413, %vm3484
        %vm3508 = vmand %vm3414, %vm3485
        %vm3509 = vmand %vm3415, %vm3486
        %vm3510 = vmand %vm3416, %vm3487
        %vm3511 = vmand %vm3417, %vm3488
        %vm3512 = vmand %vm3418, %vm3489
        %vm3513 = vmand %vm3419, %vm3490
        %vm3514 = vmand %vm3420, %vm3491
        %vm3515 = vmand %vm3421, %vm3492
        %vm3516 = vmand %vm3422, %vm3493
        %vm3517 = vmand %vm3423, %vm3494
        %vm3518 = vmand %vm3424, %vm3495
        %vm3519 = vmand %vm3425, %vm3496
        %vm3520 = vmand %vm3426, %vm3497
        %v3521 = vld [vmem:[%s3] sm:$0x1]
        %v3523 = vlaneseq
        %v3524 = vshrl.u32 %v3523, 7
        %v3525 = vsub.s32 0, %v3524
        %v3526 = vrot.slane %v3521, %v3525
        %v3528 = vadd.f32 %v3330, %v3526
        %v3529 = vadd.f32 %v3331, %v3526
        %v3530 = vadd.f32 %v3332, %v3526
        %v3531 = vadd.f32 %v3333, %v3526
        %v3532 = vadd.f32 %v3334, %v3526
        %v3533 = vadd.f32 %v3335, %v3526
        %v3534 = vadd.f32 %v3336, %v3526
        %v3535 = vadd.f32 %v3337, %v3526
        %v3536 = vadd.f32 %v3338, %v3526
        %v3537 = vadd.f32 %v3339, %v3526
        %v3538 = vadd.f32 %v3340, %v3526
        %v3539 = vadd.f32 %v3341, %v3526
        %v3540 = vadd.f32 %v3342, %v3526
        %v3541 = vadd.f32 %v3343, %v3526
        %v3542 = vadd.f32 %v3344, %v3526
        %v3543 = vadd.f32 %v3345, %v3526
        %v3544 = vadd.f32 %v3346, %v3526
        %v3545 = vadd.f32 %v3347, %v3526
        %v3546 = vadd.f32 %v3348, %v3526
        %v3547 = vadd.f32 %v3349, %v3526
        %v3548 = vadd.f32 %v3350, %v3526
        %v3549 = vadd.f32 %v3351, %v3526
        %v3550 = vadd.f32 %v3352, %v3526
        %v3551 = vmax.f32 %v3528, 0.0
        %v3552 = vmax.f32 %v3529, 0.0
        %v3553 = vmax.f32 %v3530, 0.0
        %v3554 = vmax.f32 %v3531, 0.0
        %v3555 = vmax.f32 %v3532, 0.0
        %v3556 = vmax.f32 %v3533, 0.0
        %v3557 = vmax.f32 %v3534, 0.0
        %v3558 = vmax.f32 %v3535, 0.0
        %v3559 = vmax.f32 %v3536, 0.0
        %v3560 = vmax.f32 %v3537, 0.0
        %v3561 = vmax.f32 %v3538, 0.0
        %v3562 = vmax.f32 %v3539, 0.0
        %v3563 = vmax.f32 %v3540, 0.0
        %v3564 = vmax.f32 %v3541, 0.0
        %v3565 = vmax.f32 %v3542, 0.0
        %v3566 = vmax.f32 %v3543, 0.0
        %v3567 = vmax.f32 %v3544, 0.0
        %v3568 = vmax.f32 %v3545, 0.0
        %v3569 = vmax.f32 %v3546, 0.0
        %v3570 = vmax.f32 %v3547, 0.0
        %v3571 = vmax.f32 %v3548, 0.0
        %v3572 = vmax.f32 %v3549, 0.0
        %v3573 = vmax.f32 %v3550, 0.0
        %v3574 = vsel %vm3498, 1, 0
        %v3575 = vsel %vm3499, 1, 0
        %v3576 = vsel %vm3500, 1, 0
        %v3577 = vsel %vm3501, 1, 0
        %v3578 = vsel %vm3502, 1, 0
        %v3579 = vsel %vm3503, 1, 0
        %v3580 = vsel %vm3504, 1, 0
        %v3581 = vsel %vm3505, 1, 0
        %v3582 = vsel %vm3506, 1, 0
        %v3583 = vsel %vm3507, 1, 0
        %v3584 = vsel %vm3508, 1, 0
        %v3585 = vsel %vm3509, 1, 0
        %v3586 = vsel %vm3510, 1, 0
        %v3587 = vsel %vm3511, 1, 0
        %v3588 = vsel %vm3512, 1, 0
        %v3589 = vsel %vm3513, 1, 0
        %v3590 = vsel %vm3514, 1, 0
        %v3591 = vsel %vm3515, 1, 0
        %v3592 = vsel %vm3516, 1, 0
        %v3593 = vsel %vm3517, 1, 0
        %v3594 = vsel %vm3518, 1, 0
        %v3595 = vsel %vm3519, 1, 0
        %v3596 = vsel %vm3520, 1, 0
        %3597 = vset.pattern.permute.xlu0 0
        %3598 = vperm.xlu0 %3597, %v3574
        %v3599 = vpop.permute.xlu0 %3598
        %3600 = vset.pattern.permute.xlu0 0
        %3601 = vperm.xlu0 %3600, %v3575
        %v3602 = vpop.permute.xlu0 %3601
        %3603 = vset.pattern.permute.xlu0 0
        %3604 = vperm.xlu0 %3603, %v3576
        %v3605 = vpop.permute.xlu0 %3604
        %3606 = vset.pattern.permute.xlu0 0
        %3607 = vperm.xlu0 %3606, %v3577
        %v3608 = vpop.permute.xlu0 %3607
        %3609 = vset.pattern.permute.xlu0 0
        %3610 = vperm.xlu0 %3609, %v3578
        %v3611 = vpop.permute.xlu0 %3610
        %3612 = vset.pattern.permute.xlu0 0
        %3613 = vperm.xlu0 %3612, %v3579
        %v3614 = vpop.permute.xlu0 %3613
        %3615 = vset.pattern.permute.xlu0 0
        %3616 = vperm.xlu0 %3615, %v3580
        %v3617 = vpop.permute.xlu0 %3616
        %3618 = vset.pattern.permute.xlu0 0
        %3619 = vperm.xlu0 %3618, %v3581
        %v3620 = vpop.permute.xlu0 %3619
        %3621 = vset.pattern.permute.xlu0 0
        %3622 = vperm.xlu0 %3621, %v3582
        %v3623 = vpop.permute.xlu0 %3622
        %3624 = vset.pattern.permute.xlu0 0
        %3625 = vperm.xlu0 %3624, %v3583
        %v3626 = vpop.permute.xlu0 %3625
        %3627 = vset.pattern.permute.xlu0 0
        %3628 = vperm.xlu0 %3627, %v3584
        %v3629 = vpop.permute.xlu0 %3628
        %3630 = vset.pattern.permute.xlu0 0
        %3631 = vperm.xlu0 %3630, %v3585
        %v3632 = vpop.permute.xlu0 %3631
        %3633 = vset.pattern.permute.xlu0 0
        %3634 = vperm.xlu0 %3633, %v3586
        %v3635 = vpop.permute.xlu0 %3634
        %3636 = vset.pattern.permute.xlu0 0
        %3637 = vperm.xlu0 %3636, %v3587
        %v3638 = vpop.permute.xlu0 %3637
        %3639 = vset.pattern.permute.xlu0 0
        %3640 = vperm.xlu0 %3639, %v3588
        %v3641 = vpop.permute.xlu0 %3640
        %3642 = vset.pattern.permute.xlu0 0
        %3643 = vperm.xlu0 %3642, %v3589
        %v3644 = vpop.permute.xlu0 %3643
        %3645 = vset.pattern.permute.xlu0 0
        %3646 = vperm.xlu0 %3645, %v3590
        %v3647 = vpop.permute.xlu0 %3646
        %3648 = vset.pattern.permute.xlu0 0
        %3649 = vperm.xlu0 %3648, %v3591
        %v3650 = vpop.permute.xlu0 %3649
        %3651 = vset.pattern.permute.xlu0 0
        %3652 = vperm.xlu0 %3651, %v3592
        %v3653 = vpop.permute.xlu0 %3652
        %3654 = vset.pattern.permute.xlu0 0
        %3655 = vperm.xlu0 %3654, %v3593
        %v3656 = vpop.permute.xlu0 %3655
        %3657 = vset.pattern.permute.xlu0 0
        %3658 = vperm.xlu0 %3657, %v3594
        %v3659 = vpop.permute.xlu0 %3658
        %3660 = vset.pattern.permute.xlu0 0
        %3661 = vperm.xlu0 %3660, %v3595
        %v3662 = vpop.permute.xlu0 %3661
        %3663 = vset.pattern.permute.xlu0 0
        %3664 = vperm.xlu0 %3663, %v3596
        %v3665 = vpop.permute.xlu0 %3664
        %vm3666 = vcmp.eq.s32.totalorder %v3599, 1
        %vm3667 = vcmp.eq.s32.totalorder %v3602, 1
        %vm3668 = vcmp.eq.s32.totalorder %v3605, 1
        %vm3669 = vcmp.eq.s32.totalorder %v3608, 1
        %vm3670 = vcmp.eq.s32.totalorder %v3611, 1
        %vm3671 = vcmp.eq.s32.totalorder %v3614, 1
        %vm3672 = vcmp.eq.s32.totalorder %v3617, 1
        %vm3673 = vcmp.eq.s32.totalorder %v3620, 1
        %vm3674 = vcmp.eq.s32.totalorder %v3623, 1
        %vm3675 = vcmp.eq.s32.totalorder %v3626, 1
        %vm3676 = vcmp.eq.s32.totalorder %v3629, 1
        %vm3677 = vcmp.eq.s32.totalorder %v3632, 1
        %vm3678 = vcmp.eq.s32.totalorder %v3635, 1
        %vm3679 = vcmp.eq.s32.totalorder %v3638, 1
        %vm3680 = vcmp.eq.s32.totalorder %v3641, 1
        %vm3681 = vcmp.eq.s32.totalorder %v3644, 1
        %vm3682 = vcmp.eq.s32.totalorder %v3647, 1
        %vm3683 = vcmp.eq.s32.totalorder %v3650, 1
        %vm3684 = vcmp.eq.s32.totalorder %v3653, 1
        %vm3685 = vcmp.eq.s32.totalorder %v3656, 1
        %vm3686 = vcmp.eq.s32.totalorder %v3659, 1
        %vm3687 = vcmp.eq.s32.totalorder %v3662, 1
        %vm3688 = vcmp.eq.s32.totalorder %v3665, 1
        %v3689 = vsel %vm3666, %v3551, 0.0
        %v3690 = vsel %vm3667, %v3552, 0.0
        %v3691 = vsel %vm3668, %v3553, 0.0
        %v3692 = vsel %vm3669, %v3554, 0.0
        %v3693 = vsel %vm3670, %v3555, 0.0
        %v3694 = vsel %vm3671, %v3556, 0.0
        %v3695 = vsel %vm3672, %v3557, 0.0
        %v3696 = vsel %vm3673, %v3558, 0.0
        %v3697 = vsel %vm3674, %v3559, 0.0
        %v3698 = vsel %vm3675, %v3560, 0.0
        %v3699 = vsel %vm3676, %v3561, 0.0
        %v3700 = vsel %vm3677, %v3562, 0.0
        %v3701 = vsel %vm3678, %v3563, 0.0
        %v3702 = vsel %vm3679, %v3564, 0.0
        %v3703 = vsel %vm3680, %v3565, 0.0
        %v3704 = vsel %vm3681, %v3566, 0.0
        %v3705 = vsel %vm3682, %v3567, 0.0
        %v3706 = vsel %vm3683, %v3568, 0.0
        %v3707 = vsel %vm3684, %v3569, 0.0
        %v3708 = vsel %vm3685, %v3570, 0.0
        %v3709 = vsel %vm3686, %v3571, 0.0
        %v3710 = vsel %vm3687, %v3572, 0.0
        %v3711 = vsel %vm3688, %v3573, 0.0
        %v3712 = vpack.c.bf16 %v3690, %v3689
        %v3713 = vpack.c.bf16 %v3692, %v3691
        %v3714 = vpack.c.bf16 %v3694, %v3693
        %v3715 = vpack.c.bf16 %v3696, %v3695
        %v3716 = vpack.c.bf16 %v3698, %v3697
        %v3717 = vpack.c.bf16 %v3700, %v3699
        %v3718 = vpack.c.bf16 %v3702, %v3701
        %v3719 = vpack.c.bf16 %v3704, %v3703
        %v3720 = vpack.c.bf16 %v3706, %v3705
        %v3721 = vpack.c.bf16 %v3708, %v3707
        %v3722 = vpack.c.bf16 %v3710, %v3709
        %v3723 = vpack.c.bf16 %v3711, %v3711
        %v3736 = vunpack.c.l.b16 %v3712
        %v3737 = vunpack.c.h.b16 %v3712
        %v3738 = vunpack.c.l.b16 %v3713
        %v3739 = vunpack.c.h.b16 %v3713
        %v3740 = vunpack.c.l.b16 %v3714
        %v3741 = vunpack.c.h.b16 %v3714
        %v3742 = vunpack.c.l.b16 %v3715
        %v3743 = vunpack.c.h.b16 %v3715
        %v3744 = vunpack.c.l.b16 %v3716
        %v3745 = vunpack.c.h.b16 %v3716
        %v3746 = vunpack.c.l.b16 %v3717
        %v3747 = vunpack.c.h.b16 %v3717
        %v3748 = vunpack.c.l.b16 %v3718
        %v3749 = vunpack.c.h.b16 %v3718
        %v3750 = vunpack.c.l.b16 %v3719
        %v3751 = vunpack.c.h.b16 %v3719
        %v3752 = vunpack.c.l.b16 %v3720
        %v3753 = vunpack.c.h.b16 %v3720
        %v3754 = vunpack.c.l.b16 %v3721
        %v3755 = vunpack.c.h.b16 %v3721
        %v3756 = vunpack.c.l.b16 %v3722
        %v3757 = vunpack.c.h.b16 %v3722
        %v3758 = vunpack.c.l.b16 %v3723
        %v3759 = vpack.c.b16 %v3736, %v3736
        %v3760 = vpack.c.b16 %v3737, %v3737
        %v3761 = vpack.c.b16 %v3738, %v3738
        %v3762 = vpack.c.b16 %v3739, %v3739
        %v3763 = vpack.c.b16 %v3740, %v3740
        %v3764 = vpack.c.b16 %v3741, %v3741
        %v3765 = vpack.c.b16 %v3742, %v3742
        %v3766 = vpack.c.b16 %v3743, %v3743
        %v3767 = vpack.c.b16 %v3744, %v3744
        %v3768 = vpack.c.b16 %v3745, %v3745
        %v3769 = vpack.c.b16 %v3746, %v3746
        %v3770 = vpack.c.b16 %v3747, %v3747
        %v3771 = vpack.c.b16 %v3748, %v3748
        %v3772 = vpack.c.b16 %v3749, %v3749
        %v3773 = vpack.c.b16 %v3750, %v3750
        %v3774 = vpack.c.b16 %v3751, %v3751
        %v3775 = vpack.c.b16 %v3752, %v3752
        %v3776 = vpack.c.b16 %v3753, %v3753
        %v3777 = vpack.c.b16 %v3754, %v3754
        %v3778 = vpack.c.b16 %v3755, %v3755
        %v3779 = vpack.c.b16 %v3756, %v3756
        %v3780 = vpack.c.b16 %v3757, %v3757
        %v3781 = vpack.c.b16 %v3758, %v3758
        %3805 = vst.msk [vmem:[#allocation3] sm:$0xf] %vm267, %v3759
        %3806 = vst.msk [vmem:[#allocation3 + $0x4] sm:$0xf] %vm267, %v3760
        %3807 = vst.msk [vmem:[#allocation3 + $0x8] sm:$0xf] %vm267, %v3761
        %3808 = vst.msk [vmem:[#allocation3 + $0xc] sm:$0xf] %vm267, %v3762
        %3809 = vst.msk [vmem:[#allocation3 + $0x10] sm:$0xf] %vm267, %v3763
        %3810 = vst.msk [vmem:[#allocation3 + $0x14] sm:$0xf] %vm267, %v3764
        %3811 = vst.msk [vmem:[#allocation3 + $0x18] sm:$0xf] %vm267, %v3765
        %3812 = vst.msk [vmem:[#allocation3 + $0x1c] sm:$0xf] %vm267, %v3766
        %3813 = vst.msk [vmem:[#allocation3 + $0x20] sm:$0xf] %vm267, %v3767
        %3814 = vst.msk [vmem:[#allocation3 + $0x24] sm:$0xf] %vm267, %v3768
        %3815 = vst.msk [vmem:[#allocation3 + $0x28] sm:$0xf] %vm267, %v3769
        %3816 = vst.msk [vmem:[#allocation3 + $0x2c] sm:$0xf] %vm267, %v3770
        %3817 = vst.msk [vmem:[#allocation3 + $0x30] sm:$0xf] %vm267, %v3771
        %3818 = vst.msk [vmem:[#allocation3 + $0x34] sm:$0xf] %vm267, %v3772
        %3819 = vst.msk [vmem:[#allocation3 + $0x38] sm:$0xf] %vm267, %v3773
        %3820 = vst.msk [vmem:[#allocation3 + $0x3c] sm:$0xf] %vm267, %v3774
        %3821 = vst.msk [vmem:[#allocation3 + $0x40] sm:$0xf] %vm267, %v3775
        %3822 = vst.msk [vmem:[#allocation3 + $0x44] sm:$0xf] %vm267, %v3776
        %3823 = vst.msk [vmem:[#allocation3 + $0x48] sm:$0xf] %vm267, %v3777
        %3824 = vst.msk [vmem:[#allocation3 + $0x4c] sm:$0xf] %vm267, %v3778
        %3825 = vst.msk [vmem:[#allocation3 + $0x50] sm:$0xf] %vm267, %v3779
        %3826 = vst.msk [vmem:[#allocation3 + $0x54] sm:$0xf] %vm267, %v3780
        %vm3827 = vcmask 517120
        %3828 = vst.msk [vmem:[#allocation3 + $0x58] sm:$0x3] %vm3827, %v3781
        %v3829 = vld [vmem:[#allocation3] sm:$0xf]
        %v3830 = vld [vmem:[#allocation3 + $0x4] sm:$0xf]
        %v3831 = vld [vmem:[#allocation3 + $0x8] sm:$0xf]
        %v3832 = vld [vmem:[#allocation3 + $0xc] sm:$0xf]
        %v3833 = vld [vmem:[#allocation3 + $0x10] sm:$0xf]
        %v3834 = vld [vmem:[#allocation3 + $0x14] sm:$0xf]
        %v3835 = vld [vmem:[#allocation3 + $0x18] sm:$0xf]
        %v3836 = vld [vmem:[#allocation3 + $0x1c] sm:$0xf]
        %v3837 = vld [vmem:[#allocation3 + $0x20] sm:$0xf]
        %v3838 = vld [vmem:[#allocation3 + $0x24] sm:$0xf]
        %v3839 = vld [vmem:[#allocation3 + $0x28] sm:$0xf]
        %v3840 = vld [vmem:[#allocation3 + $0x2c] sm:$0xf]
        %v3841 = vld [vmem:[#allocation3 + $0x30] sm:$0xf]
        %v3842 = vld [vmem:[#allocation3 + $0x34] sm:$0xf]
        %v3843 = vld [vmem:[#allocation3 + $0x38] sm:$0xf]
        %v3844 = vld [vmem:[#allocation3 + $0x3c] sm:$0xf]
        %v3845 = vld [vmem:[#allocation3 + $0x40] sm:$0xf]
        %v3846 = vld [vmem:[#allocation3 + $0x44] sm:$0xf]
        %v3847 = vld [vmem:[%s4] sm:$0xf]
        %v3848 = vld [vmem:[%s4 + $0x4] sm:$0xf]
        %v3849 = vld [vmem:[%s4 + $0x8] sm:$0xf]
        %v3850 = vld [vmem:[%s4 + $0xc] sm:$0xf]
        %v3851 = vld [vmem:[%s4 + $0x10] sm:$0xf]
        %v3852 = vld [vmem:[%s4 + $0x14] sm:$0xf]
        %v3853 = vld [vmem:[%s4 + $0x18] sm:$0xf]
        %v3854 = vld [vmem:[%s4 + $0x1c] sm:$0xf]
        %v3855 = vld [vmem:[#allocation3 + $0x48] sm:$0x1]
        %s3856 = scalar_lea.vmem %s4, 32
        %v3857 = vld [vmem:[%s3856] sm:$0xf]
        %v3858 = vld [vmem:[%s3856 + $0x4] sm:$0xf]
        %v3859 = vld [vmem:[%s3856 + $0x8] sm:$0xf]
        %v3860 = vld [vmem:[%s3856 + $0xc] sm:$0xf]
        %v3861 = vld [vmem:[%s3856 + $0x10] sm:$0xf]
        %v3862 = vld [vmem:[%s3856 + $0x14] sm:$0xf]
        %v3863 = vld [vmem:[%s3856 + $0x18] sm:$0xf]
        %v3864 = vld [vmem:[%s3856 + $0x1c] sm:$0xf]
        %v3884 = vunpack.c.l.b16 %v3829
        %v3885 = vunpack.c.l.b16 %v3830
        %v3886 = vunpack.c.l.b16 %v3831
        %v3887 = vunpack.c.l.b16 %v3832
        %v3888 = vunpack.c.l.b16 %v3833
        %v3889 = vunpack.c.l.b16 %v3834
        %v3890 = vunpack.c.l.b16 %v3835
        %v3891 = vunpack.c.l.b16 %v3836
        %v3892 = vunpack.c.l.b16 %v3837
        %v3893 = vunpack.c.l.b16 %v3838
        %v3894 = vunpack.c.l.b16 %v3839
        %v3895 = vunpack.c.l.b16 %v3840
        %v3896 = vunpack.c.l.b16 %v3841
        %v3897 = vunpack.c.l.b16 %v3842
        %v3898 = vunpack.c.l.b16 %v3843
        %v3899 = vunpack.c.l.b16 %v3844
        %v3900 = vunpack.c.l.b16 %v3845
        %v3901 = vunpack.c.l.b16 %v3846
        %v3902 = vunpack.c.l.b16 %v3855
        %v3903 = vpack.c.b16 %v3885, %v3884
        %v3904 = vpack.c.b16 %v3887, %v3886
        %v3905 = vpack.c.b16 %v3889, %v3888
        %v3906 = vpack.c.b16 %v3891, %v3890
        %v3907 = vpack.c.b16 %v3893, %v3892
        %v3908 = vpack.c.b16 %v3895, %v3894
        %v3909 = vpack.c.b16 %v3897, %v3896
        %v3910 = vpack.c.b16 %v3899, %v3898
        %v3911 = vpack.c.b16 %v3901, %v3900
        %v3912 = vpack.c.b16 %v3902, %v3902
        %v3914 = vshrl.u32 %v3903, 16
        %v3916 = vshll.u32 %v3903, 16
        %v3918 = vrot.slane %v3916, 1
        %v3919 = vor.u32 %v3914, %v3918
        %v3921 = vshll.u32 %v3904, 16
        %v3923 = vrot.slane %v3921, 1
        %v3924 = vsel %vm752, %v3919, %v3923
        %v3925 = vshrl.u32 %v3904, 16
        %v3927 = vor.u32 %v3925, %v3923
        %v3929 = vshll.u32 %v3905, 16
        %v3931 = vrot.slane %v3929, 1
        %v3932 = vsel %vm752, %v3927, %v3931
        %v3933 = vshrl.u32 %v3905, 16
        %v3935 = vor.u32 %v3933, %v3931
        %v3937 = vshll.u32 %v3906, 16
        %v3939 = vrot.slane %v3937, 1
        %v3940 = vsel %vm752, %v3935, %v3939
        %v3941 = vshrl.u32 %v3906, 16
        %v3943 = vor.u32 %v3941, %v3939
        %v3945 = vshll.u32 %v3907, 16
        %v3947 = vrot.slane %v3945, 1
        %v3948 = vsel %vm752, %v3943, %v3947
        %v3949 = vshrl.u32 %v3907, 16
        %v3951 = vor.u32 %v3949, %v3947
        %v3953 = vshll.u32 %v3908, 16
        %v3955 = vrot.slane %v3953, 1
        %v3956 = vsel %vm752, %v3951, %v3955
        %v3957 = vshrl.u32 %v3908, 16
        %v3959 = vor.u32 %v3957, %v3955
        %v3961 = vshll.u32 %v3909, 16
        %v3963 = vrot.slane %v3961, 1
        %v3964 = vsel %vm752, %v3959, %v3963
        %v3965 = vshrl.u32 %v3909, 16
        %v3967 = vor.u32 %v3965, %v3963
        %v3969 = vshll.u32 %v3910, 16
        %v3971 = vrot.slane %v3969, 1
        %v3972 = vsel %vm752, %v3967, %v3971
        %v3973 = vshrl.u32 %v3910, 16
        %v3975 = vor.u32 %v3973, %v3971
        %v3977 = vshll.u32 %v3911, 16
        %v3979 = vrot.slane %v3977, 1
        %v3980 = vsel %vm752, %v3975, %v3979
        %v3981 = vshrl.u32 %v3911, 16
        %v3983 = vor.u32 %v3981, %v3979
        %v3985 = vshll.u32 %v3912, 16
        %v3987 = vrot.slane %v3985, 1
        %v3988 = vsel %vm752, %v3983, %v3987
        %v3997 = vunpack.c.l.b16 %v3857
        %v3998 = vunpack.c.l.b16 %v3858
        %v3999 = vunpack.c.l.b16 %v3859
        %v4000 = vunpack.c.l.b16 %v3860
        %v4001 = vunpack.c.l.b16 %v3861
        %v4002 = vunpack.c.l.b16 %v3862
        %v4003 = vunpack.c.l.b16 %v3863
        %v4004 = vunpack.c.l.b16 %v3864
        %v4005 = vpack.c.b16 %v3998, %v3997
        %v4006 = vpack.c.b16 %v4000, %v3999
        %v4007 = vpack.c.b16 %v4002, %v4001
        %v4008 = vpack.c.b16 %v4004, %v4003
        %v4014 = vsel %vm872, %v3924, 0
        %v4017 = vsel %vm872, %v3932, 0
        %v4020 = vsel %vm872, %v3940, 0
        %v4023 = vsel %vm872, %v3948, 0
        %v4026 = vsel %vm872, %v3956, 0
        %v4029 = vsel %vm872, %v3964, 0
        %v4032 = vsel %vm872, %v3972, 0
        %v4035 = vsel %vm872, %v3980, 0
        %v4038 = vsel %vm872, %v3988, 0
        %4040 = vmatprep.subr.bf16.mxu0 0
        %4041 = vmatpush1.bf16.msra.mxu0 0
        %4042 = vmatprep.subr.bf16.mxu0 0
        %4043 = vmatpush1.bf16.msra.mxu0 0
        %4044 = vmatprep.subr.bf16.mxu0 0
        %4045 = vmatpush1.bf16.msra.mxu0 0
        %4046 = vmatprep.subr.bf16.mxu0 0
        %4047 = vmatpush1.bf16.msra.mxu0 0
        %4048 = vmatprep.subr.bf16.mxu0 0
        %4049 = vmatpush1.bf16.msra.mxu0 %v4008
        %4050 = vmatprep.subr.bf16.mxu0 0
        %4051 = vmatpush1.bf16.msra.mxu0 %v4007
        %4052 = vmatprep.subr.bf16.mxu0 0
        %4053 = vmatpush1.bf16.msra.mxu0 %v4006
        %4054 = vmatprep.subr.bf16.mxu0 0
        %4055 = vmatpush1.bf16.msra.mxu0 %v4005
        %4056 = vmatprep.subr.bf16.mxu0 0
        %4057 = vmatpush2.bf16.msra.mxu0 0
        %4058 = vmatprep.subr.bf16.mxu0 0
        %4059 = vmatpush2.bf16.msra.mxu0 0
        %4060 = vmatprep.subr.bf16.mxu0 0
        %4061 = vmatpush2.bf16.msra.mxu0 0
        %4062 = vmatprep.subr.bf16.mxu0 0
        %4063 = vmatpush2.bf16.msra.mxu0 0
        %4064 = vmatprep.subr.bf16.mxu0 0
        %4065 = vmatpush2.bf16.msra.mxu0 0
        %4066 = vmatprep.subr.bf16.mxu0 0
        %4067 = vmatpush2.bf16.msra.mxu0 0
        %4068 = vmatprep.subr.bf16.mxu0 0
        %4069 = vmatpush2.bf16.msra.mxu0 0
        %4070 = vmatprep.subr.bf16.mxu0 0
        %4071 = vmatpush2.bf16.msra.mxu0 0
        %4072 = vmatprep.mubr.bf16.mxu0 0
        %4073 = vmatmul.mubr.bf16.gmra.mxu0 %v4014
        %v4074 = vpop.f32.mrf.mxu0
        %v4075 = vadd.f32 0.0, %v4074
        %v4076 = vpop.f32.mrf.mxu0
        %v4077 = vpop.f32.mrf.mxu0
        %v4078 = vadd.f32 0.0, %v4077
        %v4079 = vpop.f32.mrf.mxu0
        %4080 = vmatprep.mubr.bf16.mxu0 0
        %4081 = vmatmul.mubr.bf16.gmra.mxu0 %v4017
        %v4082 = vpop.f32.mrf.mxu0
        %v4083 = vadd.f32 0.0, %v4082
        %v4084 = vpop.f32.mrf.mxu0
        %v4085 = vpop.f32.mrf.mxu0
        %v4086 = vadd.f32 0.0, %v4085
        %v4087 = vpop.f32.mrf.mxu0
        %4088 = vmatprep.mubr.bf16.mxu0 0
        %4089 = vmatmul.mubr.bf16.gmra.mxu0 %v4020
        %v4090 = vpop.f32.mrf.mxu0
        %v4091 = vadd.f32 0.0, %v4090
        %v4092 = vpop.f32.mrf.mxu0
        %v4093 = vpop.f32.mrf.mxu0
        %v4094 = vadd.f32 0.0, %v4093
        %v4095 = vpop.f32.mrf.mxu0
        %4096 = vmatprep.mubr.bf16.mxu0 0
        %4097 = vmatmul.mubr.bf16.gmra.mxu0 %v4023
        %v4098 = vpop.f32.mrf.mxu0
        %v4099 = vadd.f32 0.0, %v4098
        %v4100 = vpop.f32.mrf.mxu0
        %v4101 = vpop.f32.mrf.mxu0
        %v4102 = vadd.f32 0.0, %v4101
        %v4103 = vpop.f32.mrf.mxu0
        %4104 = vmatprep.mubr.bf16.mxu0 0
        %4105 = vmatmul.mubr.bf16.gmra.mxu0 %v4026
        %v4106 = vpop.f32.mrf.mxu0
        %v4107 = vadd.f32 0.0, %v4106
        %v4108 = vpop.f32.mrf.mxu0
        %v4109 = vpop.f32.mrf.mxu0
        %v4110 = vadd.f32 0.0, %v4109
        %v4111 = vpop.f32.mrf.mxu0
        %4112 = vmatprep.mubr.bf16.mxu0 0
        %4113 = vmatmul.mubr.bf16.gmra.mxu0 %v4029
        %v4114 = vpop.f32.mrf.mxu0
        %v4115 = vadd.f32 0.0, %v4114
        %v4116 = vpop.f32.mrf.mxu0
        %v4117 = vpop.f32.mrf.mxu0
        %v4118 = vadd.f32 0.0, %v4117
        %v4119 = vpop.f32.mrf.mxu0
        %4120 = vmatprep.mubr.bf16.mxu0 0
        %4121 = vmatmul.mubr.bf16.gmra.mxu0 %v4032
        %v4122 = vpop.f32.mrf.mxu0
        %v4123 = vadd.f32 0.0, %v4122
        %v4124 = vpop.f32.mrf.mxu0
        %v4125 = vpop.f32.mrf.mxu0
        %v4126 = vadd.f32 0.0, %v4125
        %v4127 = vpop.f32.mrf.mxu0
        %4128 = vmatprep.mubr.bf16.mxu0 0
        %4129 = vmatmul.mubr.bf16.gmra.mxu0 %v4035
        %v4130 = vpop.f32.mrf.mxu0
        %v4131 = vadd.f32 0.0, %v4130
        %v4132 = vpop.f32.mrf.mxu0
        %v4133 = vpop.f32.mrf.mxu0
        %v4134 = vadd.f32 0.0, %v4133
        %v4135 = vpop.f32.mrf.mxu0
        %4136 = vmatprep.mubr.bf16.mxu0 0
        %4137 = vmatmul.mubr.bf16.gmra.mxu0 %v4038
        %v4138 = vpop.f32.mrf.mxu0
        %v4139 = vadd.f32 0.0, %v4138
        %v4140 = vpop.f32.mrf.mxu0
        %v4141 = vpop.f32.mrf.mxu0
        %v4142 = vadd.f32 0.0, %v4141
        %v4143 = vpop.f32.mrf.mxu0
        %4144 = vdwg.mxu0
        %v4153 = vunpack.c.l.b16 %v3847
        %v4154 = vunpack.c.l.b16 %v3848
        %v4155 = vunpack.c.l.b16 %v3849
        %v4156 = vunpack.c.l.b16 %v3850
        %v4157 = vunpack.c.l.b16 %v3851
        %v4158 = vunpack.c.l.b16 %v3852
        %v4159 = vunpack.c.l.b16 %v3853
        %v4160 = vunpack.c.l.b16 %v3854
        %v4161 = vpack.c.b16 %v4154, %v4153
        %v4162 = vpack.c.b16 %v4156, %v4155
        %v4163 = vpack.c.b16 %v4158, %v4157
        %v4164 = vpack.c.b16 %v4160, %v4159
        %v4169 = vsel %vm872, %v3903, 0
        %v4171 = vsel %vm872, %v3904, 0
        %v4173 = vsel %vm872, %v3905, 0
        %v4175 = vsel %vm872, %v3906, 0
        %v4177 = vsel %vm872, %v3907, 0
        %v4179 = vsel %vm872, %v3908, 0
        %v4181 = vsel %vm872, %v3909, 0
        %v4183 = vsel %vm872, %v3910, 0
        %v4185 = vsel %vm872, %v3911, 0
        %4187 = vmatprep.subr.bf16.mxu0 0
        %4188 = vmatpush1.bf16.msra.mxu0 0
        %4189 = vmatprep.subr.bf16.mxu0 0
        %4190 = vmatpush1.bf16.msra.mxu0 0
        %4191 = vmatprep.subr.bf16.mxu0 0
        %4192 = vmatpush1.bf16.msra.mxu0 0
        %4193 = vmatprep.subr.bf16.mxu0 0
        %4194 = vmatpush1.bf16.msra.mxu0 0
        %4195 = vmatprep.subr.bf16.mxu0 0
        %4196 = vmatpush1.bf16.msra.mxu0 %v4164
        %4197 = vmatprep.subr.bf16.mxu0 0
        %4198 = vmatpush1.bf16.msra.mxu0 %v4163
        %4199 = vmatprep.subr.bf16.mxu0 0
        %4200 = vmatpush1.bf16.msra.mxu0 %v4162
        %4201 = vmatprep.subr.bf16.mxu0 0
        %4202 = vmatpush1.bf16.msra.mxu0 %v4161
        %4203 = vmatprep.subr.bf16.mxu0 0
        %4204 = vmatpush2.bf16.msra.mxu0 0
        %4205 = vmatprep.subr.bf16.mxu0 0
        %4206 = vmatpush2.bf16.msra.mxu0 0
        %4207 = vmatprep.subr.bf16.mxu0 0
        %4208 = vmatpush2.bf16.msra.mxu0 0
        %4209 = vmatprep.subr.bf16.mxu0 0
        %4210 = vmatpush2.bf16.msra.mxu0 0
        %4211 = vmatprep.subr.bf16.mxu0 0
        %4212 = vmatpush2.bf16.msra.mxu0 0
        %4213 = vmatprep.subr.bf16.mxu0 0
        %4214 = vmatpush2.bf16.msra.mxu0 0
        %4215 = vmatprep.subr.bf16.mxu0 0
        %4216 = vmatpush2.bf16.msra.mxu0 0
        %4217 = vmatprep.subr.bf16.mxu0 0
        %4218 = vmatpush2.bf16.msra.mxu0 0
        %4219 = vmatprep.mubr.bf16.mxu0 0
        %4220 = vmatmul.mubr.bf16.gmra.mxu0 %v4169
        %v4221 = vpop.f32.mrf.mxu0
        %v4222 = vadd.f32 %v4075, %v4221
        %v4223 = vpop.f32.mrf.mxu0
        %v4224 = vpop.f32.mrf.mxu0
        %v4225 = vadd.f32 %v4078, %v4224
        %v4226 = vpop.f32.mrf.mxu0
        %4227 = vmatprep.mubr.bf16.mxu0 0
        %4228 = vmatmul.mubr.bf16.gmra.mxu0 %v4171
        %v4229 = vpop.f32.mrf.mxu0
        %v4230 = vadd.f32 %v4083, %v4229
        %v4231 = vpop.f32.mrf.mxu0
        %v4232 = vpop.f32.mrf.mxu0
        %v4233 = vadd.f32 %v4086, %v4232
        %v4234 = vpop.f32.mrf.mxu0
        %4235 = vmatprep.mubr.bf16.mxu0 0
        %4236 = vmatmul.mubr.bf16.gmra.mxu0 %v4173
        %v4237 = vpop.f32.mrf.mxu0
        %v4238 = vadd.f32 %v4091, %v4237
        %v4239 = vpop.f32.mrf.mxu0
        %v4240 = vpop.f32.mrf.mxu0
        %v4241 = vadd.f32 %v4094, %v4240
        %v4242 = vpop.f32.mrf.mxu0
        %4243 = vmatprep.mubr.bf16.mxu0 0
        %4244 = vmatmul.mubr.bf16.gmra.mxu0 %v4175
        %v4245 = vpop.f32.mrf.mxu0
        %v4246 = vadd.f32 %v4099, %v4245
        %v4247 = vpop.f32.mrf.mxu0
        %v4248 = vpop.f32.mrf.mxu0
        %v4249 = vadd.f32 %v4102, %v4248
        %v4250 = vpop.f32.mrf.mxu0
        %4251 = vmatprep.mubr.bf16.mxu0 0
        %4252 = vmatmul.mubr.bf16.gmra.mxu0 %v4177
        %v4253 = vpop.f32.mrf.mxu0
        %v4254 = vadd.f32 %v4107, %v4253
        %v4255 = vpop.f32.mrf.mxu0
        %v4256 = vpop.f32.mrf.mxu0
        %v4257 = vadd.f32 %v4110, %v4256
        %v4258 = vpop.f32.mrf.mxu0
        %4259 = vmatprep.mubr.bf16.mxu0 0
        %4260 = vmatmul.mubr.bf16.gmra.mxu0 %v4179
        %v4261 = vpop.f32.mrf.mxu0
        %v4262 = vadd.f32 %v4115, %v4261
        %v4263 = vpop.f32.mrf.mxu0
        %v4264 = vpop.f32.mrf.mxu0
        %v4265 = vadd.f32 %v4118, %v4264
        %v4266 = vpop.f32.mrf.mxu0
        %4267 = vmatprep.mubr.bf16.mxu0 0
        %4268 = vmatmul.mubr.bf16.gmra.mxu0 %v4181
        %v4269 = vpop.f32.mrf.mxu0
        %v4270 = vadd.f32 %v4123, %v4269
        %v4271 = vpop.f32.mrf.mxu0
        %v4272 = vpop.f32.mrf.mxu0
        %v4273 = vadd.f32 %v4126, %v4272
        %v4274 = vpop.f32.mrf.mxu0
        %4275 = vmatprep.mubr.bf16.mxu0 0
        %4276 = vmatmul.mubr.bf16.gmra.mxu0 %v4183
        %v4277 = vpop.f32.mrf.mxu0
        %v4278 = vadd.f32 %v4131, %v4277
        %v4279 = vpop.f32.mrf.mxu0
        %v4280 = vpop.f32.mrf.mxu0
        %v4281 = vadd.f32 %v4134, %v4280
        %v4282 = vpop.f32.mrf.mxu0
        %4283 = vmatprep.mubr.bf16.mxu0 0
        %4284 = vmatmul.mubr.bf16.gmra.mxu0 %v4185
        %v4285 = vpop.f32.mrf.mxu0
        %v4286 = vadd.f32 %v4139, %v4285
        %v4287 = vpop.f32.mrf.mxu0
        %v4288 = vpop.f32.mrf.mxu0
        %v4289 = vadd.f32 %v4142, %v4288
        %v4290 = vpop.f32.mrf.mxu0
        %4291 = vdwg.mxu0
        %v4292 = vld [vmem:[#allocation3] sm:$0xe]
        %s4293 = scalar_lea.vmem %s4, 64
        %v4294 = vld [vmem:[%s4293] sm:$0xf]
        %v4295 = vld [vmem:[%s4293 + $0x4] sm:$0xf]
        %v4296 = vld [vmem:[%s4293 + $0x8] sm:$0xf]
        %v4297 = vld [vmem:[%s4293 + $0xc] sm:$0xf]
        %v4298 = vld [vmem:[%s4293 + $0x10] sm:$0xf]
        %v4299 = vld [vmem:[%s4293 + $0x14] sm:$0xf]
        %v4300 = vld [vmem:[%s4293 + $0x18] sm:$0xf]
        %v4301 = vld [vmem:[%s4293 + $0x1c] sm:$0xf]
        %v4303 = vunpack.c.l.b16 %v4292
        %v4304 = vpack.c.b16 %v3885, %v4303
        %v4305 = vrot.slane %v4304, 1
        %v4306 = vrot.slane %v3904, 1
        %v4307 = vsel %vm1230, %v4305, %v4306
        %v4308 = vrot.slane %v3905, 1
        %v4309 = vsel %vm1230, %v4306, %v4308
        %v4310 = vrot.slane %v3906, 1
        %v4311 = vsel %vm1230, %v4308, %v4310
        %v4312 = vrot.slane %v3907, 1
        %v4313 = vsel %vm1230, %v4310, %v4312
        %v4314 = vrot.slane %v3908, 1
        %v4315 = vsel %vm1230, %v4312, %v4314
        %v4316 = vrot.slane %v3909, 1
        %v4317 = vsel %vm1230, %v4314, %v4316
        %v4318 = vrot.slane %v3910, 1
        %v4319 = vsel %vm1230, %v4316, %v4318
        %v4320 = vrot.slane %v3911, 1
        %v4321 = vsel %vm1230, %v4318, %v4320
        %v4322 = vrot.slane %v3912, 1
        %v4323 = vsel %vm1230, %v4320, %v4322
        %v4332 = vunpack.c.l.b16 %v4294
        %v4333 = vunpack.c.l.b16 %v4295
        %v4334 = vunpack.c.l.b16 %v4296
        %v4335 = vunpack.c.l.b16 %v4297
        %v4336 = vunpack.c.l.b16 %v4298
        %v4337 = vunpack.c.l.b16 %v4299
        %v4338 = vunpack.c.l.b16 %v4300
        %v4339 = vunpack.c.l.b16 %v4301
        %v4340 = vpack.c.b16 %v4333, %v4332
        %v4341 = vpack.c.b16 %v4335, %v4334
        %v4342 = vpack.c.b16 %v4337, %v4336
        %v4343 = vpack.c.b16 %v4339, %v4338
        %v4349 = vsel %vm872, %v4307, 0
        %v4352 = vsel %vm872, %v4309, 0
        %v4355 = vsel %vm872, %v4311, 0
        %v4358 = vsel %vm872, %v4313, 0
        %v4361 = vsel %vm872, %v4315, 0
        %v4364 = vsel %vm872, %v4317, 0
        %v4367 = vsel %vm872, %v4319, 0
        %v4370 = vsel %vm872, %v4321, 0
        %v4373 = vsel %vm872, %v4323, 0
        %4375 = vmatprep.subr.bf16.mxu0 0
        %4376 = vmatpush1.bf16.msra.mxu0 0
        %4377 = vmatprep.subr.bf16.mxu0 0
        %4378 = vmatpush1.bf16.msra.mxu0 0
        %4379 = vmatprep.subr.bf16.mxu0 0
        %4380 = vmatpush1.bf16.msra.mxu0 0
        %4381 = vmatprep.subr.bf16.mxu0 0
        %4382 = vmatpush1.bf16.msra.mxu0 0
        %4383 = vmatprep.subr.bf16.mxu0 0
        %4384 = vmatpush1.bf16.msra.mxu0 %v4343
        %4385 = vmatprep.subr.bf16.mxu0 0
        %4386 = vmatpush1.bf16.msra.mxu0 %v4342
        %4387 = vmatprep.subr.bf16.mxu0 0
        %4388 = vmatpush1.bf16.msra.mxu0 %v4341
        %4389 = vmatprep.subr.bf16.mxu0 0
        %4390 = vmatpush1.bf16.msra.mxu0 %v4340
        %4391 = vmatprep.subr.bf16.mxu0 0
        %4392 = vmatpush2.bf16.msra.mxu0 0
        %4393 = vmatprep.subr.bf16.mxu0 0
        %4394 = vmatpush2.bf16.msra.mxu0 0
        %4395 = vmatprep.subr.bf16.mxu0 0
        %4396 = vmatpush2.bf16.msra.mxu0 0
        %4397 = vmatprep.subr.bf16.mxu0 0
        %4398 = vmatpush2.bf16.msra.mxu0 0
        %4399 = vmatprep.subr.bf16.mxu0 0
        %4400 = vmatpush2.bf16.msra.mxu0 0
        %4401 = vmatprep.subr.bf16.mxu0 0
        %4402 = vmatpush2.bf16.msra.mxu0 0
        %4403 = vmatprep.subr.bf16.mxu0 0
        %4404 = vmatpush2.bf16.msra.mxu0 0
        %4405 = vmatprep.subr.bf16.mxu0 0
        %4406 = vmatpush2.bf16.msra.mxu0 0
        %4407 = vmatprep.mubr.bf16.mxu0 0
        %4408 = vmatmul.mubr.bf16.gmra.mxu0 %v4349
        %v4409 = vpop.f32.mrf.mxu0
        %v4410 = vadd.f32 0.0, %v4409
        %v4411 = vpop.f32.mrf.mxu0
        %v4412 = vpop.f32.mrf.mxu0
        %v4413 = vadd.f32 0.0, %v4412
        %v4414 = vpop.f32.mrf.mxu0
        %4415 = vmatprep.mubr.bf16.mxu0 0
        %4416 = vmatmul.mubr.bf16.gmra.mxu0 %v4352
        %v4417 = vpop.f32.mrf.mxu0
        %v4418 = vadd.f32 0.0, %v4417
        %v4419 = vpop.f32.mrf.mxu0
        %v4420 = vpop.f32.mrf.mxu0
        %v4421 = vadd.f32 0.0, %v4420
        %v4422 = vpop.f32.mrf.mxu0
        %4423 = vmatprep.mubr.bf16.mxu0 0
        %4424 = vmatmul.mubr.bf16.gmra.mxu0 %v4355
        %v4425 = vpop.f32.mrf.mxu0
        %v4426 = vadd.f32 0.0, %v4425
        %v4427 = vpop.f32.mrf.mxu0
        %v4428 = vpop.f32.mrf.mxu0
        %v4429 = vadd.f32 0.0, %v4428
        %v4430 = vpop.f32.mrf.mxu0
        %4431 = vmatprep.mubr.bf16.mxu0 0
        %4432 = vmatmul.mubr.bf16.gmra.mxu0 %v4358
        %v4433 = vpop.f32.mrf.mxu0
        %v4434 = vadd.f32 0.0, %v4433
        %v4435 = vpop.f32.mrf.mxu0
        %v4436 = vpop.f32.mrf.mxu0
        %v4437 = vadd.f32 0.0, %v4436
        %v4438 = vpop.f32.mrf.mxu0
        %4439 = vmatprep.mubr.bf16.mxu0 0
        %4440 = vmatmul.mubr.bf16.gmra.mxu0 %v4361
        %v4441 = vpop.f32.mrf.mxu0
        %v4442 = vadd.f32 0.0, %v4441
        %v4443 = vpop.f32.mrf.mxu0
        %v4444 = vpop.f32.mrf.mxu0
        %v4445 = vadd.f32 0.0, %v4444
        %v4446 = vpop.f32.mrf.mxu0
        %4447 = vmatprep.mubr.bf16.mxu0 0
        %4448 = vmatmul.mubr.bf16.gmra.mxu0 %v4364
        %v4449 = vpop.f32.mrf.mxu0
        %v4450 = vadd.f32 0.0, %v4449
        %v4451 = vpop.f32.mrf.mxu0
        %v4452 = vpop.f32.mrf.mxu0
        %v4453 = vadd.f32 0.0, %v4452
        %v4454 = vpop.f32.mrf.mxu0
        %4455 = vmatprep.mubr.bf16.mxu0 0
        %4456 = vmatmul.mubr.bf16.gmra.mxu0 %v4367
        %v4457 = vpop.f32.mrf.mxu0
        %v4458 = vadd.f32 0.0, %v4457
        %v4459 = vpop.f32.mrf.mxu0
        %v4460 = vpop.f32.mrf.mxu0
        %v4461 = vadd.f32 0.0, %v4460
        %v4462 = vpop.f32.mrf.mxu0
        %4463 = vmatprep.mubr.bf16.mxu0 0
        %4464 = vmatmul.mubr.bf16.gmra.mxu0 %v4370
        %v4465 = vpop.f32.mrf.mxu0
        %v4466 = vadd.f32 0.0, %v4465
        %v4467 = vpop.f32.mrf.mxu0
        %v4468 = vpop.f32.mrf.mxu0
        %v4469 = vadd.f32 0.0, %v4468
        %v4470 = vpop.f32.mrf.mxu0
        %4471 = vmatprep.mubr.bf16.mxu0 0
        %4472 = vmatmul.mubr.bf16.gmra.mxu0 %v4373
        %v4473 = vpop.f32.mrf.mxu0
        %v4474 = vadd.f32 0.0, %v4473
        %v4475 = vpop.f32.mrf.mxu0
        %v4476 = vpop.f32.mrf.mxu0
        %v4477 = vadd.f32 0.0, %v4476
        %v4478 = vpop.f32.mrf.mxu0
        %4479 = vdwg.mxu0
        %v4480 = vadd.f32 %v4222, %v4410
        %v4481 = vadd.f32 %v4225, %v4413
        %v4482 = vadd.f32 %v4230, %v4418
        %v4483 = vadd.f32 %v4233, %v4421
        %v4484 = vadd.f32 %v4238, %v4426
        %v4485 = vadd.f32 %v4241, %v4429
        %v4486 = vadd.f32 %v4246, %v4434
        %v4487 = vadd.f32 %v4249, %v4437
        %v4488 = vadd.f32 %v4254, %v4442
        %v4489 = vadd.f32 %v4257, %v4445
        %v4490 = vadd.f32 %v4262, %v4450
        %v4491 = vadd.f32 %v4265, %v4453
        %v4492 = vadd.f32 %v4270, %v4458
        %v4493 = vadd.f32 %v4273, %v4461
        %v4494 = vadd.f32 %v4278, %v4466
        %v4495 = vadd.f32 %v4281, %v4469
        %v4496 = vadd.f32 %v4286, %v4474
        %v4497 = vadd.f32 %v4289, %v4477
        %v4498 = vld [vmem:[#allocation3 + $0x8] sm:$0xe]
        %v4499 = vld [vmem:[#allocation3 + $0xc] sm:$0xf]
        %v4500 = vld [vmem:[#allocation3 + $0x10] sm:$0xf]
        %v4501 = vld [vmem:[#allocation3 + $0x14] sm:$0xf]
        %v4502 = vld [vmem:[#allocation3 + $0x18] sm:$0xf]
        %v4503 = vld [vmem:[#allocation3 + $0x1c] sm:$0xf]
        %v4504 = vld [vmem:[#allocation3 + $0x20] sm:$0xf]
        %v4505 = vld [vmem:[#allocation3 + $0x24] sm:$0xf]
        %v4506 = vld [vmem:[#allocation3 + $0x28] sm:$0xf]
        %v4507 = vld [vmem:[#allocation3 + $0x2c] sm:$0xf]
        %v4508 = vld [vmem:[#allocation3 + $0x30] sm:$0xf]
        %v4509 = vld [vmem:[#allocation3 + $0x34] sm:$0xf]
        %v4510 = vld [vmem:[#allocation3 + $0x38] sm:$0xf]
        %v4511 = vld [vmem:[#allocation3 + $0x3c] sm:$0xf]
        %v4512 = vld [vmem:[#allocation3 + $0x40] sm:$0xf]
        %v4513 = vld [vmem:[#allocation3 + $0x44] sm:$0xf]
        %v4514 = vld [vmem:[#allocation3 + $0x48] sm:$0xf]
        %v4515 = vld [vmem:[#allocation3 + $0x4c] sm:$0xf]
        %v4516 = vld [vmem:[#allocation3 + $0x50] sm:$0x1]
        %s4517 = scalar_lea.vmem %s4, 96
        %v4518 = vld [vmem:[%s4517] sm:$0xf]
        %v4519 = vld [vmem:[%s4517 + $0x4] sm:$0xf]
        %v4520 = vld [vmem:[%s4517 + $0x8] sm:$0xf]
        %v4521 = vld [vmem:[%s4517 + $0xc] sm:$0xf]
        %v4522 = vld [vmem:[%s4517 + $0x10] sm:$0xf]
        %v4523 = vld [vmem:[%s4517 + $0x14] sm:$0xf]
        %v4524 = vld [vmem:[%s4517 + $0x18] sm:$0xf]
        %v4525 = vld [vmem:[%s4517 + $0x1c] sm:$0xf]
        %v4545 = vunpack.c.l.b16 %v4498
        %v4546 = vunpack.c.l.b16 %v4499
        %v4547 = vunpack.c.l.b16 %v4500
        %v4548 = vunpack.c.l.b16 %v4501
        %v4549 = vunpack.c.l.b16 %v4502
        %v4550 = vunpack.c.l.b16 %v4503
        %v4551 = vunpack.c.l.b16 %v4504
        %v4552 = vunpack.c.l.b16 %v4505
        %v4553 = vunpack.c.l.b16 %v4506
        %v4554 = vunpack.c.l.b16 %v4507
        %v4555 = vunpack.c.l.b16 %v4508
        %v4556 = vunpack.c.l.b16 %v4509
        %v4557 = vunpack.c.l.b16 %v4510
        %v4558 = vunpack.c.l.b16 %v4511
        %v4559 = vunpack.c.l.b16 %v4512
        %v4560 = vunpack.c.l.b16 %v4513
        %v4561 = vunpack.c.l.b16 %v4514
        %v4562 = vunpack.c.l.b16 %v4515
        %v4563 = vunpack.c.l.b16 %v4516
        %v4564 = vpack.c.b16 %v4546, %v4545
        %v4565 = vpack.c.b16 %v4548, %v4547
        %v4566 = vpack.c.b16 %v4550, %v4549
        %v4567 = vpack.c.b16 %v4552, %v4551
        %v4568 = vpack.c.b16 %v4554, %v4553
        %v4569 = vpack.c.b16 %v4556, %v4555
        %v4570 = vpack.c.b16 %v4558, %v4557
        %v4571 = vpack.c.b16 %v4560, %v4559
        %v4572 = vpack.c.b16 %v4562, %v4561
        %v4573 = vpack.c.b16 %v4563, %v4563
        %v4574 = vrot.slane %v4564, 1
        %v4575 = vrot.slane %v4565, 1
        %v4576 = vsel %vm1230, %v4574, %v4575
        %v4577 = vrot.slane %v4566, 1
        %v4578 = vsel %vm1230, %v4575, %v4577
        %v4579 = vrot.slane %v4567, 1
        %v4580 = vsel %vm1230, %v4577, %v4579
        %v4581 = vrot.slane %v4568, 1
        %v4582 = vsel %vm1230, %v4579, %v4581
        %v4583 = vrot.slane %v4569, 1
        %v4584 = vsel %vm1230, %v4581, %v4583
        %v4585 = vrot.slane %v4570, 1
        %v4586 = vsel %vm1230, %v4583, %v4585
        %v4587 = vrot.slane %v4571, 1
        %v4588 = vsel %vm1230, %v4585, %v4587
        %v4589 = vrot.slane %v4572, 1
        %v4590 = vsel %vm1230, %v4587, %v4589
        %v4591 = vrot.slane %v4573, 1
        %v4592 = vsel %vm1230, %v4589, %v4591
        %v4601 = vunpack.c.l.b16 %v4518
        %v4602 = vunpack.c.l.b16 %v4519
        %v4603 = vunpack.c.l.b16 %v4520
        %v4604 = vunpack.c.l.b16 %v4521
        %v4605 = vunpack.c.l.b16 %v4522
        %v4606 = vunpack.c.l.b16 %v4523
        %v4607 = vunpack.c.l.b16 %v4524
        %v4608 = vunpack.c.l.b16 %v4525
        %v4609 = vpack.c.b16 %v4602, %v4601
        %v4610 = vpack.c.b16 %v4604, %v4603
        %v4611 = vpack.c.b16 %v4606, %v4605
        %v4612 = vpack.c.b16 %v4608, %v4607
        %v4618 = vsel %vm872, %v4576, 0
        %v4621 = vsel %vm872, %v4578, 0
        %v4624 = vsel %vm872, %v4580, 0
        %v4627 = vsel %vm872, %v4582, 0
        %v4630 = vsel %vm872, %v4584, 0
        %v4633 = vsel %vm872, %v4586, 0
        %v4636 = vsel %vm872, %v4588, 0
        %v4639 = vsel %vm872, %v4590, 0
        %v4642 = vsel %vm872, %v4592, 0
        %4644 = vmatprep.subr.bf16.mxu0 0
        %4645 = vmatpush1.bf16.msra.mxu0 0
        %4646 = vmatprep.subr.bf16.mxu0 0
        %4647 = vmatpush1.bf16.msra.mxu0 0
        %4648 = vmatprep.subr.bf16.mxu0 0
        %4649 = vmatpush1.bf16.msra.mxu0 0
        %4650 = vmatprep.subr.bf16.mxu0 0
        %4651 = vmatpush1.bf16.msra.mxu0 0
        %4652 = vmatprep.subr.bf16.mxu0 0
        %4653 = vmatpush1.bf16.msra.mxu0 %v4612
        %4654 = vmatprep.subr.bf16.mxu0 0
        %4655 = vmatpush1.bf16.msra.mxu0 %v4611
        %4656 = vmatprep.subr.bf16.mxu0 0
        %4657 = vmatpush1.bf16.msra.mxu0 %v4610
        %4658 = vmatprep.subr.bf16.mxu0 0
        %4659 = vmatpush1.bf16.msra.mxu0 %v4609
        %4660 = vmatprep.subr.bf16.mxu0 0
        %4661 = vmatpush2.bf16.msra.mxu0 0
        %4662 = vmatprep.subr.bf16.mxu0 0
        %4663 = vmatpush2.bf16.msra.mxu0 0
        %4664 = vmatprep.subr.bf16.mxu0 0
        %4665 = vmatpush2.bf16.msra.mxu0 0
        %4666 = vmatprep.subr.bf16.mxu0 0
        %4667 = vmatpush2.bf16.msra.mxu0 0
        %4668 = vmatprep.subr.bf16.mxu0 0
        %4669 = vmatpush2.bf16.msra.mxu0 0
        %4670 = vmatprep.subr.bf16.mxu0 0
        %4671 = vmatpush2.bf16.msra.mxu0 0
        %4672 = vmatprep.subr.bf16.mxu0 0
        %4673 = vmatpush2.bf16.msra.mxu0 0
        %4674 = vmatprep.subr.bf16.mxu0 0
        %4675 = vmatpush2.bf16.msra.mxu0 0
        %4676 = vmatprep.mubr.bf16.mxu0 0
        %4677 = vmatmul.mubr.bf16.gmra.mxu0 %v4618
        %v4678 = vpop.f32.mrf.mxu0
        %v4679 = vadd.f32 0.0, %v4678
        %v4680 = vpop.f32.mrf.mxu0
        %v4681 = vpop.f32.mrf.mxu0
        %v4682 = vadd.f32 0.0, %v4681
        %v4683 = vpop.f32.mrf.mxu0
        %4684 = vmatprep.mubr.bf16.mxu0 0
        %4685 = vmatmul.mubr.bf16.gmra.mxu0 %v4621
        %v4686 = vpop.f32.mrf.mxu0
        %v4687 = vadd.f32 0.0, %v4686
        %v4688 = vpop.f32.mrf.mxu0
        %v4689 = vpop.f32.mrf.mxu0
        %v4690 = vadd.f32 0.0, %v4689
        %v4691 = vpop.f32.mrf.mxu0
        %4692 = vmatprep.mubr.bf16.mxu0 0
        %4693 = vmatmul.mubr.bf16.gmra.mxu0 %v4624
        %v4694 = vpop.f32.mrf.mxu0
        %v4695 = vadd.f32 0.0, %v4694
        %v4696 = vpop.f32.mrf.mxu0
        %v4697 = vpop.f32.mrf.mxu0
        %v4698 = vadd.f32 0.0, %v4697
        %v4699 = vpop.f32.mrf.mxu0
        %4700 = vmatprep.mubr.bf16.mxu0 0
        %4701 = vmatmul.mubr.bf16.gmra.mxu0 %v4627
        %v4702 = vpop.f32.mrf.mxu0
        %v4703 = vadd.f32 0.0, %v4702
        %v4704 = vpop.f32.mrf.mxu0
        %v4705 = vpop.f32.mrf.mxu0
        %v4706 = vadd.f32 0.0, %v4705
        %v4707 = vpop.f32.mrf.mxu0
        %4708 = vmatprep.mubr.bf16.mxu0 0
        %4709 = vmatmul.mubr.bf16.gmra.mxu0 %v4630
        %v4710 = vpop.f32.mrf.mxu0
        %v4711 = vadd.f32 0.0, %v4710
        %v4712 = vpop.f32.mrf.mxu0
        %v4713 = vpop.f32.mrf.mxu0
        %v4714 = vadd.f32 0.0, %v4713
        %v4715 = vpop.f32.mrf.mxu0
        %4716 = vmatprep.mubr.bf16.mxu0 0
        %4717 = vmatmul.mubr.bf16.gmra.mxu0 %v4633
        %v4718 = vpop.f32.mrf.mxu0
        %v4719 = vadd.f32 0.0, %v4718
        %v4720 = vpop.f32.mrf.mxu0
        %v4721 = vpop.f32.mrf.mxu0
        %v4722 = vadd.f32 0.0, %v4721
        %v4723 = vpop.f32.mrf.mxu0
        %4724 = vmatprep.mubr.bf16.mxu0 0
        %4725 = vmatmul.mubr.bf16.gmra.mxu0 %v4636
        %v4726 = vpop.f32.mrf.mxu0
        %v4727 = vadd.f32 0.0, %v4726
        %v4728 = vpop.f32.mrf.mxu0
        %v4729 = vpop.f32.mrf.mxu0
        %v4730 = vadd.f32 0.0, %v4729
        %v4731 = vpop.f32.mrf.mxu0
        %4732 = vmatprep.mubr.bf16.mxu0 0
        %4733 = vmatmul.mubr.bf16.gmra.mxu0 %v4639
        %v4734 = vpop.f32.mrf.mxu0
        %v4735 = vadd.f32 0.0, %v4734
        %v4736 = vpop.f32.mrf.mxu0
        %v4737 = vpop.f32.mrf.mxu0
        %v4738 = vadd.f32 0.0, %v4737
        %v4739 = vpop.f32.mrf.mxu0
        %4740 = vmatprep.mubr.bf16.mxu0 0
        %4741 = vmatmul.mubr.bf16.gmra.mxu0 %v4642
        %v4742 = vpop.f32.mrf.mxu0
        %v4743 = vadd.f32 0.0, %v4742
        %v4744 = vpop.f32.mrf.mxu0
        %v4745 = vpop.f32.mrf.mxu0
        %v4746 = vadd.f32 0.0, %v4745
        %v4747 = vpop.f32.mrf.mxu0
        %4748 = vdwg.mxu0
        %v4749 = vadd.f32 %v4480, %v4679
        %v4750 = vadd.f32 %v4481, %v4682
        %v4751 = vadd.f32 %v4482, %v4687
        %v4752 = vadd.f32 %v4483, %v4690
        %v4753 = vadd.f32 %v4484, %v4695
        %v4754 = vadd.f32 %v4485, %v4698
        %v4755 = vadd.f32 %v4486, %v4703
        %v4756 = vadd.f32 %v4487, %v4706
        %v4757 = vadd.f32 %v4488, %v4711
        %v4758 = vadd.f32 %v4489, %v4714
        %v4759 = vadd.f32 %v4490, %v4719
        %v4760 = vadd.f32 %v4491, %v4722
        %v4761 = vadd.f32 %v4492, %v4727
        %v4762 = vadd.f32 %v4493, %v4730
        %v4763 = vadd.f32 %v4494, %v4735
        %v4764 = vadd.f32 %v4495, %v4738
        %v4765 = vadd.f32 %v4496, %v4743
        %v4766 = vadd.f32 %v4497, %v4746
        %v4767 = vld [vmem:[#allocation3 + $0x50] sm:$0x3]
        %s4768 = scalar_lea.vmem %s4, 128
        %v4769 = vld [vmem:[%s4768] sm:$0xf]
        %v4770 = vld [vmem:[%s4768 + $0x4] sm:$0xf]
        %v4771 = vld [vmem:[%s4768 + $0x8] sm:$0xf]
        %v4772 = vld [vmem:[%s4768 + $0xc] sm:$0xf]
        %v4773 = vld [vmem:[%s4768 + $0x10] sm:$0xf]
        %v4774 = vld [vmem:[%s4768 + $0x14] sm:$0xf]
        %v4775 = vld [vmem:[%s4768 + $0x18] sm:$0xf]
        %v4776 = vld [vmem:[%s4768 + $0x1c] sm:$0xf]
        %v4778 = vunpack.c.l.b16 %v4767
        %v4779 = vpack.c.b16 %v4778, %v4778
        %v4781 = vshrl.u32 %v4564, 16
        %v4783 = vrot.slane %v4781, 1
        %v4784 = vshll.u32 %v4564, 16
        %v4786 = vrot.slane %v4784, 2
        %v4787 = vor.u32 %v4783, %v4786
        %v4789 = vshrl.u32 %v4565, 16
        %v4791 = vrot.slane %v4789, 1
        %v4792 = vshll.u32 %v4565, 16
        %v4794 = vrot.slane %v4792, 2
        %v4795 = vor.u32 %v4791, %v4794
        %v4796 = vsel %vm1802, %v4787, %v4795
        %v4798 = vshrl.u32 %v4566, 16
        %v4800 = vrot.slane %v4798, 1
        %v4801 = vshll.u32 %v4566, 16
        %v4803 = vrot.slane %v4801, 2
        %v4804 = vor.u32 %v4800, %v4803
        %v4805 = vsel %vm1802, %v4795, %v4804
        %v4807 = vshrl.u32 %v4567, 16
        %v4809 = vrot.slane %v4807, 1
        %v4810 = vshll.u32 %v4567, 16
        %v4812 = vrot.slane %v4810, 2
        %v4813 = vor.u32 %v4809, %v4812
        %v4814 = vsel %vm1802, %v4804, %v4813
        %v4816 = vshrl.u32 %v4568, 16
        %v4818 = vrot.slane %v4816, 1
        %v4819 = vshll.u32 %v4568, 16
        %v4821 = vrot.slane %v4819, 2
        %v4822 = vor.u32 %v4818, %v4821
        %v4823 = vsel %vm1802, %v4813, %v4822
        %v4825 = vshrl.u32 %v4569, 16
        %v4827 = vrot.slane %v4825, 1
        %v4828 = vshll.u32 %v4569, 16
        %v4830 = vrot.slane %v4828, 2
        %v4831 = vor.u32 %v4827, %v4830
        %v4832 = vsel %vm1802, %v4822, %v4831
        %v4834 = vshrl.u32 %v4570, 16
        %v4836 = vrot.slane %v4834, 1
        %v4837 = vshll.u32 %v4570, 16
        %v4839 = vrot.slane %v4837, 2
        %v4840 = vor.u32 %v4836, %v4839
        %v4841 = vsel %vm1802, %v4831, %v4840
        %v4843 = vshrl.u32 %v4571, 16
        %v4845 = vrot.slane %v4843, 1
        %v4846 = vshll.u32 %v4571, 16
        %v4848 = vrot.slane %v4846, 2
        %v4849 = vor.u32 %v4845, %v4848
        %v4850 = vsel %vm1802, %v4840, %v4849
        %v4852 = vshrl.u32 %v4572, 16
        %v4854 = vrot.slane %v4852, 1
        %v4855 = vshll.u32 %v4572, 16
        %v4857 = vrot.slane %v4855, 2
        %v4858 = vor.u32 %v4854, %v4857
        %v4859 = vsel %vm1802, %v4849, %v4858
        %v4861 = vshrl.u32 %v4779, 16
        %v4863 = vrot.slane %v4861, 1
        %v4864 = vshll.u32 %v4779, 16
        %v4866 = vrot.slane %v4864, 2
        %v4867 = vor.u32 %v4863, %v4866
        %v4868 = vsel %vm1802, %v4858, %v4867
        %v4877 = vunpack.c.l.b16 %v4769
        %v4878 = vunpack.c.l.b16 %v4770
        %v4879 = vunpack.c.l.b16 %v4771
        %v4880 = vunpack.c.l.b16 %v4772
        %v4881 = vunpack.c.l.b16 %v4773
        %v4882 = vunpack.c.l.b16 %v4774
        %v4883 = vunpack.c.l.b16 %v4775
        %v4884 = vunpack.c.l.b16 %v4776
        %v4885 = vpack.c.b16 %v4878, %v4877
        %v4886 = vpack.c.b16 %v4880, %v4879
        %v4887 = vpack.c.b16 %v4882, %v4881
        %v4888 = vpack.c.b16 %v4884, %v4883
        %v4894 = vsel %vm872, %v4796, 0
        %v4897 = vsel %vm872, %v4805, 0
        %v4900 = vsel %vm872, %v4814, 0
        %v4903 = vsel %vm872, %v4823, 0
        %v4906 = vsel %vm872, %v4832, 0
        %v4909 = vsel %vm872, %v4841, 0
        %v4912 = vsel %vm872, %v4850, 0
        %v4915 = vsel %vm872, %v4859, 0
        %v4918 = vsel %vm872, %v4868, 0
        %4920 = vmatprep.subr.bf16.mxu0 0
        %4921 = vmatpush1.bf16.msra.mxu0 0
        %4922 = vmatprep.subr.bf16.mxu0 0
        %4923 = vmatpush1.bf16.msra.mxu0 0
        %4924 = vmatprep.subr.bf16.mxu0 0
        %4925 = vmatpush1.bf16.msra.mxu0 0
        %4926 = vmatprep.subr.bf16.mxu0 0
        %4927 = vmatpush1.bf16.msra.mxu0 0
        %4928 = vmatprep.subr.bf16.mxu0 0
        %4929 = vmatpush1.bf16.msra.mxu0 %v4888
        %4930 = vmatprep.subr.bf16.mxu0 0
        %4931 = vmatpush1.bf16.msra.mxu0 %v4887
        %4932 = vmatprep.subr.bf16.mxu0 0
        %4933 = vmatpush1.bf16.msra.mxu0 %v4886
        %4934 = vmatprep.subr.bf16.mxu0 0
        %4935 = vmatpush1.bf16.msra.mxu0 %v4885
        %4936 = vmatprep.subr.bf16.mxu0 0
        %4937 = vmatpush2.bf16.msra.mxu0 0
        %4938 = vmatprep.subr.bf16.mxu0 0
        %4939 = vmatpush2.bf16.msra.mxu0 0
        %4940 = vmatprep.subr.bf16.mxu0 0
        %4941 = vmatpush2.bf16.msra.mxu0 0
        %4942 = vmatprep.subr.bf16.mxu0 0
        %4943 = vmatpush2.bf16.msra.mxu0 0
        %4944 = vmatprep.subr.bf16.mxu0 0
        %4945 = vmatpush2.bf16.msra.mxu0 0
        %4946 = vmatprep.subr.bf16.mxu0 0
        %4947 = vmatpush2.bf16.msra.mxu0 0
        %4948 = vmatprep.subr.bf16.mxu0 0
        %4949 = vmatpush2.bf16.msra.mxu0 0
        %4950 = vmatprep.subr.bf16.mxu0 0
        %4951 = vmatpush2.bf16.msra.mxu0 0
        %4952 = vmatprep.mubr.bf16.mxu0 0
        %4953 = vmatmul.mubr.bf16.gmra.mxu0 %v4894
        %v4954 = vpop.f32.mrf.mxu0
        %v4955 = vadd.f32 0.0, %v4954
        %v4956 = vpop.f32.mrf.mxu0
        %v4957 = vpop.f32.mrf.mxu0
        %v4958 = vadd.f32 0.0, %v4957
        %v4959 = vpop.f32.mrf.mxu0
        %4960 = vmatprep.mubr.bf16.mxu0 0
        %4961 = vmatmul.mubr.bf16.gmra.mxu0 %v4897
        %v4962 = vpop.f32.mrf.mxu0
        %v4963 = vadd.f32 0.0, %v4962
        %v4964 = vpop.f32.mrf.mxu0
        %v4965 = vpop.f32.mrf.mxu0
        %v4966 = vadd.f32 0.0, %v4965
        %v4967 = vpop.f32.mrf.mxu0
        %4968 = vmatprep.mubr.bf16.mxu0 0
        %4969 = vmatmul.mubr.bf16.gmra.mxu0 %v4900
        %v4970 = vpop.f32.mrf.mxu0
        %v4971 = vadd.f32 0.0, %v4970
        %v4972 = vpop.f32.mrf.mxu0
        %v4973 = vpop.f32.mrf.mxu0
        %v4974 = vadd.f32 0.0, %v4973
        %v4975 = vpop.f32.mrf.mxu0
        %4976 = vmatprep.mubr.bf16.mxu0 0
        %4977 = vmatmul.mubr.bf16.gmra.mxu0 %v4903
        %v4978 = vpop.f32.mrf.mxu0
        %v4979 = vadd.f32 0.0, %v4978
        %v4980 = vpop.f32.mrf.mxu0
        %v4981 = vpop.f32.mrf.mxu0
        %v4982 = vadd.f32 0.0, %v4981
        %v4983 = vpop.f32.mrf.mxu0
        %4984 = vmatprep.mubr.bf16.mxu0 0
        %4985 = vmatmul.mubr.bf16.gmra.mxu0 %v4906
        %v4986 = vpop.f32.mrf.mxu0
        %v4987 = vadd.f32 0.0, %v4986
        %v4988 = vpop.f32.mrf.mxu0
        %v4989 = vpop.f32.mrf.mxu0
        %v4990 = vadd.f32 0.0, %v4989
        %v4991 = vpop.f32.mrf.mxu0
        %4992 = vmatprep.mubr.bf16.mxu0 0
        %4993 = vmatmul.mubr.bf16.gmra.mxu0 %v4909
        %v4994 = vpop.f32.mrf.mxu0
        %v4995 = vadd.f32 0.0, %v4994
        %v4996 = vpop.f32.mrf.mxu0
        %v4997 = vpop.f32.mrf.mxu0
        %v4998 = vadd.f32 0.0, %v4997
        %v4999 = vpop.f32.mrf.mxu0
        %5000 = vmatprep.mubr.bf16.mxu0 0
        %5001 = vmatmul.mubr.bf16.gmra.mxu0 %v4912
        %v5002 = vpop.f32.mrf.mxu0
        %v5003 = vadd.f32 0.0, %v5002
        %v5004 = vpop.f32.mrf.mxu0
        %v5005 = vpop.f32.mrf.mxu0
        %v5006 = vadd.f32 0.0, %v5005
        %v5007 = vpop.f32.mrf.mxu0
        %5008 = vmatprep.mubr.bf16.mxu0 0
        %5009 = vmatmul.mubr.bf16.gmra.mxu0 %v4915
        %v5010 = vpop.f32.mrf.mxu0
        %v5011 = vadd.f32 0.0, %v5010
        %v5012 = vpop.f32.mrf.mxu0
        %v5013 = vpop.f32.mrf.mxu0
        %v5014 = vadd.f32 0.0, %v5013
        %v5015 = vpop.f32.mrf.mxu0
        %5016 = vmatprep.mubr.bf16.mxu0 0
        %5017 = vmatmul.mubr.bf16.gmra.mxu0 %v4918
        %v5018 = vpop.f32.mrf.mxu0
        %v5019 = vadd.f32 0.0, %v5018
        %v5020 = vpop.f32.mrf.mxu0
        %v5021 = vpop.f32.mrf.mxu0
        %v5022 = vadd.f32 0.0, %v5021
        %v5023 = vpop.f32.mrf.mxu0
        %5024 = vdwg.mxu0
        %v5025 = vadd.f32 %v4749, %v4955
        %v5026 = vadd.f32 %v4750, %v4958
        %v5027 = vadd.f32 %v4751, %v4963
        %v5028 = vadd.f32 %v4752, %v4966
        %v5029 = vadd.f32 %v4753, %v4971
        %v5030 = vadd.f32 %v4754, %v4974
        %v5031 = vadd.f32 %v4755, %v4979
        %v5032 = vadd.f32 %v4756, %v4982
        %v5033 = vadd.f32 %v4757, %v4987
        %v5034 = vadd.f32 %v4758, %v4990
        %v5035 = vadd.f32 %v4759, %v4995
        %v5036 = vadd.f32 %v4760, %v4998
        %v5037 = vadd.f32 %v4761, %v5003
        %v5038 = vadd.f32 %v4762, %v5006
        %v5039 = vadd.f32 %v4763, %v5011
        %v5040 = vadd.f32 %v4764, %v5014
        %v5041 = vadd.f32 %v4765, %v5019
        %v5042 = vadd.f32 %v4766, %v5022
        %v5043 = vld [vmem:[#allocation3 + $0x8] sm:$0xc]
        %s5044 = scalar_lea.vmem %s4, 160
        %v5045 = vld [vmem:[%s5044] sm:$0xf]
        %v5046 = vld [vmem:[%s5044 + $0x4] sm:$0xf]
        %v5047 = vld [vmem:[%s5044 + $0x8] sm:$0xf]
        %v5048 = vld [vmem:[%s5044 + $0xc] sm:$0xf]
        %v5049 = vld [vmem:[%s5044 + $0x10] sm:$0xf]
        %v5050 = vld [vmem:[%s5044 + $0x14] sm:$0xf]
        %v5051 = vld [vmem:[%s5044 + $0x18] sm:$0xf]
        %v5052 = vld [vmem:[%s5044 + $0x1c] sm:$0xf]
        %v5054 = vunpack.c.l.b16 %v5043
        %v5055 = vpack.c.b16 %v4546, %v5054
        %v5056 = vrot.slane %v5055, 2
        %v5057 = vrot.slane %v4565, 2
        %v5058 = vsel %vm2134, %v5056, %v5057
        %v5059 = vrot.slane %v4566, 2
        %v5060 = vsel %vm2134, %v5057, %v5059
        %v5061 = vrot.slane %v4567, 2
        %v5062 = vsel %vm2134, %v5059, %v5061
        %v5063 = vrot.slane %v4568, 2
        %v5064 = vsel %vm2134, %v5061, %v5063
        %v5065 = vrot.slane %v4569, 2
        %v5066 = vsel %vm2134, %v5063, %v5065
        %v5067 = vrot.slane %v4570, 2
        %v5068 = vsel %vm2134, %v5065, %v5067
        %v5069 = vrot.slane %v4571, 2
        %v5070 = vsel %vm2134, %v5067, %v5069
        %v5071 = vrot.slane %v4572, 2
        %v5072 = vsel %vm2134, %v5069, %v5071
        %v5073 = vrot.slane %v4779, 2
        %v5074 = vsel %vm2134, %v5071, %v5073
        %v5083 = vunpack.c.l.b16 %v5045
        %v5084 = vunpack.c.l.b16 %v5046
        %v5085 = vunpack.c.l.b16 %v5047
        %v5086 = vunpack.c.l.b16 %v5048
        %v5087 = vunpack.c.l.b16 %v5049
        %v5088 = vunpack.c.l.b16 %v5050
        %v5089 = vunpack.c.l.b16 %v5051
        %v5090 = vunpack.c.l.b16 %v5052
        %v5091 = vpack.c.b16 %v5084, %v5083
        %v5092 = vpack.c.b16 %v5086, %v5085
        %v5093 = vpack.c.b16 %v5088, %v5087
        %v5094 = vpack.c.b16 %v5090, %v5089
        %v5100 = vsel %vm872, %v5058, 0
        %v5103 = vsel %vm872, %v5060, 0
        %v5106 = vsel %vm872, %v5062, 0
        %v5109 = vsel %vm872, %v5064, 0
        %v5112 = vsel %vm872, %v5066, 0
        %v5115 = vsel %vm872, %v5068, 0
        %v5118 = vsel %vm872, %v5070, 0
        %v5121 = vsel %vm872, %v5072, 0
        %v5124 = vsel %vm872, %v5074, 0
        %5126 = vmatprep.subr.bf16.mxu0 0
        %5127 = vmatpush1.bf16.msra.mxu0 0
        %5128 = vmatprep.subr.bf16.mxu0 0
        %5129 = vmatpush1.bf16.msra.mxu0 0
        %5130 = vmatprep.subr.bf16.mxu0 0
        %5131 = vmatpush1.bf16.msra.mxu0 0
        %5132 = vmatprep.subr.bf16.mxu0 0
        %5133 = vmatpush1.bf16.msra.mxu0 0
        %5134 = vmatprep.subr.bf16.mxu0 0
        %5135 = vmatpush1.bf16.msra.mxu0 %v5094
        %5136 = vmatprep.subr.bf16.mxu0 0
        %5137 = vmatpush1.bf16.msra.mxu0 %v5093
        %5138 = vmatprep.subr.bf16.mxu0 0
        %5139 = vmatpush1.bf16.msra.mxu0 %v5092
        %5140 = vmatprep.subr.bf16.mxu0 0
        %5141 = vmatpush1.bf16.msra.mxu0 %v5091
        %5142 = vmatprep.subr.bf16.mxu0 0
        %5143 = vmatpush2.bf16.msra.mxu0 0
        %5144 = vmatprep.subr.bf16.mxu0 0
        %5145 = vmatpush2.bf16.msra.mxu0 0
        %5146 = vmatprep.subr.bf16.mxu0 0
        %5147 = vmatpush2.bf16.msra.mxu0 0
        %5148 = vmatprep.subr.bf16.mxu0 0
        %5149 = vmatpush2.bf16.msra.mxu0 0
        %5150 = vmatprep.subr.bf16.mxu0 0
        %5151 = vmatpush2.bf16.msra.mxu0 0
        %5152 = vmatprep.subr.bf16.mxu0 0
        %5153 = vmatpush2.bf16.msra.mxu0 0
        %5154 = vmatprep.subr.bf16.mxu0 0
        %5155 = vmatpush2.bf16.msra.mxu0 0
        %5156 = vmatprep.subr.bf16.mxu0 0
        %5157 = vmatpush2.bf16.msra.mxu0 0
        %5158 = vmatprep.mubr.bf16.mxu0 0
        %5159 = vmatmul.mubr.bf16.gmra.mxu0 %v5100
        %v5160 = vpop.f32.mrf.mxu0
        %v5161 = vadd.f32 0.0, %v5160
        %v5162 = vpop.f32.mrf.mxu0
        %v5163 = vpop.f32.mrf.mxu0
        %v5164 = vadd.f32 0.0, %v5163
        %v5165 = vpop.f32.mrf.mxu0
        %5166 = vmatprep.mubr.bf16.mxu0 0
        %5167 = vmatmul.mubr.bf16.gmra.mxu0 %v5103
        %v5168 = vpop.f32.mrf.mxu0
        %v5169 = vadd.f32 0.0, %v5168
        %v5170 = vpop.f32.mrf.mxu0
        %v5171 = vpop.f32.mrf.mxu0
        %v5172 = vadd.f32 0.0, %v5171
        %v5173 = vpop.f32.mrf.mxu0
        %5174 = vmatprep.mubr.bf16.mxu0 0
        %5175 = vmatmul.mubr.bf16.gmra.mxu0 %v5106
        %v5176 = vpop.f32.mrf.mxu0
        %v5177 = vadd.f32 0.0, %v5176
        %v5178 = vpop.f32.mrf.mxu0
        %v5179 = vpop.f32.mrf.mxu0
        %v5180 = vadd.f32 0.0, %v5179
        %v5181 = vpop.f32.mrf.mxu0
        %5182 = vmatprep.mubr.bf16.mxu0 0
        %5183 = vmatmul.mubr.bf16.gmra.mxu0 %v5109
        %v5184 = vpop.f32.mrf.mxu0
        %v5185 = vadd.f32 0.0, %v5184
        %v5186 = vpop.f32.mrf.mxu0
        %v5187 = vpop.f32.mrf.mxu0
        %v5188 = vadd.f32 0.0, %v5187
        %v5189 = vpop.f32.mrf.mxu0
        %5190 = vmatprep.mubr.bf16.mxu0 0
        %5191 = vmatmul.mubr.bf16.gmra.mxu0 %v5112
        %v5192 = vpop.f32.mrf.mxu0
        %v5193 = vadd.f32 0.0, %v5192
        %v5194 = vpop.f32.mrf.mxu0
        %v5195 = vpop.f32.mrf.mxu0
        %v5196 = vadd.f32 0.0, %v5195
        %v5197 = vpop.f32.mrf.mxu0
        %5198 = vmatprep.mubr.bf16.mxu0 0
        %5199 = vmatmul.mubr.bf16.gmra.mxu0 %v5115
        %v5200 = vpop.f32.mrf.mxu0
        %v5201 = vadd.f32 0.0, %v5200
        %v5202 = vpop.f32.mrf.mxu0
        %v5203 = vpop.f32.mrf.mxu0
        %v5204 = vadd.f32 0.0, %v5203
        %v5205 = vpop.f32.mrf.mxu0
        %5206 = vmatprep.mubr.bf16.mxu0 0
        %5207 = vmatmul.mubr.bf16.gmra.mxu0 %v5118
        %v5208 = vpop.f32.mrf.mxu0
        %v5209 = vadd.f32 0.0, %v5208
        %v5210 = vpop.f32.mrf.mxu0
        %v5211 = vpop.f32.mrf.mxu0
        %v5212 = vadd.f32 0.0, %v5211
        %v5213 = vpop.f32.mrf.mxu0
        %5214 = vmatprep.mubr.bf16.mxu0 0
        %5215 = vmatmul.mubr.bf16.gmra.mxu0 %v5121
        %v5216 = vpop.f32.mrf.mxu0
        %v5217 = vadd.f32 0.0, %v5216
        %v5218 = vpop.f32.mrf.mxu0
        %v5219 = vpop.f32.mrf.mxu0
        %v5220 = vadd.f32 0.0, %v5219
        %v5221 = vpop.f32.mrf.mxu0
        %5222 = vmatprep.mubr.bf16.mxu0 0
        %5223 = vmatmul.mubr.bf16.gmra.mxu0 %v5124
        %v5224 = vpop.f32.mrf.mxu0
        %v5225 = vadd.f32 0.0, %v5224
        %v5226 = vpop.f32.mrf.mxu0
        %v5227 = vpop.f32.mrf.mxu0
        %v5228 = vadd.f32 0.0, %v5227
        %v5229 = vpop.f32.mrf.mxu0
        %5230 = vdwg.mxu0
        %v5231 = vadd.f32 %v5025, %v5161
        %v5232 = vadd.f32 %v5026, %v5164
        %v5233 = vadd.f32 %v5027, %v5169
        %v5234 = vadd.f32 %v5028, %v5172
        %v5235 = vadd.f32 %v5029, %v5177
        %v5236 = vadd.f32 %v5030, %v5180
        %v5237 = vadd.f32 %v5031, %v5185
        %v5238 = vadd.f32 %v5032, %v5188
        %v5239 = vadd.f32 %v5033, %v5193
        %v5240 = vadd.f32 %v5034, %v5196
        %v5241 = vadd.f32 %v5035, %v5201
        %v5242 = vadd.f32 %v5036, %v5204
        %v5243 = vadd.f32 %v5037, %v5209
        %v5244 = vadd.f32 %v5038, %v5212
        %v5245 = vadd.f32 %v5039, %v5217
        %v5246 = vadd.f32 %v5040, %v5220
        %v5247 = vadd.f32 %v5041, %v5225
        %v5248 = vadd.f32 %v5042, %v5228
        %v5249 = vld [vmem:[#allocation3 + $0x10] sm:$0xc]
        %v5250 = vld [vmem:[#allocation3 + $0x14] sm:$0xf]
        %v5251 = vld [vmem:[#allocation3 + $0x18] sm:$0xf]
        %v5252 = vld [vmem:[#allocation3 + $0x1c] sm:$0xf]
        %v5253 = vld [vmem:[#allocation3 + $0x20] sm:$0xf]
        %v5254 = vld [vmem:[#allocation3 + $0x24] sm:$0xf]
        %v5255 = vld [vmem:[#allocation3 + $0x28] sm:$0xf]
        %v5256 = vld [vmem:[#allocation3 + $0x2c] sm:$0xf]
        %v5257 = vld [vmem:[#allocation3 + $0x30] sm:$0xf]
        %v5258 = vld [vmem:[#allocation3 + $0x34] sm:$0xf]
        %v5259 = vld [vmem:[#allocation3 + $0x38] sm:$0xf]
        %v5260 = vld [vmem:[#allocation3 + $0x3c] sm:$0xf]
        %v5261 = vld [vmem:[#allocation3 + $0x40] sm:$0xf]
        %v5262 = vld [vmem:[#allocation3 + $0x44] sm:$0xf]
        %v5263 = vld [vmem:[#allocation3 + $0x48] sm:$0xf]
        %v5264 = vld [vmem:[#allocation3 + $0x4c] sm:$0xf]
        %v5265 = vld [vmem:[#allocation3 + $0x50] sm:$0xf]
        %v5266 = vld [vmem:[#allocation3 + $0x54] sm:$0xf]
        %v5267 = vld [vmem:[#allocation3 + $0x58] sm:$0x3]
        %s5268 = scalar_lea.vmem %s4, 192
        %v5269 = vld [vmem:[%s5268] sm:$0xf]
        %v5270 = vld [vmem:[%s5268 + $0x4] sm:$0xf]
        %v5271 = vld [vmem:[%s5268 + $0x8] sm:$0xf]
        %v5272 = vld [vmem:[%s5268 + $0xc] sm:$0xf]
        %v5273 = vld [vmem:[%s5268 + $0x10] sm:$0xf]
        %v5274 = vld [vmem:[%s5268 + $0x14] sm:$0xf]
        %v5275 = vld [vmem:[%s5268 + $0x18] sm:$0xf]
        %v5276 = vld [vmem:[%s5268 + $0x1c] sm:$0xf]
        %v5296 = vunpack.c.l.b16 %v5249
        %v5297 = vunpack.c.l.b16 %v5250
        %v5298 = vunpack.c.l.b16 %v5251
        %v5299 = vunpack.c.l.b16 %v5252
        %v5300 = vunpack.c.l.b16 %v5253
        %v5301 = vunpack.c.l.b16 %v5254
        %v5302 = vunpack.c.l.b16 %v5255
        %v5303 = vunpack.c.l.b16 %v5256
        %v5304 = vunpack.c.l.b16 %v5257
        %v5305 = vunpack.c.l.b16 %v5258
        %v5306 = vunpack.c.l.b16 %v5259
        %v5307 = vunpack.c.l.b16 %v5260
        %v5308 = vunpack.c.l.b16 %v5261
        %v5309 = vunpack.c.l.b16 %v5262
        %v5310 = vunpack.c.l.b16 %v5263
        %v5311 = vunpack.c.l.b16 %v5264
        %v5312 = vunpack.c.l.b16 %v5265
        %v5313 = vunpack.c.l.b16 %v5266
        %v5314 = vunpack.c.l.b16 %v5267
        %v5315 = vpack.c.b16 %v5297, %v5296
        %v5316 = vpack.c.b16 %v5299, %v5298
        %v5317 = vpack.c.b16 %v5301, %v5300
        %v5318 = vpack.c.b16 %v5303, %v5302
        %v5319 = vpack.c.b16 %v5305, %v5304
        %v5320 = vpack.c.b16 %v5307, %v5306
        %v5321 = vpack.c.b16 %v5309, %v5308
        %v5322 = vpack.c.b16 %v5311, %v5310
        %v5323 = vpack.c.b16 %v5313, %v5312
        %v5324 = vpack.c.b16 %v5314, %v5314
        %v5325 = vrot.slane %v5315, 2
        %v5326 = vrot.slane %v5316, 2
        %v5327 = vsel %vm2134, %v5325, %v5326
        %v5328 = vrot.slane %v5317, 2
        %v5329 = vsel %vm2134, %v5326, %v5328
        %v5330 = vrot.slane %v5318, 2
        %v5331 = vsel %vm2134, %v5328, %v5330
        %v5332 = vrot.slane %v5319, 2
        %v5333 = vsel %vm2134, %v5330, %v5332
        %v5334 = vrot.slane %v5320, 2
        %v5335 = vsel %vm2134, %v5332, %v5334
        %v5336 = vrot.slane %v5321, 2
        %v5337 = vsel %vm2134, %v5334, %v5336
        %v5338 = vrot.slane %v5322, 2
        %v5339 = vsel %vm2134, %v5336, %v5338
        %v5340 = vrot.slane %v5323, 2
        %v5341 = vsel %vm2134, %v5338, %v5340
        %v5342 = vrot.slane %v5324, 2
        %v5343 = vsel %vm2134, %v5340, %v5342
        %v5352 = vunpack.c.l.b16 %v5269
        %v5353 = vunpack.c.l.b16 %v5270
        %v5354 = vunpack.c.l.b16 %v5271
        %v5355 = vunpack.c.l.b16 %v5272
        %v5356 = vunpack.c.l.b16 %v5273
        %v5357 = vunpack.c.l.b16 %v5274
        %v5358 = vunpack.c.l.b16 %v5275
        %v5359 = vunpack.c.l.b16 %v5276
        %v5360 = vpack.c.b16 %v5353, %v5352
        %v5361 = vpack.c.b16 %v5355, %v5354
        %v5362 = vpack.c.b16 %v5357, %v5356
        %v5363 = vpack.c.b16 %v5359, %v5358
        %v5369 = vsel %vm872, %v5327, 0
        %v5372 = vsel %vm872, %v5329, 0
        %v5375 = vsel %vm872, %v5331, 0
        %v5378 = vsel %vm872, %v5333, 0
        %v5381 = vsel %vm872, %v5335, 0
        %v5384 = vsel %vm872, %v5337, 0
        %v5387 = vsel %vm872, %v5339, 0
        %v5390 = vsel %vm872, %v5341, 0
        %v5393 = vsel %vm872, %v5343, 0
        %5395 = vmatprep.subr.bf16.mxu0 0
        %5396 = vmatpush1.bf16.msra.mxu0 0
        %5397 = vmatprep.subr.bf16.mxu0 0
        %5398 = vmatpush1.bf16.msra.mxu0 0
        %5399 = vmatprep.subr.bf16.mxu0 0
        %5400 = vmatpush1.bf16.msra.mxu0 0
        %5401 = vmatprep.subr.bf16.mxu0 0
        %5402 = vmatpush1.bf16.msra.mxu0 0
        %5403 = vmatprep.subr.bf16.mxu0 0
        %5404 = vmatpush1.bf16.msra.mxu0 %v5363
        %5405 = vmatprep.subr.bf16.mxu0 0
        %5406 = vmatpush1.bf16.msra.mxu0 %v5362
        %5407 = vmatprep.subr.bf16.mxu0 0
        %5408 = vmatpush1.bf16.msra.mxu0 %v5361
        %5409 = vmatprep.subr.bf16.mxu0 0
        %5410 = vmatpush1.bf16.msra.mxu0 %v5360
        %5411 = vmatprep.subr.bf16.mxu0 0
        %5412 = vmatpush2.bf16.msra.mxu0 0
        %5413 = vmatprep.subr.bf16.mxu0 0
        %5414 = vmatpush2.bf16.msra.mxu0 0
        %5415 = vmatprep.subr.bf16.mxu0 0
        %5416 = vmatpush2.bf16.msra.mxu0 0
        %5417 = vmatprep.subr.bf16.mxu0 0
        %5418 = vmatpush2.bf16.msra.mxu0 0
        %5419 = vmatprep.subr.bf16.mxu0 0
        %5420 = vmatpush2.bf16.msra.mxu0 0
        %5421 = vmatprep.subr.bf16.mxu0 0
        %5422 = vmatpush2.bf16.msra.mxu0 0
        %5423 = vmatprep.subr.bf16.mxu0 0
        %5424 = vmatpush2.bf16.msra.mxu0 0
        %5425 = vmatprep.subr.bf16.mxu0 0
        %5426 = vmatpush2.bf16.msra.mxu0 0
        %5427 = vmatprep.mubr.bf16.mxu0 0
        %5428 = vmatmul.mubr.bf16.gmra.mxu0 %v5369
        %v5429 = vpop.f32.mrf.mxu0
        %v5430 = vadd.f32 0.0, %v5429
        %v5431 = vpop.f32.mrf.mxu0
        %v5432 = vpop.f32.mrf.mxu0
        %v5433 = vadd.f32 0.0, %v5432
        %v5434 = vpop.f32.mrf.mxu0
        %5435 = vmatprep.mubr.bf16.mxu0 0
        %5436 = vmatmul.mubr.bf16.gmra.mxu0 %v5372
        %v5437 = vpop.f32.mrf.mxu0
        %v5438 = vadd.f32 0.0, %v5437
        %v5439 = vpop.f32.mrf.mxu0
        %v5440 = vpop.f32.mrf.mxu0
        %v5441 = vadd.f32 0.0, %v5440
        %v5442 = vpop.f32.mrf.mxu0
        %5443 = vmatprep.mubr.bf16.mxu0 0
        %5444 = vmatmul.mubr.bf16.gmra.mxu0 %v5375
        %v5445 = vpop.f32.mrf.mxu0
        %v5446 = vadd.f32 0.0, %v5445
        %v5447 = vpop.f32.mrf.mxu0
        %v5448 = vpop.f32.mrf.mxu0
        %v5449 = vadd.f32 0.0, %v5448
        %v5450 = vpop.f32.mrf.mxu0
        %5451 = vmatprep.mubr.bf16.mxu0 0
        %5452 = vmatmul.mubr.bf16.gmra.mxu0 %v5378
        %v5453 = vpop.f32.mrf.mxu0
        %v5454 = vadd.f32 0.0, %v5453
        %v5455 = vpop.f32.mrf.mxu0
        %v5456 = vpop.f32.mrf.mxu0
        %v5457 = vadd.f32 0.0, %v5456
        %v5458 = vpop.f32.mrf.mxu0
        %5459 = vmatprep.mubr.bf16.mxu0 0
        %5460 = vmatmul.mubr.bf16.gmra.mxu0 %v5381
        %v5461 = vpop.f32.mrf.mxu0
        %v5462 = vadd.f32 0.0, %v5461
        %v5463 = vpop.f32.mrf.mxu0
        %v5464 = vpop.f32.mrf.mxu0
        %v5465 = vadd.f32 0.0, %v5464
        %v5466 = vpop.f32.mrf.mxu0
        %5467 = vmatprep.mubr.bf16.mxu0 0
        %5468 = vmatmul.mubr.bf16.gmra.mxu0 %v5384
        %v5469 = vpop.f32.mrf.mxu0
        %v5470 = vadd.f32 0.0, %v5469
        %v5471 = vpop.f32.mrf.mxu0
        %v5472 = vpop.f32.mrf.mxu0
        %v5473 = vadd.f32 0.0, %v5472
        %v5474 = vpop.f32.mrf.mxu0
        %5475 = vmatprep.mubr.bf16.mxu0 0
        %5476 = vmatmul.mubr.bf16.gmra.mxu0 %v5387
        %v5477 = vpop.f32.mrf.mxu0
        %v5478 = vadd.f32 0.0, %v5477
        %v5479 = vpop.f32.mrf.mxu0
        %v5480 = vpop.f32.mrf.mxu0
        %v5481 = vadd.f32 0.0, %v5480
        %v5482 = vpop.f32.mrf.mxu0
        %5483 = vmatprep.mubr.bf16.mxu0 0
        %5484 = vmatmul.mubr.bf16.gmra.mxu0 %v5390
        %v5485 = vpop.f32.mrf.mxu0
        %v5486 = vadd.f32 0.0, %v5485
        %v5487 = vpop.f32.mrf.mxu0
        %v5488 = vpop.f32.mrf.mxu0
        %v5489 = vadd.f32 0.0, %v5488
        %v5490 = vpop.f32.mrf.mxu0
        %5491 = vmatprep.mubr.bf16.mxu0 0
        %5492 = vmatmul.mubr.bf16.gmra.mxu0 %v5393
        %v5493 = vpop.f32.mrf.mxu0
        %v5494 = vadd.f32 0.0, %v5493
        %v5495 = vpop.f32.mrf.mxu0
        %v5496 = vpop.f32.mrf.mxu0
        %v5497 = vadd.f32 0.0, %v5496
        %v5498 = vpop.f32.mrf.mxu0
        %5499 = vdwg.mxu0
        %v5500 = vadd.f32 %v5231, %v5430
        %v5501 = vadd.f32 %v5232, %v5433
        %v5502 = vadd.f32 %v5233, %v5438
        %v5503 = vadd.f32 %v5234, %v5441
        %v5504 = vadd.f32 %v5235, %v5446
        %v5505 = vadd.f32 %v5236, %v5449
        %v5506 = vadd.f32 %v5237, %v5454
        %v5507 = vadd.f32 %v5238, %v5457
        %v5508 = vadd.f32 %v5239, %v5462
        %v5509 = vadd.f32 %v5240, %v5465
        %v5510 = vadd.f32 %v5241, %v5470
        %v5511 = vadd.f32 %v5242, %v5473
        %v5512 = vadd.f32 %v5243, %v5478
        %v5513 = vadd.f32 %v5244, %v5481
        %v5514 = vadd.f32 %v5245, %v5486
        %v5515 = vadd.f32 %v5246, %v5489
        %v5516 = vadd.f32 %v5247, %v5494
        %v5517 = vadd.f32 %v5248, %v5497
        %v5518 = vld [vmem:[#allocation3 + $0x58] sm:$0x7]
        %s5519 = scalar_lea.vmem %s4, 224
        %v5520 = vld [vmem:[%s5519] sm:$0xf]
        %v5521 = vld [vmem:[%s5519 + $0x4] sm:$0xf]
        %v5522 = vld [vmem:[%s5519 + $0x8] sm:$0xf]
        %v5523 = vld [vmem:[%s5519 + $0xc] sm:$0xf]
        %v5524 = vld [vmem:[%s5519 + $0x10] sm:$0xf]
        %v5525 = vld [vmem:[%s5519 + $0x14] sm:$0xf]
        %v5526 = vld [vmem:[%s5519 + $0x18] sm:$0xf]
        %v5527 = vld [vmem:[%s5519 + $0x1c] sm:$0xf]
        %v5529 = vunpack.c.l.b16 %v5518
        %v5530 = vpack.c.b16 %v5529, %v5529
        %v5532 = vshrl.u32 %v5315, 16
        %v5534 = vrot.slane %v5532, 2
        %v5535 = vshll.u32 %v5315, 16
        %v5537 = vrot.slane %v5535, 3
        %v5538 = vor.u32 %v5534, %v5537
        %v5540 = vshrl.u32 %v5316, 16
        %v5542 = vrot.slane %v5540, 2
        %v5543 = vshll.u32 %v5316, 16
        %v5545 = vrot.slane %v5543, 3
        %v5546 = vor.u32 %v5542, %v5545
        %v5547 = vsel %vm2786, %v5538, %v5546
        %v5549 = vshrl.u32 %v5317, 16
        %v5551 = vrot.slane %v5549, 2
        %v5552 = vshll.u32 %v5317, 16
        %v5554 = vrot.slane %v5552, 3
        %v5555 = vor.u32 %v5551, %v5554
        %v5556 = vsel %vm2786, %v5546, %v5555
        %v5558 = vshrl.u32 %v5318, 16
        %v5560 = vrot.slane %v5558, 2
        %v5561 = vshll.u32 %v5318, 16
        %v5563 = vrot.slane %v5561, 3
        %v5564 = vor.u32 %v5560, %v5563
        %v5565 = vsel %vm2786, %v5555, %v5564
        %v5567 = vshrl.u32 %v5319, 16
        %v5569 = vrot.slane %v5567, 2
        %v5570 = vshll.u32 %v5319, 16
        %v5572 = vrot.slane %v5570, 3
        %v5573 = vor.u32 %v5569, %v5572
        %v5574 = vsel %vm2786, %v5564, %v5573
        %v5576 = vshrl.u32 %v5320, 16
        %v5578 = vrot.slane %v5576, 2
        %v5579 = vshll.u32 %v5320, 16
        %v5581 = vrot.slane %v5579, 3
        %v5582 = vor.u32 %v5578, %v5581
        %v5583 = vsel %vm2786, %v5573, %v5582
        %v5585 = vshrl.u32 %v5321, 16
        %v5587 = vrot.slane %v5585, 2
        %v5588 = vshll.u32 %v5321, 16
        %v5590 = vrot.slane %v5588, 3
        %v5591 = vor.u32 %v5587, %v5590
        %v5592 = vsel %vm2786, %v5582, %v5591
        %v5594 = vshrl.u32 %v5322, 16
        %v5596 = vrot.slane %v5594, 2
        %v5597 = vshll.u32 %v5322, 16
        %v5599 = vrot.slane %v5597, 3
        %v5600 = vor.u32 %v5596, %v5599
        %v5601 = vsel %vm2786, %v5591, %v5600
        %v5603 = vshrl.u32 %v5323, 16
        %v5605 = vrot.slane %v5603, 2
        %v5606 = vshll.u32 %v5323, 16
        %v5608 = vrot.slane %v5606, 3
        %v5609 = vor.u32 %v5605, %v5608
        %v5610 = vsel %vm2786, %v5600, %v5609
        %v5612 = vshrl.u32 %v5530, 16
        %v5614 = vrot.slane %v5612, 2
        %v5615 = vshll.u32 %v5530, 16
        %v5617 = vrot.slane %v5615, 3
        %v5618 = vor.u32 %v5614, %v5617
        %v5619 = vsel %vm2786, %v5609, %v5618
        %v5628 = vunpack.c.l.b16 %v5520
        %v5629 = vunpack.c.l.b16 %v5521
        %v5630 = vunpack.c.l.b16 %v5522
        %v5631 = vunpack.c.l.b16 %v5523
        %v5632 = vunpack.c.l.b16 %v5524
        %v5633 = vunpack.c.l.b16 %v5525
        %v5634 = vunpack.c.l.b16 %v5526
        %v5635 = vunpack.c.l.b16 %v5527
        %v5636 = vpack.c.b16 %v5629, %v5628
        %v5637 = vpack.c.b16 %v5631, %v5630
        %v5638 = vpack.c.b16 %v5633, %v5632
        %v5639 = vpack.c.b16 %v5635, %v5634
        %v5645 = vsel %vm872, %v5547, 0
        %v5648 = vsel %vm872, %v5556, 0
        %v5651 = vsel %vm872, %v5565, 0
        %v5654 = vsel %vm872, %v5574, 0
        %v5657 = vsel %vm872, %v5583, 0
        %v5660 = vsel %vm872, %v5592, 0
        %v5663 = vsel %vm872, %v5601, 0
        %v5666 = vsel %vm872, %v5610, 0
        %v5669 = vsel %vm872, %v5619, 0
        %5671 = vmatprep.subr.bf16.mxu0 0
        %5672 = vmatpush1.bf16.msra.mxu0 0
        %5673 = vmatprep.subr.bf16.mxu0 0
        %5674 = vmatpush1.bf16.msra.mxu0 0
        %5675 = vmatprep.subr.bf16.mxu0 0
        %5676 = vmatpush1.bf16.msra.mxu0 0
        %5677 = vmatprep.subr.bf16.mxu0 0
        %5678 = vmatpush1.bf16.msra.mxu0 0
        %5679 = vmatprep.subr.bf16.mxu0 0
        %5680 = vmatpush1.bf16.msra.mxu0 %v5639
        %5681 = vmatprep.subr.bf16.mxu0 0
        %5682 = vmatpush1.bf16.msra.mxu0 %v5638
        %5683 = vmatprep.subr.bf16.mxu0 0
        %5684 = vmatpush1.bf16.msra.mxu0 %v5637
        %5685 = vmatprep.subr.bf16.mxu0 0
        %5686 = vmatpush1.bf16.msra.mxu0 %v5636
        %5687 = vmatprep.subr.bf16.mxu0 0
        %5688 = vmatpush2.bf16.msra.mxu0 0
        %5689 = vmatprep.subr.bf16.mxu0 0
        %5690 = vmatpush2.bf16.msra.mxu0 0
        %5691 = vmatprep.subr.bf16.mxu0 0
        %5692 = vmatpush2.bf16.msra.mxu0 0
        %5693 = vmatprep.subr.bf16.mxu0 0
        %5694 = vmatpush2.bf16.msra.mxu0 0
        %5695 = vmatprep.subr.bf16.mxu0 0
        %5696 = vmatpush2.bf16.msra.mxu0 0
        %5697 = vmatprep.subr.bf16.mxu0 0
        %5698 = vmatpush2.bf16.msra.mxu0 0
        %5699 = vmatprep.subr.bf16.mxu0 0
        %5700 = vmatpush2.bf16.msra.mxu0 0
        %5701 = vmatprep.subr.bf16.mxu0 0
        %5702 = vmatpush2.bf16.msra.mxu0 0
        %5703 = vmatprep.mubr.bf16.mxu0 0
        %5704 = vmatmul.mubr.bf16.gmra.mxu0 %v5645
        %v5705 = vpop.f32.mrf.mxu0
        %v5706 = vadd.f32 0.0, %v5705
        %v5707 = vpop.f32.mrf.mxu0
        %v5708 = vpop.f32.mrf.mxu0
        %v5709 = vadd.f32 0.0, %v5708
        %v5710 = vpop.f32.mrf.mxu0
        %5711 = vmatprep.mubr.bf16.mxu0 0
        %5712 = vmatmul.mubr.bf16.gmra.mxu0 %v5648
        %v5713 = vpop.f32.mrf.mxu0
        %v5714 = vadd.f32 0.0, %v5713
        %v5715 = vpop.f32.mrf.mxu0
        %v5716 = vpop.f32.mrf.mxu0
        %v5717 = vadd.f32 0.0, %v5716
        %v5718 = vpop.f32.mrf.mxu0
        %5719 = vmatprep.mubr.bf16.mxu0 0
        %5720 = vmatmul.mubr.bf16.gmra.mxu0 %v5651
        %v5721 = vpop.f32.mrf.mxu0
        %v5722 = vadd.f32 0.0, %v5721
        %v5723 = vpop.f32.mrf.mxu0
        %v5724 = vpop.f32.mrf.mxu0
        %v5725 = vadd.f32 0.0, %v5724
        %v5726 = vpop.f32.mrf.mxu0
        %5727 = vmatprep.mubr.bf16.mxu0 0
        %5728 = vmatmul.mubr.bf16.gmra.mxu0 %v5654
        %v5729 = vpop.f32.mrf.mxu0
        %v5730 = vadd.f32 0.0, %v5729
        %v5731 = vpop.f32.mrf.mxu0
        %v5732 = vpop.f32.mrf.mxu0
        %v5733 = vadd.f32 0.0, %v5732
        %v5734 = vpop.f32.mrf.mxu0
        %5735 = vmatprep.mubr.bf16.mxu0 0
        %5736 = vmatmul.mubr.bf16.gmra.mxu0 %v5657
        %v5737 = vpop.f32.mrf.mxu0
        %v5738 = vadd.f32 0.0, %v5737
        %v5739 = vpop.f32.mrf.mxu0
        %v5740 = vpop.f32.mrf.mxu0
        %v5741 = vadd.f32 0.0, %v5740
        %v5742 = vpop.f32.mrf.mxu0
        %5743 = vmatprep.mubr.bf16.mxu0 0
        %5744 = vmatmul.mubr.bf16.gmra.mxu0 %v5660
        %v5745 = vpop.f32.mrf.mxu0
        %v5746 = vadd.f32 0.0, %v5745
        %v5747 = vpop.f32.mrf.mxu0
        %v5748 = vpop.f32.mrf.mxu0
        %v5749 = vadd.f32 0.0, %v5748
        %v5750 = vpop.f32.mrf.mxu0
        %5751 = vmatprep.mubr.bf16.mxu0 0
        %5752 = vmatmul.mubr.bf16.gmra.mxu0 %v5663
        %v5753 = vpop.f32.mrf.mxu0
        %v5754 = vadd.f32 0.0, %v5753
        %v5755 = vpop.f32.mrf.mxu0
        %v5756 = vpop.f32.mrf.mxu0
        %v5757 = vadd.f32 0.0, %v5756
        %v5758 = vpop.f32.mrf.mxu0
        %5759 = vmatprep.mubr.bf16.mxu0 0
        %5760 = vmatmul.mubr.bf16.gmra.mxu0 %v5666
        %v5761 = vpop.f32.mrf.mxu0
        %v5762 = vadd.f32 0.0, %v5761
        %v5763 = vpop.f32.mrf.mxu0
        %v5764 = vpop.f32.mrf.mxu0
        %v5765 = vadd.f32 0.0, %v5764
        %v5766 = vpop.f32.mrf.mxu0
        %5767 = vmatprep.mubr.bf16.mxu0 0
        %5768 = vmatmul.mubr.bf16.gmra.mxu0 %v5669
        %v5769 = vpop.f32.mrf.mxu0
        %v5770 = vadd.f32 0.0, %v5769
        %v5771 = vpop.f32.mrf.mxu0
        %v5772 = vpop.f32.mrf.mxu0
        %v5773 = vadd.f32 0.0, %v5772
        %v5774 = vpop.f32.mrf.mxu0
        %5775 = vdwg.mxu0
        %v5776 = vadd.f32 %v5500, %v5706
        %v5777 = vadd.f32 %v5501, %v5709
        %v5778 = vadd.f32 %v5502, %v5714
        %v5779 = vadd.f32 %v5503, %v5717
        %v5780 = vadd.f32 %v5504, %v5722
        %v5781 = vadd.f32 %v5505, %v5725
        %v5782 = vadd.f32 %v5506, %v5730
        %v5783 = vadd.f32 %v5507, %v5733
        %v5784 = vadd.f32 %v5508, %v5738
        %v5785 = vadd.f32 %v5509, %v5741
        %v5786 = vadd.f32 %v5510, %v5746
        %v5787 = vadd.f32 %v5511, %v5749
        %v5788 = vadd.f32 %v5512, %v5754
        %v5789 = vadd.f32 %v5513, %v5757
        %v5790 = vadd.f32 %v5514, %v5762
        %v5791 = vadd.f32 %v5515, %v5765
        %v5792 = vadd.f32 %v5516, %v5770
        %v5793 = vadd.f32 %v5517, %v5773
        %v5794 = vld [vmem:[#allocation3 + $0x10] sm:$0x8]
        %s5795 = scalar_lea.vmem %s4, 256
        %v5796 = vld [vmem:[%s5795] sm:$0xf]
        %v5797 = vld [vmem:[%s5795 + $0x4] sm:$0xf]
        %v5798 = vld [vmem:[%s5795 + $0x8] sm:$0xf]
        %v5799 = vld [vmem:[%s5795 + $0xc] sm:$0xf]
        %v5800 = vld [vmem:[%s5795 + $0x10] sm:$0xf]
        %v5801 = vld [vmem:[%s5795 + $0x14] sm:$0xf]
        %v5802 = vld [vmem:[%s5795 + $0x18] sm:$0xf]
        %v5803 = vld [vmem:[%s5795 + $0x1c] sm:$0xf]
        %v5805 = vunpack.c.l.b16 %v5794
        %v5806 = vpack.c.b16 %v5297, %v5805
        %v5807 = vrot.slane %v5806, 3
        %v5808 = vrot.slane %v5316, 3
        %v5809 = vsel %vm3118, %v5807, %v5808
        %v5810 = vrot.slane %v5317, 3
        %v5811 = vsel %vm3118, %v5808, %v5810
        %v5812 = vrot.slane %v5318, 3
        %v5813 = vsel %vm3118, %v5810, %v5812
        %v5814 = vrot.slane %v5319, 3
        %v5815 = vsel %vm3118, %v5812, %v5814
        %v5816 = vrot.slane %v5320, 3
        %v5817 = vsel %vm3118, %v5814, %v5816
        %v5818 = vrot.slane %v5321, 3
        %v5819 = vsel %vm3118, %v5816, %v5818
        %v5820 = vrot.slane %v5322, 3
        %v5821 = vsel %vm3118, %v5818, %v5820
        %v5822 = vrot.slane %v5323, 3
        %v5823 = vsel %vm3118, %v5820, %v5822
        %v5824 = vrot.slane %v5530, 3
        %v5825 = vsel %vm3118, %v5822, %v5824
        %v5834 = vunpack.c.l.b16 %v5796
        %v5835 = vunpack.c.l.b16 %v5797
        %v5836 = vunpack.c.l.b16 %v5798
        %v5837 = vunpack.c.l.b16 %v5799
        %v5838 = vunpack.c.l.b16 %v5800
        %v5839 = vunpack.c.l.b16 %v5801
        %v5840 = vunpack.c.l.b16 %v5802
        %v5841 = vunpack.c.l.b16 %v5803
        %v5842 = vpack.c.b16 %v5835, %v5834
        %v5843 = vpack.c.b16 %v5837, %v5836
        %v5844 = vpack.c.b16 %v5839, %v5838
        %v5845 = vpack.c.b16 %v5841, %v5840
        %v5851 = vsel %vm872, %v5809, 0
        %v5854 = vsel %vm872, %v5811, 0
        %v5857 = vsel %vm872, %v5813, 0
        %v5860 = vsel %vm872, %v5815, 0
        %v5863 = vsel %vm872, %v5817, 0
        %v5866 = vsel %vm872, %v5819, 0
        %v5869 = vsel %vm872, %v5821, 0
        %v5872 = vsel %vm872, %v5823, 0
        %v5875 = vsel %vm872, %v5825, 0
        %5877 = vmatprep.subr.bf16.mxu0 0
        %5878 = vmatpush1.bf16.msra.mxu0 0
        %5879 = vmatprep.subr.bf16.mxu0 0
        %5880 = vmatpush1.bf16.msra.mxu0 0
        %5881 = vmatprep.subr.bf16.mxu0 0
        %5882 = vmatpush1.bf16.msra.mxu0 0
        %5883 = vmatprep.subr.bf16.mxu0 0
        %5884 = vmatpush1.bf16.msra.mxu0 0
        %5885 = vmatprep.subr.bf16.mxu0 0
        %5886 = vmatpush1.bf16.msra.mxu0 %v5845
        %5887 = vmatprep.subr.bf16.mxu0 0
        %5888 = vmatpush1.bf16.msra.mxu0 %v5844
        %5889 = vmatprep.subr.bf16.mxu0 0
        %5890 = vmatpush1.bf16.msra.mxu0 %v5843
        %5891 = vmatprep.subr.bf16.mxu0 0
        %5892 = vmatpush1.bf16.msra.mxu0 %v5842
        %5893 = vmatprep.subr.bf16.mxu0 0
        %5894 = vmatpush2.bf16.msra.mxu0 0
        %5895 = vmatprep.subr.bf16.mxu0 0
        %5896 = vmatpush2.bf16.msra.mxu0 0
        %5897 = vmatprep.subr.bf16.mxu0 0
        %5898 = vmatpush2.bf16.msra.mxu0 0
        %5899 = vmatprep.subr.bf16.mxu0 0
        %5900 = vmatpush2.bf16.msra.mxu0 0
        %5901 = vmatprep.subr.bf16.mxu0 0
        %5902 = vmatpush2.bf16.msra.mxu0 0
        %5903 = vmatprep.subr.bf16.mxu0 0
        %5904 = vmatpush2.bf16.msra.mxu0 0
        %5905 = vmatprep.subr.bf16.mxu0 0
        %5906 = vmatpush2.bf16.msra.mxu0 0
        %5907 = vmatprep.subr.bf16.mxu0 0
        %5908 = vmatpush2.bf16.msra.mxu0 0
        %5909 = vmatprep.mubr.bf16.mxu0 0
        %5910 = vmatmul.mubr.bf16.gmra.mxu0 %v5851
        %v5911 = vpop.f32.mrf.mxu0
        %v5912 = vadd.f32 0.0, %v5911
        %v5913 = vpop.f32.mrf.mxu0
        %v5914 = vpop.f32.mrf.mxu0
        %v5915 = vadd.f32 0.0, %v5914
        %v5916 = vpop.f32.mrf.mxu0
        %5917 = vmatprep.mubr.bf16.mxu0 0
        %5918 = vmatmul.mubr.bf16.gmra.mxu0 %v5854
        %v5919 = vpop.f32.mrf.mxu0
        %v5920 = vadd.f32 0.0, %v5919
        %v5921 = vpop.f32.mrf.mxu0
        %v5922 = vpop.f32.mrf.mxu0
        %v5923 = vadd.f32 0.0, %v5922
        %v5924 = vpop.f32.mrf.mxu0
        %5925 = vmatprep.mubr.bf16.mxu0 0
        %5926 = vmatmul.mubr.bf16.gmra.mxu0 %v5857
        %v5927 = vpop.f32.mrf.mxu0
        %v5928 = vadd.f32 0.0, %v5927
        %v5929 = vpop.f32.mrf.mxu0
        %v5930 = vpop.f32.mrf.mxu0
        %v5931 = vadd.f32 0.0, %v5930
        %v5932 = vpop.f32.mrf.mxu0
        %5933 = vmatprep.mubr.bf16.mxu0 0
        %5934 = vmatmul.mubr.bf16.gmra.mxu0 %v5860
        %v5935 = vpop.f32.mrf.mxu0
        %v5936 = vadd.f32 0.0, %v5935
        %v5937 = vpop.f32.mrf.mxu0
        %v5938 = vpop.f32.mrf.mxu0
        %v5939 = vadd.f32 0.0, %v5938
        %v5940 = vpop.f32.mrf.mxu0
        %5941 = vmatprep.mubr.bf16.mxu0 0
        %5942 = vmatmul.mubr.bf16.gmra.mxu0 %v5863
        %v5943 = vpop.f32.mrf.mxu0
        %v5944 = vadd.f32 0.0, %v5943
        %v5945 = vpop.f32.mrf.mxu0
        %v5946 = vpop.f32.mrf.mxu0
        %v5947 = vadd.f32 0.0, %v5946
        %v5948 = vpop.f32.mrf.mxu0
        %5949 = vmatprep.mubr.bf16.mxu0 0
        %5950 = vmatmul.mubr.bf16.gmra.mxu0 %v5866
        %v5951 = vpop.f32.mrf.mxu0
        %v5952 = vadd.f32 0.0, %v5951
        %v5953 = vpop.f32.mrf.mxu0
        %v5954 = vpop.f32.mrf.mxu0
        %v5955 = vadd.f32 0.0, %v5954
        %v5956 = vpop.f32.mrf.mxu0
        %5957 = vmatprep.mubr.bf16.mxu0 0
        %5958 = vmatmul.mubr.bf16.gmra.mxu0 %v5869
        %v5959 = vpop.f32.mrf.mxu0
        %v5960 = vadd.f32 0.0, %v5959
        %v5961 = vpop.f32.mrf.mxu0
        %v5962 = vpop.f32.mrf.mxu0
        %v5963 = vadd.f32 0.0, %v5962
        %v5964 = vpop.f32.mrf.mxu0
        %5965 = vmatprep.mubr.bf16.mxu0 0
        %5966 = vmatmul.mubr.bf16.gmra.mxu0 %v5872
        %v5967 = vpop.f32.mrf.mxu0
        %v5968 = vadd.f32 0.0, %v5967
        %v5969 = vpop.f32.mrf.mxu0
        %v5970 = vpop.f32.mrf.mxu0
        %v5971 = vadd.f32 0.0, %v5970
        %v5972 = vpop.f32.mrf.mxu0
        %5973 = vmatprep.mubr.bf16.mxu0 0
        %5974 = vmatmul.mubr.bf16.gmra.mxu0 %v5875
        %v5975 = vpop.f32.mrf.mxu0
        %v5976 = vadd.f32 0.0, %v5975
        %v5977 = vpop.f32.mrf.mxu0
        %v5978 = vpop.f32.mrf.mxu0
        %v5979 = vadd.f32 0.0, %v5978
        %v5980 = vpop.f32.mrf.mxu0
        %5981 = vdwg.mxu0
        %v5982 = vadd.f32 %v5776, %v5912
        %v5983 = vadd.f32 %v5777, %v5915
        %v5984 = vadd.f32 %v5778, %v5920
        %v5985 = vadd.f32 %v5779, %v5923
        %v5986 = vadd.f32 %v5780, %v5928
        %v5987 = vadd.f32 %v5781, %v5931
        %v5988 = vadd.f32 %v5782, %v5936
        %v5989 = vadd.f32 %v5783, %v5939
        %v5990 = vadd.f32 %v5784, %v5944
        %v5991 = vadd.f32 %v5785, %v5947
        %v5992 = vadd.f32 %v5786, %v5952
        %v5993 = vadd.f32 %v5787, %v5955
        %v5994 = vadd.f32 %v5788, %v5960
        %v5995 = vadd.f32 %v5789, %v5963
        %v5996 = vadd.f32 %v5790, %v5968
        %v5997 = vadd.f32 %v5791, %v5971
        %v5998 = vadd.f32 %v5792, %v5976
        %v5999 = vadd.f32 %v5793, %v5979
        %v6000 = vld [vmem:[%s5] sm:$0x1]
        %v6002 = vlaneseq
        %v6003 = vshrl.u32 %v6002, 7
        %v6004 = vsub.s32 0, %v6003
        %v6005 = vrot.slane %v6000, %v6004
        %v6007 = vadd.f32 %v5982, %v6005
        %v6008 = vadd.f32 %v5983, %v6005
        %v6009 = vadd.f32 %v5984, %v6005
        %v6010 = vadd.f32 %v5985, %v6005
        %v6011 = vadd.f32 %v5986, %v6005
        %v6012 = vadd.f32 %v5987, %v6005
        %v6013 = vadd.f32 %v5988, %v6005
        %v6014 = vadd.f32 %v5989, %v6005
        %v6015 = vadd.f32 %v5990, %v6005
        %v6016 = vadd.f32 %v5991, %v6005
        %v6017 = vadd.f32 %v5992, %v6005
        %v6018 = vadd.f32 %v5993, %v6005
        %v6019 = vadd.f32 %v5994, %v6005
        %v6020 = vadd.f32 %v5995, %v6005
        %v6021 = vadd.f32 %v5996, %v6005
        %v6022 = vadd.f32 %v5997, %v6005
        %v6023 = vadd.f32 %v5998, %v6005
        %v6024 = vadd.f32 %v5999, %v6005
        %s6025 = smul.u32 %s266, 16
        %s6026 = scalar_lea.vmem %s263, %s6025
        %v6027 = vld [vmem:[%s6026] sm:$0xff]
        %v6028 = vld [vmem:[%s6026 + $0x8] sm:$0xff]
        %v6029 = vadd.f32 %v6007, %v6027
        %v6030 = vadd.f32 %v6008, %v6028
        %6031 = vst.msk [vmem:[%s258] sm:$0xff] %vm872, %v6029
        %6032 = vst.msk [vmem:[%s258 + $0x8] sm:$0xff] %vm872, %v6030
        %s6033 = smul.u32 %s394, 16
        %s6034 = scalar_lea.vmem %s263, %s6033
        %v6035 = vld [vmem:[%s6034] sm:$0xff]
        %v6036 = vld [vmem:[%s6034 + $0x8] sm:$0xff]
        %vm6039 = vcmask 1041408
        %v6040 = vrot.slane %v6035, 6
        %v6041 = vrot.slane %v6036, 6
        %v6042 = vsel %vm6039, %v6040, %v6041
        %v6046 = vadd.f32 %v6009, %v6040
        %v6047 = vadd.f32 %v6010, %v6042
        %v6048 = vadd.f32 %v6011, %v6041
        %s6049 = scalar_lea.vmem %s258, 16 [#allocation4]
        %vm6050 = vcmask 523266
        %6051 = vst.msk [vmem:[%s6049 - $0x2] sm:$0xfc] %vm6050, %v6046
        %6052 = vst.msk [vmem:[%s6049 + $0x6] sm:$0xff] %vm872, %v6047
        %6053 = vst.msk [vmem:[%s6049 + $0xe] sm:$0x3] %vm3827, %v6048
        %s6054 = smul.u32 %s415, 16
        %s6055 = scalar_lea.vmem %s263, %s6054
        %v6056 = vld [vmem:[%s6055] sm:$0xff]
        %v6057 = vld [vmem:[%s6055 + $0x8] sm:$0xff]
        %vm6060 = vcmask 1043456
        %v6061 = vrot.slane %v6056, 4
        %v6062 = vrot.slane %v6057, 4
        %v6063 = vsel %vm6060, %v6061, %v6062
        %v6067 = vadd.f32 %v6011, %v6061
        %v6068 = vadd.f32 %v6012, %v6063
        %v6069 = vadd.f32 %v6013, %v6062
        %s6070 = scalar_lea.vmem %s258, 32 [#allocation4]
        %vm6071 = vcmask 523268
        %6072 = vst.msk [vmem:[%s6070 - $0x4] sm:$0xf0] %vm6071, %v6067
        %6073 = vst.msk [vmem:[%s6070 + $0x4] sm:$0xff] %vm872, %v6068
        %6074 = vst.msk [vmem:[%s6070 + $0xc] sm:$0xf] %vm267, %v6069
        %s6075 = smul.u32 %s447, 16
        %s6076 = scalar_lea.vmem %s263, %s6075
        %v6077 = vld [vmem:[%s6076] sm:$0xff]
        %v6078 = vld [vmem:[%s6076 + $0x8] sm:$0xff]
        %vm6081 = vcmask 1045504
        %v6082 = vrot.slane %v6077, 2
        %v6083 = vrot.slane %v6078, 2
        %v6084 = vsel %vm6081, %v6082, %v6083
        %v6088 = vadd.f32 %v6013, %v6082
        %v6089 = vadd.f32 %v6014, %v6084
        %v6090 = vadd.f32 %v6015, %v6083
        %s6091 = scalar_lea.vmem %s258, 48 [#allocation4]
        %vm6092 = vcmask 523270
        %6093 = vst.msk [vmem:[%s6091 - $0x6] sm:$0xc0] %vm6092, %v6088
        %6094 = vst.msk [vmem:[%s6091 + $0x2] sm:$0xff] %vm872, %v6089
        %vm6095 = vcmask 521216
        %6096 = vst.msk [vmem:[%s6091 + $0xa] sm:$0x3f] %vm6095, %v6090
        %s6097 = smul.u32 %s480, 16
        %s6098 = scalar_lea.vmem %s263, %s6097
        %v6099 = vld [vmem:[%s6098] sm:$0xff]
        %v6100 = vld [vmem:[%s6098 + $0x8] sm:$0xff]
        %v6101 = vadd.f32 %v6016, %v6099
        %v6102 = vadd.f32 %v6017, %v6100
        %s6103 = scalar_lea.vmem %s258, 64 [#allocation4]
        %6104 = vst.msk [vmem:[%s6103] sm:$0xff] %vm872, %v6101
        %6105 = vst.msk [vmem:[%s6103 + $0x8] sm:$0xff] %vm872, %v6102
        %s6106 = smul.u32 %s513, 16
        %s6107 = scalar_lea.vmem %s263, %s6106
        %v6108 = vld [vmem:[%s6107] sm:$0xff]
        %v6109 = vld [vmem:[%s6107 + $0x8] sm:$0xff]
        %v6112 = vrot.slane %v6108, 6
        %v6113 = vrot.slane %v6109, 6
        %v6114 = vsel %vm6039, %v6112, %v6113
        %v6118 = vadd.f32 %v6018, %v6112
        %v6119 = vadd.f32 %v6019, %v6114
        %v6120 = vadd.f32 %v6020, %v6113
        %s6121 = scalar_lea.vmem %s258, 80 [#allocation4]
        %6122 = vst.msk [vmem:[%s6121 - $0x2] sm:$0xfc] %vm6050, %v6118
        %6123 = vst.msk [vmem:[%s6121 + $0x6] sm:$0xff] %vm872, %v6119
        %6124 = vst.msk [vmem:[%s6121 + $0xe] sm:$0x3] %vm3827, %v6120
        %s6125 = smul.u32 %s534, 16
        %s6126 = scalar_lea.vmem %s263, %s6125
        %v6127 = vld [vmem:[%s6126] sm:$0xff]
        %v6128 = vld [vmem:[%s6126 + $0x8] sm:$0xff]
        %v6131 = vrot.slane %v6127, 4
        %v6132 = vrot.slane %v6128, 4
        %v6133 = vsel %vm6060, %v6131, %v6132
        %v6137 = vadd.f32 %v6020, %v6131
        %v6138 = vadd.f32 %v6021, %v6133
        %v6139 = vadd.f32 %v6022, %v6132
        %s6140 = scalar_lea.vmem %s258, 96 [#allocation4]
        %6141 = vst.msk [vmem:[%s6140 - $0x4] sm:$0xf0] %vm6071, %v6137
        %6142 = vst.msk [vmem:[%s6140 + $0x4] sm:$0xff] %vm872, %v6138
        %6143 = vst.msk [vmem:[%s6140 + $0xc] sm:$0xf] %vm267, %v6139
        %s6144 = smul.u32 %s566, 16
        %s6145 = scalar_lea.vmem %s263, %s6144
        %v6146 = vld [vmem:[%s6145] sm:$0xff]
        %v6147 = vld [vmem:[%s6145 + $0x8] sm:$0xff]
        %v6150 = vrot.slane %v6146, 2
        %v6151 = vrot.slane %v6147, 2
        %v6152 = vsel %vm6081, %v6150, %v6151
        %v6156 = vadd.f32 %v6022, %v6150
        %v6157 = vadd.f32 %v6023, %v6152
        %v6158 = vadd.f32 %v6024, %v6151
        %s6159 = scalar_lea.vmem %s258, 112 [#allocation4]
        %6160 = vst.msk [vmem:[%s6159 - $0x6] sm:$0xc0] %vm6092, %v6156
        %6161 = vst.msk [vmem:[%s6159 + $0x2] sm:$0xff] %vm872, %v6157
        %6162 = vst.msk [vmem:[%s6159 + $0xa] sm:$0x3f] %vm6095, %v6158
        %s6163 = sand.u32 %s173, 1
        %s6164 = scalar_lea.sflag [#allocation5], %s6163
        %s6165 = sand.u32 %s173, 1
        %s6166 = smul.addr %s6165, 128
        %s6167 = scalar_lea.vmem [#allocation4], %s6166
        // Predicated region
        $region93: #{resblock_forward.1} parent=43 // pred_check
          %p6168 = pneg %p183
        $region94: #{resblock_forward.1} parent=43 // pred_check_branch
          %6170 = sbr.rel (%p6168) target = $region96
        $region95: #{resblock_forward.1} parent=43 // pred_region
          %s6171 = smul.u32 8, %s25
          %s6173 = ssub.s32 2048, 2048
          %6174 = vsyncadd %s6164, %s6173
          %s6175 = smul.addr %s6171, 2
          %s6176 = smul.addr %s24, 32
          %s6177 = sadd.s32 %s6175, %s6176
          %s6178 = smul.addr %s6177, 128
          %s6179 = scalar_lea.hbm %s6, %s6178
          %s6180 = sshll.u32 %s6167, 4
          %s6181 = int_to_ptr.vmem [resolvable:$true] %s6180
          %6186 = dma.vmem_to_hbm [thread:$0]  %s6181, 2048, %s6179, %s6164, 128, 128, 8
        $region96: #{resblock_forward.1} parent=43 // pred_fallthru
          _
      $region44: #{resblock_forward.1} parent=5 // pred_fallthru
        _
      %p6187 = scmp.le.s32.totalorder 2, %s15
      // Predicated region
      $region97: #{resblock_forward.1} parent=5 // pred_check
        %p6188 = pneg %p6187
      $region98: #{resblock_forward.1} parent=5 // pred_check_branch
        %6190 = sbr.rel (%p6188) target = $region100
      $region99: #{resblock_forward.1} parent=5 // pred_region
        %s6191 = ssub.s32 %s15, 2
        // Predicated region
        $region101: #{resblock_forward.1} parent=99 // pred_check
          %p6192 = pneg %p189
        $region102: #{resblock_forward.1} parent=99 // pred_check_branch
          %6194 = sbr.rel (%p6192) target = $region104
        $region103: #{resblock_forward.1} parent=99 // pred_region
          %s6195 = sand.u32 %s174, 1
          %s6196 = scalar_lea.sflag [#allocation5], %s6195
          %s6197 = sand.u32 %s174, 1
          %s6198 = smul.addr %s6197, 128
          %s6199 = scalar_lea.vmem [#allocation4], %s6198
          %6200 = dma.done %s6196, 2048
        $region104: #{resblock_forward.1} parent=99 // pred_fallthru
          _
      $region100: #{resblock_forward.1} parent=5 // pred_fallthru
        _
    $region6: #{resblock_forward.1} parent=1 // loop_footer
      %s19 = sadd.s32 1, %s15
    $region7: #{resblock_forward.1} parent=1 // loop_footer_branch
      %14 = sbr.rel target = $region3
    $region8: #{resblock_forward.1} parent=1 // loop_exit
      _
    %6201 = vsyncpa [#allocation5], 1
    %s6202 = scalar_lea.sflag [#allocation5], 1
    %6203 = vsyncpa %s6202, 1

</llo_original>
